<compile_context>
chip_gen: v6e
topology: v6e:2x2x1
jax: 0.10.0
libtpu: 0.0.40
codegen_flags: <defaults>
</compile_context>

<pallas_src>
import functools

import jax
import jax.numpy as jnp
from jax.experimental import pallas as pl
from jax.experimental.pallas import tpu as pltpu


# ---------------------------------------------------------------------------
# Fused kernel: input projection + LSTM recurrence + output Linear.
#   x_ref    : (S*B, E)      embedded inputs, time-major rows (t*B + b)
#   wih_ref  : (E, 4*Hp)     fused/padded input->gate weights
#   b_ref    : (1, 4*Hp)     fused/padded gate bias (b_ih + b_hh)
#   whh_ref  : (Hp, 4*Hp)    fused/padded recurrent weights
#   wans_ref : (Hp, Pp)      padded output Linear weights
#   bans_ref : (1, Pp)       padded output Linear bias
#   o_ref    : (S*B, Pp)     final logits (lane-dense, unmasked store)
#   hs_scr   : (S*B, Hp)     VMEM scratch holding every timestep's hidden state
# ---------------------------------------------------------------------------
def lstm_fused_kernel(x_ref, wih_ref, b_ref, whh_ref, wans_ref, bans_ref,
                      o_ref, hs_scr, *, seq_len, batch):
    Hp = whh_ref.shape[0]

    # 1) Input projection for the whole sequence: one big MXU matmul,
    #    hoisted out of the serial loop.
    x_proj = (
        jnp.dot(x_ref[...], wih_ref[...], preferred_element_type=jnp.float32)
        + b_ref[...]
    )                                                   # (S*B, 4*Hp)

    w_hh = whh_ref[...]                                 # loop-invariant load
    h = jnp.zeros((batch, Hp), jnp.float32)
    c = jnp.zeros((batch, Hp), jnp.float32)

    # 2) Serial recurrence.  S is small & static -> unroll at trace time so
    #    every slice/store index is static.
    for t in range(seq_len):
        r0 = t * batch                                  # Python int (static)
        gates = x_proj[r0:r0 + batch, :] + jnp.dot(
            h, w_hh, preferred_element_type=jnp.float32)  # (B, 4*Hp)

        # PyTorch gate order: i, f, g, o (each Hp wide, 128-lane aligned).
        i_g = jax.nn.sigmoid(gates[:, 0 * Hp:1 * Hp])
        f_g = jax.nn.sigmoid(gates[:, 1 * Hp:2 * Hp])
        g_g = jnp.tanh(gates[:, 2 * Hp:3 * Hp])
        o_g = jax.nn.sigmoid(gates[:, 3 * Hp:4 * Hp])

        c = f_g * c + i_g * g_g
        h = o_g * jnp.tanh(c)
        hs_scr[r0:r0 + batch, :] = h

    # 3) Epilogue Linear over every timestep at once: one lane-efficient
    #    matmul + one unmasked (S*B, 128) store.
    o_ref[...] = (
        jnp.dot(hs_scr[...], wans_ref[...], preferred_element_type=jnp.float32)
        + bans_ref[...]
    )


# ---------------------------------------------------------------------------
# Forward pass (matches PyTorch module semantics)
# ---------------------------------------------------------------------------
def lstm_forward(context, emb_table, w_ih, w_hh, b_gates, w_ans, b_ans):
    """context: (S, B) int32.  Returns (S, B, P) float32.

    w_ih: (4, E, H), w_hh: (4, H, H), b_gates: (4, 1, H) = b_ih + b_hh,
    w_ans: (H, P), b_ans: (1, P).  Gate order i, f, g, o.
    """
    S, B = context.shape
    E = emb_table.shape[1]
    H = w_hh.shape[-1]
    P = w_ans.shape[-1]
    Hp = ((H + 127) // 128) * 128          # hidden padded to lane multiple
    Pp = ((P + 127) // 128) * 128          # output padded to lane multiple

    f32 = jnp.float32

    def fuse_pad_cols(w):
        # (4, K, H) -> (K, 4*Hp), gate-major along last axis, zero-padded.
        K = w.shape[1]
        wp = jnp.zeros((4, K, Hp), f32).at[:, :, :H].set(w.astype(f32))
        return jnp.transpose(wp, (1, 0, 2)).reshape(K, 4 * Hp)

    w_ih_f = fuse_pad_cols(w_ih)                                   # (E, 4Hp)
    b_f = fuse_pad_cols(b_gates)                                   # (1, 4Hp)
    whh_p = jnp.zeros((4, Hp, Hp), f32).at[:, :H, :H].set(w_hh.astype(f32))
    w_hh_f = jnp.transpose(whh_p, (1, 0, 2)).reshape(Hp, 4 * Hp)   # (Hp, 4Hp)
    w_ans_p = jnp.zeros((Hp, Pp), f32).at[:H, :P].set(w_ans.astype(f32))
    b_ans_p = jnp.zeros((1, Pp), f32).at[:, :P].set(b_ans.astype(f32))

    # Embedding lookup (plain JAX gather — glue).
    x = jnp.take(emb_table, context, axis=0).astype(f32)           # (S, B, E)
    x2d = x.reshape(S * B, E)

    out2d = pl.pallas_call(
        functools.partial(lstm_fused_kernel, seq_len=S, batch=B),
        out_shape=jax.ShapeDtypeStruct((S * B, Pp), jnp.float32),
        grid=(1,),
        in_specs=[
            pl.BlockSpec((S * B, E), lambda i: (0, 0)),
            pl.BlockSpec((E, 4 * Hp), lambda i: (0, 0)),
            pl.BlockSpec((1, 4 * Hp), lambda i: (0, 0)),
            pl.BlockSpec((Hp, 4 * Hp), lambda i: (0, 0)),
            pl.BlockSpec((Hp, Pp), lambda i: (0, 0)),
            pl.BlockSpec((1, Pp), lambda i: (0, 0)),
        ],
        out_specs=pl.BlockSpec((S * B, Pp), lambda i: (0, 0)),
        scratch_shapes=[pltpu.VMEM((S * B, Hp), jnp.float32)],
        compiler_params=pltpu.CompilerParams(
            dimension_semantics=("arbitrary",),
        ),
    )(x2d, w_ih_f, b_f, w_hh_f, w_ans_p, b_ans_p)

    # Strip lane padding of the tiny pos dimension outside the kernel.
    return out2d[:, :P].reshape(S, B, P)


# ---------------------------------------------------------------------------
# Pure-JAX reference matching PyTorch LSTM semantics
# ---------------------------------------------------------------------------
def lstm_reference(context, emb_table, w_ih, w_hh, b_gates, w_ans, b_ans):
    x = jnp.take(emb_table, context, axis=0).astype(jnp.float32)   # (S, B, E)
    B = x.shape[1]
    H = w_hh.shape[-1]

    def step(carry, x_t):
        h, c = carry
        gates = [x_t @ w_ih[k] + h @ w_hh[k] + b_gates[k] for k in range(4)]
        i = jax.nn.sigmoid(gates[0])
        f = jax.nn.sigmoid(gates[1])
        g = jnp.tanh(gates[2])
        o = jax.nn.sigmoid(gates[3])
        c_new = f * c + i * g
        h_new = o * jnp.tanh(c_new)
        return (h_new, c_new), h_new

    h0 = jnp.zeros((B, H), jnp.float32)
    c0 = jnp.zeros((B, H), jnp.float32)
    _, hs = jax.lax.scan(step, (h0, c0), x)
    return hs @ w_ans + b_ans


if __name__ == "__main__":
    # Module-implied sizes (hidden_size=200, emb_dim=300 hardcoded in __init__),
    # small synthetic vocab / pos / seq / batch.
    VOCAB = 50
    POS = 12
    EMB = 300
    HID = 200
    SEQ = 8
    BATCH = 2

    key = jax.random.PRNGKey(0)
    k_emb, k_wih, k_whh, k_bih, k_bhh, k_wa, k_ba, k_ctx = jax.random.split(key, 8)

    bound = 1.0 / (HID ** 0.5)
    emb_table = jax.random.normal(k_emb, (VOCAB, EMB), jnp.float32)
    # Per-gate weights laid out for right-multiplication: (4, E, H) / (4, H, H).
    w_ih = jax.random.uniform(k_wih, (4, EMB, HID), jnp.float32, -bound, bound)
    w_hh = jax.random.uniform(k_whh, (4, HID, HID), jnp.float32, -bound, bound)
    b_ih = jax.random.uniform(k_bih, (4, 1, HID), jnp.float32, -bound, bound)
    b_hh = jax.random.uniform(k_bhh, (4, 1, HID), jnp.float32, -bound, bound)
    b_gates = b_ih + b_hh
    w_ans = jax.random.uniform(k_wa, (HID, POS), jnp.float32, -bound, bound)
    b_ans = jax.random.uniform(k_ba, (1, POS), jnp.float32, -bound, bound)

    # Input token indices, time-major: (seq, batch)
    context = jax.random.randint(k_ctx, (SEQ, BATCH), 0, VOCAB, dtype=jnp.int32)

    out = lstm_forward(context, emb_table, w_ih, w_hh, b_gates, w_ans, b_ans)
    out = jax.block_until_ready(out)

    ref = lstm_reference(context, emb_table, w_ih, w_hh, b_gates, w_ans, b_ans)
    ref = jax.block_until_ready(ref)

    assert out.shape == (SEQ, BATCH, POS), out.shape
    err = float(jnp.max(jnp.abs(out - ref)))
    assert jnp.allclose(out, ref, atol=1e-4, rtol=1e-4), err

    # TODO(synk): on v6e/v7x the fused weights could be cast to bf16 (f32
    # accumulation) to halve weight VMEM/DMA bytes; kept f32 so the script
    # stays bit-tight against the f32 reference on v5e as well.

    print("KERNEL_OK")
</pallas_src>

<mosaic_0001>
module attributes {stable_mosaic.version = 11 : i64} {
  func.func @lstm_fused_kernel(%arg0: i32, %arg1: memref<16x300xf32, #tpu.memory_space<vmem>>, %arg2: memref<300x1024xf32, #tpu.memory_space<vmem>>, %arg3: memref<1x1024xf32, #tpu.memory_space<vmem>>, %arg4: memref<256x1024xf32, #tpu.memory_space<vmem>>, %arg5: memref<256x128xf32, #tpu.memory_space<vmem>>, %arg6: memref<1x128xf32, #tpu.memory_space<vmem>>, %arg7: memref<16x128xf32, #tpu.memory_space<vmem>>, %arg8: memref<16x256xf32, #tpu.memory_space<vmem>>) attributes {dimension_semantics = [#tpu.dimension_semantics<arbitrary>], iteration_bounds = array<i64: 1>, scalar_prefetch = 0 : i64, scratch_operands = 1 : i64, tpu.core_type = #tpu.core_type<tc>, window_params = [{pipeline_mode = #tpu.pipeline_mode<synchronous>, transform_indices = @transform_0, window_bounds = array<i64: 16, 300>}, {pipeline_mode = #tpu.pipeline_mode<synchronous>, transform_indices = @transform_1, window_bounds = array<i64: 300, 1024>}, {pipeline_mode = #tpu.pipeline_mode<synchronous>, transform_indices = @transform_2, window_bounds = array<i64: 1, 1024>}, {pipeline_mode = #tpu.pipeline_mode<synchronous>, transform_indices = @transform_3, window_bounds = array<i64: 256, 1024>}, {pipeline_mode = #tpu.pipeline_mode<synchronous>, transform_indices = @transform_4, window_bounds = array<i64: 256, 128>}, {pipeline_mode = #tpu.pipeline_mode<synchronous>, transform_indices = @transform_5, window_bounds = array<i64: 1, 128>}, {pipeline_mode = #tpu.pipeline_mode<synchronous>, transform_indices = @transform_6, window_bounds = array<i64: 16, 128>}]} {
    %c0 = arith.constant 0 : index
    %c0_0 = arith.constant 0 : index
    %0 = vector.load %arg1[%c0, %c0_0] : memref<16x300xf32, #tpu.memory_space<vmem>>, vector<16x300xf32>
    %c0_1 = arith.constant 0 : index
    %c0_2 = arith.constant 0 : index
    %1 = vector.load %arg2[%c0_1, %c0_2] : memref<300x1024xf32, #tpu.memory_space<vmem>>, vector<300x1024xf32>
    %cst = arith.constant dense<0.000000e+00> : vector<16x1024xf32>
    %2 = tpu.matmul %0, %1, %cst {dimension_numbers = #tpu.dot_dimension_numbers<[1], [0], [0], [1], [0, 0, 1, 1], [], []>} : vector<16x300xf32>, vector<300x1024xf32>, vector<16x1024xf32> -> vector<16x1024xf32>
    %c0_3 = arith.constant 0 : index
    %c0_4 = arith.constant 0 : index
    %3 = vector.load %arg3[%c0_3, %c0_4] : memref<1x1024xf32, #tpu.memory_space<vmem>>, vector<1x1024xf32>
    %4 = vector.broadcast %3 : vector<1x1024xf32> to vector<16x1024xf32>
    %5 = arith.addf %2, %4 : vector<16x1024xf32>
    %c0_5 = arith.constant 0 : index
    %c0_6 = arith.constant 0 : index
    %6 = vector.load %arg4[%c0_5, %c0_6] : memref<256x1024xf32, #tpu.memory_space<vmem>>, vector<256x1024xf32>
    %cst_7 = arith.constant 0.000000e+00 : f32
    %7 = vector.broadcast %cst_7 : f32 to vector<2x256xf32>
    %cst_8 = arith.constant 0.000000e+00 : f32
    %8 = vector.broadcast %cst_8 : f32 to vector<2x256xf32>
    %9 = vector.extract_strided_slice %5 {offsets = [0, 0], sizes = [2, 1024], strides = [1, 1]} : vector<16x1024xf32> to vector<2x1024xf32>
    %cst_9 = arith.constant dense<0.000000e+00> : vector<2x1024xf32>
    %10 = tpu.matmul %7, %6, %cst_9 {dimension_numbers = #tpu.dot_dimension_numbers<[1], [0], [0], [1], [0, 0, 1, 1], [], []>} : vector<2x256xf32>, vector<256x1024xf32>, vector<2x1024xf32> -> vector<2x1024xf32>
    %11 = arith.addf %9, %10 : vector<2x1024xf32>
    %12 = vector.extract_strided_slice %11 {offsets = [0, 0], sizes = [2, 256], strides = [1, 1]} : vector<2x1024xf32> to vector<2x256xf32>
    %13 = arith.negf %12 : vector<2x256xf32>
    %14 = math.exp %13 : vector<2x256xf32>
    %cst_10 = arith.constant 1.000000e+00 : f32
    %15 = vector.broadcast %cst_10 : f32 to vector<2x256xf32>
    %16 = arith.addf %15, %14 : vector<2x256xf32>
    %17 = arith.divf %15, %16 : vector<2x256xf32>
    %18 = vector.extract_strided_slice %11 {offsets = [0, 256], sizes = [2, 256], strides = [1, 1]} : vector<2x1024xf32> to vector<2x256xf32>
    %19 = arith.negf %18 : vector<2x256xf32>
    %20 = math.exp %19 : vector<2x256xf32>
    %cst_11 = arith.constant 1.000000e+00 : f32
    %21 = vector.broadcast %cst_11 : f32 to vector<2x256xf32>
    %22 = arith.addf %21, %20 : vector<2x256xf32>
    %23 = arith.divf %21, %22 : vector<2x256xf32>
    %24 = vector.extract_strided_slice %11 {offsets = [0, 512], sizes = [2, 256], strides = [1, 1]} : vector<2x1024xf32> to vector<2x256xf32>
    %25 = math.tanh %24 : vector<2x256xf32>
    %26 = vector.extract_strided_slice %11 {offsets = [0, 768], sizes = [2, 256], strides = [1, 1]} : vector<2x1024xf32> to vector<2x256xf32>
    %27 = arith.negf %26 : vector<2x256xf32>
    %28 = math.exp %27 : vector<2x256xf32>
    %cst_12 = arith.constant 1.000000e+00 : f32
    %29 = vector.broadcast %cst_12 : f32 to vector<2x256xf32>
    %30 = arith.addf %29, %28 : vector<2x256xf32>
    %31 = arith.divf %29, %30 : vector<2x256xf32>
    %32 = arith.mulf %23, %8 : vector<2x256xf32>
    %33 = arith.mulf %17, %25 : vector<2x256xf32>
    %34 = arith.addf %32, %33 : vector<2x256xf32>
    %35 = math.tanh %34 : vector<2x256xf32>
    %36 = arith.mulf %31, %35 : vector<2x256xf32>
    %c0_13 = arith.constant 0 : index
    %c0_14 = arith.constant 0 : index
    %37 = vector.load %arg8[%c0_13, %c0_14] : memref<16x256xf32, #tpu.memory_space<vmem>>, vector<2x256xf32>
    tpu.vector_store %arg8[%c0_13, %c0_14], %36 {strides = array<i32>} : memref<16x256xf32, #tpu.memory_space<vmem>>, vector<2x256xf32>,
    %38 = vector.extract_strided_slice %5 {offsets = [2, 0], sizes = [2, 1024], strides = [1, 1]} : vector<16x1024xf32> to vector<2x1024xf32>
    %cst_15 = arith.constant dense<0.000000e+00> : vector<2x1024xf32>
    %39 = tpu.matmul %36, %6, %cst_15 {dimension_numbers = #tpu.dot_dimension_numbers<[1], [0], [0], [1], [0, 0, 1, 1], [], []>} : vector<2x256xf32>, vector<256x1024xf32>, vector<2x1024xf32> -> vector<2x1024xf32>
    %40 = arith.addf %38, %39 : vector<2x1024xf32>
    %41 = vector.extract_strided_slice %40 {offsets = [0, 0], sizes = [2, 256], strides = [1, 1]} : vector<2x1024xf32> to vector<2x256xf32>
    %42 = arith.negf %41 : vector<2x256xf32>
    %43 = math.exp %42 : vector<2x256xf32>
    %cst_16 = arith.constant 1.000000e+00 : f32
    %44 = vector.broadcast %cst_16 : f32 to vector<2x256xf32>
    %45 = arith.addf %44, %43 : vector<2x256xf32>
    %46 = arith.divf %44, %45 : vector<2x256xf32>
    %47 = vector.extract_strided_slice %40 {offsets = [0, 256], sizes = [2, 256], strides = [1, 1]} : vector<2x1024xf32> to vector<2x256xf32>
    %48 = arith.negf %47 : vector<2x256xf32>
    %49 = math.exp %48 : vector<2x256xf32>
    %cst_17 = arith.constant 1.000000e+00 : f32
    %50 = vector.broadcast %cst_17 : f32 to vector<2x256xf32>
    %51 = arith.addf %50, %49 : vector<2x256xf32>
    %52 = arith.divf %50, %51 : vector<2x256xf32>
    %53 = vector.extract_strided_slice %40 {offsets = [0, 512], sizes = [2, 256], strides = [1, 1]} : vector<2x1024xf32> to vector<2x256xf32>
    %54 = math.tanh %53 : vector<2x256xf32>
    %55 = vector.extract_strided_slice %40 {offsets = [0, 768], sizes = [2, 256], strides = [1, 1]} : vector<2x1024xf32> to vector<2x256xf32>
    %56 = arith.negf %55 : vector<2x256xf32>
    %57 = math.exp %56 : vector<2x256xf32>
    %cst_18 = arith.constant 1.000000e+00 : f32
    %58 = vector.broadcast %cst_18 : f32 to vector<2x256xf32>
    %59 = arith.addf %58, %57 : vector<2x256xf32>
    %60 = arith.divf %58, %59 : vector<2x256xf32>
    %61 = arith.mulf %52, %34 : vector<2x256xf32>
    %62 = arith.mulf %46, %54 : vector<2x256xf32>
    %63 = arith.addf %61, %62 : vector<2x256xf32>
    %64 = math.tanh %63 : vector<2x256xf32>
    %65 = arith.mulf %60, %64 : vector<2x256xf32>
    %c2 = arith.constant 2 : index
    %c0_19 = arith.constant 0 : index
    %66 = vector.load %arg8[%c2, %c0_19] : memref<16x256xf32, #tpu.memory_space<vmem>>, vector<2x256xf32>
    tpu.vector_store %arg8[%c2, %c0_19], %65 {strides = array<i32>} : memref<16x256xf32, #tpu.memory_space<vmem>>, vector<2x256xf32>,
    %67 = vector.extract_strided_slice %5 {offsets = [4, 0], sizes = [2, 1024], strides = [1, 1]} : vector<16x1024xf32> to vector<2x1024xf32>
    %cst_20 = arith.constant dense<0.000000e+00> : vector<2x1024xf32>
    %68 = tpu.matmul %65, %6, %cst_20 {dimension_numbers = #tpu.dot_dimension_numbers<[1], [0], [0], [1], [0, 0, 1, 1], [], []>} : vector<2x256xf32>, vector<256x1024xf32>, vector<2x1024xf32> -> vector<2x1024xf32>
    %69 = arith.addf %67, %68 : vector<2x1024xf32>
    %70 = vector.extract_strided_slice %69 {offsets = [0, 0], sizes = [2, 256], strides = [1, 1]} : vector<2x1024xf32> to vector<2x256xf32>
    %71 = arith.negf %70 : vector<2x256xf32>
    %72 = math.exp %71 : vector<2x256xf32>
    %cst_21 = arith.constant 1.000000e+00 : f32
    %73 = vector.broadcast %cst_21 : f32 to vector<2x256xf32>
    %74 = arith.addf %73, %72 : vector<2x256xf32>
    %75 = arith.divf %73, %74 : vector<2x256xf32>
    %76 = vector.extract_strided_slice %69 {offsets = [0, 256], sizes = [2, 256], strides = [1, 1]} : vector<2x1024xf32> to vector<2x256xf32>
    %77 = arith.negf %76 : vector<2x256xf32>
    %78 = math.exp %77 : vector<2x256xf32>
    %cst_22 = arith.constant 1.000000e+00 : f32
    %79 = vector.broadcast %cst_22 : f32 to vector<2x256xf32>
    %80 = arith.addf %79, %78 : vector<2x256xf32>
    %81 = arith.divf %79, %80 : vector<2x256xf32>
    %82 = vector.extract_strided_slice %69 {offsets = [0, 512], sizes = [2, 256], strides = [1, 1]} : vector<2x1024xf32> to vector<2x256xf32>
    %83 = math.tanh %82 : vector<2x256xf32>
    %84 = vector.extract_strided_slice %69 {offsets = [0, 768], sizes = [2, 256], strides = [1, 1]} : vector<2x1024xf32> to vector<2x256xf32>
    %85 = arith.negf %84 : vector<2x256xf32>
    %86 = math.exp %85 : vector<2x256xf32>
    %cst_23 = arith.constant 1.000000e+00 : f32
    %87 = vector.broadcast %cst_23 : f32 to vector<2x256xf32>
    %88 = arith.addf %87, %86 : vector<2x256xf32>
    %89 = arith.divf %87, %88 : vector<2x256xf32>
    %90 = arith.mulf %81, %63 : vector<2x256xf32>
    %91 = arith.mulf %75, %83 : vector<2x256xf32>
    %92 = arith.addf %90, %91 : vector<2x256xf32>
    %93 = math.tanh %92 : vector<2x256xf32>
    %94 = arith.mulf %89, %93 : vector<2x256xf32>
    %c4 = arith.constant 4 : index
    %c0_24 = arith.constant 0 : index
    %95 = vector.load %arg8[%c4, %c0_24] : memref<16x256xf32, #tpu.memory_space<vmem>>, vector<2x256xf32>
    tpu.vector_store %arg8[%c4, %c0_24], %94 {strides = array<i32>} : memref<16x256xf32, #tpu.memory_space<vmem>>, vector<2x256xf32>,
    %96 = vector.extract_strided_slice %5 {offsets = [6, 0], sizes = [2, 1024], strides = [1, 1]} : vector<16x1024xf32> to vector<2x1024xf32>
    %cst_25 = arith.constant dense<0.000000e+00> : vector<2x1024xf32>
    %97 = tpu.matmul %94, %6, %cst_25 {dimension_numbers = #tpu.dot_dimension_numbers<[1], [0], [0], [1], [0, 0, 1, 1], [], []>} : vector<2x256xf32>, vector<256x1024xf32>, vector<2x1024xf32> -> vector<2x1024xf32>
    %98 = arith.addf %96, %97 : vector<2x1024xf32>
    %99 = vector.extract_strided_slice %98 {offsets = [0, 0], sizes = [2, 256], strides = [1, 1]} : vector<2x1024xf32> to vector<2x256xf32>
    %100 = arith.negf %99 : vector<2x256xf32>
    %101 = math.exp %100 : vector<2x256xf32>
    %cst_26 = arith.constant 1.000000e+00 : f32
    %102 = vector.broadcast %cst_26 : f32 to vector<2x256xf32>
    %103 = arith.addf %102, %101 : vector<2x256xf32>
    %104 = arith.divf %102, %103 : vector<2x256xf32>
    %105 = vector.extract_strided_slice %98 {offsets = [0, 256], sizes = [2, 256], strides = [1, 1]} : vector<2x1024xf32> to vector<2x256xf32>
    %106 = arith.negf %105 : vector<2x256xf32>
    %107 = math.exp %106 : vector<2x256xf32>
    %cst_27 = arith.constant 1.000000e+00 : f32
    %108 = vector.broadcast %cst_27 : f32 to vector<2x256xf32>
    %109 = arith.addf %108, %107 : vector<2x256xf32>
    %110 = arith.divf %108, %109 : vector<2x256xf32>
    %111 = vector.extract_strided_slice %98 {offsets = [0, 512], sizes = [2, 256], strides = [1, 1]} : vector<2x1024xf32> to vector<2x256xf32>
    %112 = math.tanh %111 : vector<2x256xf32>
    %113 = vector.extract_strided_slice %98 {offsets = [0, 768], sizes = [2, 256], strides = [1, 1]} : vector<2x1024xf32> to vector<2x256xf32>
    %114 = arith.negf %113 : vector<2x256xf32>
    %115 = math.exp %114 : vector<2x256xf32>
    %cst_28 = arith.constant 1.000000e+00 : f32
    %116 = vector.broadcast %cst_28 : f32 to vector<2x256xf32>
    %117 = arith.addf %116, %115 : vector<2x256xf32>
    %118 = arith.divf %116, %117 : vector<2x256xf32>
    %119 = arith.mulf %110, %92 : vector<2x256xf32>
    %120 = arith.mulf %104, %112 : vector<2x256xf32>
    %121 = arith.addf %119, %120 : vector<2x256xf32>
    %122 = math.tanh %121 : vector<2x256xf32>
    %123 = arith.mulf %118, %122 : vector<2x256xf32>
    %c6 = arith.constant 6 : index
    %c0_29 = arith.constant 0 : index
    %124 = vector.load %arg8[%c6, %c0_29] : memref<16x256xf32, #tpu.memory_space<vmem>>, vector<2x256xf32>
    tpu.vector_store %arg8[%c6, %c0_29], %123 {strides = array<i32>} : memref<16x256xf32, #tpu.memory_space<vmem>>, vector<2x256xf32>,
    %125 = vector.extract_strided_slice %5 {offsets = [8, 0], sizes = [2, 1024], strides = [1, 1]} : vector<16x1024xf32> to vector<2x1024xf32>
    %cst_30 = arith.constant dense<0.000000e+00> : vector<2x1024xf32>
    %126 = tpu.matmul %123, %6, %cst_30 {dimension_numbers = #tpu.dot_dimension_numbers<[1], [0], [0], [1], [0, 0, 1, 1], [], []>} : vector<2x256xf32>, vector<256x1024xf32>, vector<2x1024xf32> -> vector<2x1024xf32>
    %127 = arith.addf %125, %126 : vector<2x1024xf32>
    %128 = vector.extract_strided_slice %127 {offsets = [0, 0], sizes = [2, 256], strides = [1, 1]} : vector<2x1024xf32> to vector<2x256xf32>
    %129 = arith.negf %128 : vector<2x256xf32>
    %130 = math.exp %129 : vector<2x256xf32>
    %cst_31 = arith.constant 1.000000e+00 : f32
    %131 = vector.broadcast %cst_31 : f32 to vector<2x256xf32>
    %132 = arith.addf %131, %130 : vector<2x256xf32>
    %133 = arith.divf %131, %132 : vector<2x256xf32>
    %134 = vector.extract_strided_slice %127 {offsets = [0, 256], sizes = [2, 256], strides = [1, 1]} : vector<2x1024xf32> to vector<2x256xf32>
    %135 = arith.negf %134 : vector<2x256xf32>
    %136 = math.exp %135 : vector<2x256xf32>
    %cst_32 = arith.constant 1.000000e+00 : f32
    %137 = vector.broadcast %cst_32 : f32 to vector<2x256xf32>
    %138 = arith.addf %137, %136 : vector<2x256xf32>
    %139 = arith.divf %137, %138 : vector<2x256xf32>
    %140 = vector.extract_strided_slice %127 {offsets = [0, 512], sizes = [2, 256], strides = [1, 1]} : vector<2x1024xf32> to vector<2x256xf32>
    %141 = math.tanh %140 : vector<2x256xf32>
    %142 = vector.extract_strided_slice %127 {offsets = [0, 768], sizes = [2, 256], strides = [1, 1]} : vector<2x1024xf32> to vector<2x256xf32>
    %143 = arith.negf %142 : vector<2x256xf32>
    %144 = math.exp %143 : vector<2x256xf32>
    %cst_33 = arith.constant 1.000000e+00 : f32
    %145 = vector.broadcast %cst_33 : f32 to vector<2x256xf32>
    %146 = arith.addf %145, %144 : vector<2x256xf32>
    %147 = arith.divf %145, %146 : vector<2x256xf32>
    %148 = arith.mulf %139, %121 : vector<2x256xf32>
    %149 = arith.mulf %133, %141 : vector<2x256xf32>
    %150 = arith.addf %148, %149 : vector<2x256xf32>
    %151 = math.tanh %150 : vector<2x256xf32>
    %152 = arith.mulf %147, %151 : vector<2x256xf32>
    %c8 = arith.constant 8 : index
    %c0_34 = arith.constant 0 : index
    %153 = vector.load %arg8[%c8, %c0_34] : memref<16x256xf32, #tpu.memory_space<vmem>>, vector<2x256xf32>
    tpu.vector_store %arg8[%c8, %c0_34], %152 {strides = array<i32>} : memref<16x256xf32, #tpu.memory_space<vmem>>, vector<2x256xf32>,
    %154 = vector.extract_strided_slice %5 {offsets = [10, 0], sizes = [2, 1024], strides = [1, 1]} : vector<16x1024xf32> to vector<2x1024xf32>
    %cst_35 = arith.constant dense<0.000000e+00> : vector<2x1024xf32>
    %155 = tpu.matmul %152, %6, %cst_35 {dimension_numbers = #tpu.dot_dimension_numbers<[1], [0], [0], [1], [0, 0, 1, 1], [], []>} : vector<2x256xf32>, vector<256x1024xf32>, vector<2x1024xf32> -> vector<2x1024xf32>
    %156 = arith.addf %154, %155 : vector<2x1024xf32>
    %157 = vector.extract_strided_slice %156 {offsets = [0, 0], sizes = [2, 256], strides = [1, 1]} : vector<2x1024xf32> to vector<2x256xf32>
    %158 = arith.negf %157 : vector<2x256xf32>
    %159 = math.exp %158 : vector<2x256xf32>
    %cst_36 = arith.constant 1.000000e+00 : f32
    %160 = vector.broadcast %cst_36 : f32 to vector<2x256xf32>
    %161 = arith.addf %160, %159 : vector<2x256xf32>
    %162 = arith.divf %160, %161 : vector<2x256xf32>
    %163 = vector.extract_strided_slice %156 {offsets = [0, 256], sizes = [2, 256], strides = [1, 1]} : vector<2x1024xf32> to vector<2x256xf32>
    %164 = arith.negf %163 : vector<2x256xf32>
    %165 = math.exp %164 : vector<2x256xf32>
    %cst_37 = arith.constant 1.000000e+00 : f32
    %166 = vector.broadcast %cst_37 : f32 to vector<2x256xf32>
    %167 = arith.addf %166, %165 : vector<2x256xf32>
    %168 = arith.divf %166, %167 : vector<2x256xf32>
    %169 = vector.extract_strided_slice %156 {offsets = [0, 512], sizes = [2, 256], strides = [1, 1]} : vector<2x1024xf32> to vector<2x256xf32>
    %170 = math.tanh %169 : vector<2x256xf32>
    %171 = vector.extract_strided_slice %156 {offsets = [0, 768], sizes = [2, 256], strides = [1, 1]} : vector<2x1024xf32> to vector<2x256xf32>
    %172 = arith.negf %171 : vector<2x256xf32>
    %173 = math.exp %172 : vector<2x256xf32>
    %cst_38 = arith.constant 1.000000e+00 : f32
    %174 = vector.broadcast %cst_38 : f32 to vector<2x256xf32>
    %175 = arith.addf %174, %173 : vector<2x256xf32>
    %176 = arith.divf %174, %175 : vector<2x256xf32>
    %177 = arith.mulf %168, %150 : vector<2x256xf32>
    %178 = arith.mulf %162, %170 : vector<2x256xf32>
    %179 = arith.addf %177, %178 : vector<2x256xf32>
    %180 = math.tanh %179 : vector<2x256xf32>
    %181 = arith.mulf %176, %180 : vector<2x256xf32>
    %c10 = arith.constant 10 : index
    %c0_39 = arith.constant 0 : index
    %182 = vector.load %arg8[%c10, %c0_39] : memref<16x256xf32, #tpu.memory_space<vmem>>, vector<2x256xf32>
    tpu.vector_store %arg8[%c10, %c0_39], %181 {strides = array<i32>} : memref<16x256xf32, #tpu.memory_space<vmem>>, vector<2x256xf32>,
    %183 = vector.extract_strided_slice %5 {offsets = [12, 0], sizes = [2, 1024], strides = [1, 1]} : vector<16x1024xf32> to vector<2x1024xf32>
    %cst_40 = arith.constant dense<0.000000e+00> : vector<2x1024xf32>
    %184 = tpu.matmul %181, %6, %cst_40 {dimension_numbers = #tpu.dot_dimension_numbers<[1], [0], [0], [1], [0, 0, 1, 1], [], []>} : vector<2x256xf32>, vector<256x1024xf32>, vector<2x1024xf32> -> vector<2x1024xf32>
    %185 = arith.addf %183, %184 : vector<2x1024xf32>
    %186 = vector.extract_strided_slice %185 {offsets = [0, 0], sizes = [2, 256], strides = [1, 1]} : vector<2x1024xf32> to vector<2x256xf32>
    %187 = arith.negf %186 : vector<2x256xf32>
    %188 = math.exp %187 : vector<2x256xf32>
    %cst_41 = arith.constant 1.000000e+00 : f32
    %189 = vector.broadcast %cst_41 : f32 to vector<2x256xf32>
    %190 = arith.addf %189, %188 : vector<2x256xf32>
    %191 = arith.divf %189, %190 : vector<2x256xf32>
    %192 = vector.extract_strided_slice %185 {offsets = [0, 256], sizes = [2, 256], strides = [1, 1]} : vector<2x1024xf32> to vector<2x256xf32>
    %193 = arith.negf %192 : vector<2x256xf32>
    %194 = math.exp %193 : vector<2x256xf32>
    %cst_42 = arith.constant 1.000000e+00 : f32
    %195 = vector.broadcast %cst_42 : f32 to vector<2x256xf32>
    %196 = arith.addf %195, %194 : vector<2x256xf32>
    %197 = arith.divf %195, %196 : vector<2x256xf32>
    %198 = vector.extract_strided_slice %185 {offsets = [0, 512], sizes = [2, 256], strides = [1, 1]} : vector<2x1024xf32> to vector<2x256xf32>
    %199 = math.tanh %198 : vector<2x256xf32>
    %200 = vector.extract_strided_slice %185 {offsets = [0, 768], sizes = [2, 256], strides = [1, 1]} : vector<2x1024xf32> to vector<2x256xf32>
    %201 = arith.negf %200 : vector<2x256xf32>
    %202 = math.exp %201 : vector<2x256xf32>
    %cst_43 = arith.constant 1.000000e+00 : f32
    %203 = vector.broadcast %cst_43 : f32 to vector<2x256xf32>
    %204 = arith.addf %203, %202 : vector<2x256xf32>
    %205 = arith.divf %203, %204 : vector<2x256xf32>
    %206 = arith.mulf %197, %179 : vector<2x256xf32>
    %207 = arith.mulf %191, %199 : vector<2x256xf32>
    %208 = arith.addf %206, %207 : vector<2x256xf32>
    %209 = math.tanh %208 : vector<2x256xf32>
    %210 = arith.mulf %205, %209 : vector<2x256xf32>
    %c12 = arith.constant 12 : index
    %c0_44 = arith.constant 0 : index
    %211 = vector.load %arg8[%c12, %c0_44] : memref<16x256xf32, #tpu.memory_space<vmem>>, vector<2x256xf32>
    tpu.vector_store %arg8[%c12, %c0_44], %210 {strides = array<i32>} : memref<16x256xf32, #tpu.memory_space<vmem>>, vector<2x256xf32>,
    %212 = vector.extract_strided_slice %5 {offsets = [14, 0], sizes = [2, 1024], strides = [1, 1]} : vector<16x1024xf32> to vector<2x1024xf32>
    %cst_45 = arith.constant dense<0.000000e+00> : vector<2x1024xf32>
    %213 = tpu.matmul %210, %6, %cst_45 {dimension_numbers = #tpu.dot_dimension_numbers<[1], [0], [0], [1], [0, 0, 1, 1], [], []>} : vector<2x256xf32>, vector<256x1024xf32>, vector<2x1024xf32> -> vector<2x1024xf32>
    %214 = arith.addf %212, %213 : vector<2x1024xf32>
    %215 = vector.extract_strided_slice %214 {offsets = [0, 0], sizes = [2, 256], strides = [1, 1]} : vector<2x1024xf32> to vector<2x256xf32>
    %216 = arith.negf %215 : vector<2x256xf32>
    %217 = math.exp %216 : vector<2x256xf32>
    %cst_46 = arith.constant 1.000000e+00 : f32
    %218 = vector.broadcast %cst_46 : f32 to vector<2x256xf32>
    %219 = arith.addf %218, %217 : vector<2x256xf32>
    %220 = arith.divf %218, %219 : vector<2x256xf32>
    %221 = vector.extract_strided_slice %214 {offsets = [0, 256], sizes = [2, 256], strides = [1, 1]} : vector<2x1024xf32> to vector<2x256xf32>
    %222 = arith.negf %221 : vector<2x256xf32>
    %223 = math.exp %222 : vector<2x256xf32>
    %cst_47 = arith.constant 1.000000e+00 : f32
    %224 = vector.broadcast %cst_47 : f32 to vector<2x256xf32>
    %225 = arith.addf %224, %223 : vector<2x256xf32>
    %226 = arith.divf %224, %225 : vector<2x256xf32>
    %227 = vector.extract_strided_slice %214 {offsets = [0, 512], sizes = [2, 256], strides = [1, 1]} : vector<2x1024xf32> to vector<2x256xf32>
    %228 = math.tanh %227 : vector<2x256xf32>
    %229 = vector.extract_strided_slice %214 {offsets = [0, 768], sizes = [2, 256], strides = [1, 1]} : vector<2x1024xf32> to vector<2x256xf32>
    %230 = arith.negf %229 : vector<2x256xf32>
    %231 = math.exp %230 : vector<2x256xf32>
    %cst_48 = arith.constant 1.000000e+00 : f32
    %232 = vector.broadcast %cst_48 : f32 to vector<2x256xf32>
    %233 = arith.addf %232, %231 : vector<2x256xf32>
    %234 = arith.divf %232, %233 : vector<2x256xf32>
    %235 = arith.mulf %226, %208 : vector<2x256xf32>
    %236 = arith.mulf %220, %228 : vector<2x256xf32>
    %237 = arith.addf %235, %236 : vector<2x256xf32>
    %238 = math.tanh %237 : vector<2x256xf32>
    %239 = arith.mulf %234, %238 : vector<2x256xf32>
    %c14 = arith.constant 14 : index
    %c0_49 = arith.constant 0 : index
    %240 = vector.load %arg8[%c14, %c0_49] : memref<16x256xf32, #tpu.memory_space<vmem>>, vector<2x256xf32>
    tpu.vector_store %arg8[%c14, %c0_49], %239 {strides = array<i32>} : memref<16x256xf32, #tpu.memory_space<vmem>>, vector<2x256xf32>,
    %c0_50 = arith.constant 0 : index
    %c0_51 = arith.constant 0 : index
    %241 = vector.load %arg8[%c0_50, %c0_51] : memref<16x256xf32, #tpu.memory_space<vmem>>, vector<16x256xf32>
    %c0_52 = arith.constant 0 : index
    %c0_53 = arith.constant 0 : index
    %242 = vector.load %arg5[%c0_52, %c0_53] : memref<256x128xf32, #tpu.memory_space<vmem>>, vector<256x128xf32>
    %cst_54 = arith.constant dense<0.000000e+00> : vector<16x128xf32>
    %243 = tpu.matmul %241, %242, %cst_54 {dimension_numbers = #tpu.dot_dimension_numbers<[1], [0], [0], [1], [0, 0, 1, 1], [], []>} : vector<16x256xf32>, vector<256x128xf32>, vector<16x128xf32> -> vector<16x128xf32>
    %c0_55 = arith.constant 0 : index
    %c0_56 = arith.constant 0 : index
    %244 = vector.load %arg6[%c0_55, %c0_56] : memref<1x128xf32, #tpu.memory_space<vmem>>, vector<1x128xf32>
    %245 = vector.broadcast %244 : vector<1x128xf32> to vector<16x128xf32>
    %246 = arith.addf %243, %245 : vector<16x128xf32>
    %c0_57 = arith.constant 0 : index
    %c0_58 = arith.constant 0 : index
    %247 = vector.load %arg7[%c0_57, %c0_58] : memref<16x128xf32, #tpu.memory_space<vmem>>, vector<16x128xf32>
    tpu.vector_store %arg7[%c0_57, %c0_58], %246 {strides = array<i32>} : memref<16x128xf32, #tpu.memory_space<vmem>>, vector<16x128xf32>,
    return
  }
  func.func @transform_0(%arg0: i32) -> (i32, i32) {
    %c0_i32 = arith.constant 0 : i32
    %c0_i32_0 = arith.constant 0 : i32
    %c0_i32_1 = arith.constant 0 : i32
    return %c0_i32, %c0_i32_0 : i32, i32
  }
  func.func @transform_1(%arg0: i32) -> (i32, i32) {
    %c0_i32 = arith.constant 0 : i32
    %c0_i32_0 = arith.constant 0 : i32
    %c0_i32_1 = arith.constant 0 : i32
    return %c0_i32, %c0_i32_0 : i32, i32
  }
  func.func @transform_2(%arg0: i32) -> (i32, i32) {
    %c0_i32 = arith.constant 0 : i32
    %c0_i32_0 = arith.constant 0 : i32
    %c0_i32_1 = arith.constant 0 : i32
    return %c0_i32, %c0_i32_0 : i32, i32
  }
  func.func @transform_3(%arg0: i32) -> (i32, i32) {
    %c0_i32 = arith.constant 0 : i32
    %c0_i32_0 = arith.constant 0 : i32
    %c0_i32_1 = arith.constant 0 : i32
    return %c0_i32, %c0_i32_0 : i32, i32
  }
  func.func @transform_4(%arg0: i32) -> (i32, i32) {
    %c0_i32 = arith.constant 0 : i32
    %c0_i32_0 = arith.constant 0 : i32
    %c0_i32_1 = arith.constant 0 : i32
    return %c0_i32, %c0_i32_0 : i32, i32
  }
  func.func @transform_5(%arg0: i32) -> (i32, i32) {
    %c0_i32 = arith.constant 0 : i32
    %c0_i32_0 = arith.constant 0 : i32
    %c0_i32_1 = arith.constant 0 : i32
    return %c0_i32, %c0_i32_0 : i32, i32
  }
  func.func @transform_6(%arg0: i32) -> (i32, i32) {
    %c0_i32 = arith.constant 0 : i32
    %c0_i32_0 = arith.constant 0 : i32
    %c0_i32_1 = arith.constant 0 : i32
    return %c0_i32, %c0_i32_0 : i32, i32
  }
}

</mosaic_0001>

<llo_original>
// kernel: tpu_custom_call.1
$region0: #{tpu_custom_call.1}
  #allocation0 [shape = 'u32[]', space=smem, size = 0x4, offset = 0x4, fixed_abs, tag = 'smem constant byte address 0x4 - core index']
  #allocation1 [shape = 'u32[144,128]{1,0:T(1,128)}', space=vmem, size = 0x12000, scoped, tag = 'internal scratch']
  #allocation2 [shape = 'f32[16,256]{1,0:T(8,128)}', space=vmem, size = 0x4000, scoped, tag = 'scratch operand']
  %s0 = inlined_call_operand.hbm [shape: f32[16,300], index: 0, kind: input, shape index: {}]
  %s1 = inlined_call_operand.hbm [shape: f32[300,1024], index: 1, kind: input, shape index: {}]
  %s2 = inlined_call_operand.hbm [shape: f32[1,1024], index: 2, kind: input, shape index: {}]
  %s3 = inlined_call_operand.hbm [shape: f32[256,1024], index: 3, kind: input, shape index: {}]
  %s4 = inlined_call_operand.hbm [shape: f32[256,128], index: 4, kind: input, shape index: {}]
  %s5 = inlined_call_operand.hbm [shape: f32[1,128], index: 5, kind: input, shape index: {}]
  %s6 = inlined_call_operand.hbm [shape: f32[16,128], index: 6, kind: output, shape index: {}]
  %s7 = sld [smem:[#allocation0]]
  $region58: #{tpu_custom_call.1} parent=0
    _
  %s9 = ssub.s32 1, %s7
  %s10 = scalar_select 0, %s9, %s7
  $region1: #{tpu_custom_call.1} parent=0
    #allocation3 [shape = 'u8[24576]{0}', space=vmem, size = 0x6000, scoped, tag = 'input window, operand 0, single buffered']
    #allocation4 [shape = 's32[1]{0}', space=sflag, size = 0x4, scoped, tag = 'scoped memory for tpu_custom_call.1']
    #allocation5 [shape = 's32[1]{0}', space=sflag, size = 0x4, scoped, tag = 'scoped memory for tpu_custom_call.1']
    #allocation6 [shape = 'u8[1245184]{0}', space=vmem, size = 0x130000, scoped, tag = 'input window, operand 1, single buffered']
    #allocation7 [shape = 's32[1]{0}', space=sflag, size = 0x4, scoped, tag = 'scoped memory for tpu_custom_call.1']
    #allocation8 [shape = 'u8[4096]{0}', space=vmem, size = 0x1000, scoped, tag = 'input window, operand 2, single buffered']
    #allocation9 [shape = 'u8[1048576]{0}', space=vmem, size = 0x100000, scoped, tag = 'input window, operand 3, single buffered']
    #allocation10 [shape = 's32[1]{0}', space=sflag, size = 0x4, scoped, tag = 'scoped memory for tpu_custom_call.1']
    #allocation11 [shape = 'u8[131072]{0}', space=vmem, size = 0x20000, scoped, tag = 'input window, operand 4, single buffered']
    #allocation12 [shape = 'u8[512]{0}', space=vmem, size = 0x400, scoped, tag = 'input window, operand 5, single buffered']
    #allocation13 [shape = 's32[1]{0}', space=sflag, size = 0x4, scoped, tag = 'scoped memory for tpu_custom_call.1']
    #allocation14 [shape = 'u8[8192]{0}', space=vmem, size = 0x2000, scoped, tag = 'output window, operand 0, single buffered']
    %11 = vsyncpa [#allocation4], 0
    %12 = vsyncpa [#allocation7], 0
    %13 = vsyncpa [#allocation10], 0
    %14 = vsyncpa [#allocation13], 0
    %15 = vsyncpa [#allocation5], 0
    // Predicated region
    $region2: #{tpu_custom_call.1} parent=1 // pred_check
      _
    $region3: #{tpu_custom_call.1} parent=1 // pred_check_branch
      %17 = sbr.rel (0) target = $region5
    $region4: #{tpu_custom_call.1} parent=1 // pred_region
      %s19 = ssub.s32 768, 768
      %20 = vsyncadd [#allocation4], %s19
      %s21 = sshll.u32 [#allocation3], 4
      %s22 = int_to_ptr.vmem [resolvable:$true] %s21
      %27 = dma.hbm_to_vmem [thread:$0]  %s0, 768, %s22, [#allocation4], 384, 384, 24
    $region5: #{tpu_custom_call.1} parent=1 // pred_fallthru
      _
    // Predicated region
    $region6: #{tpu_custom_call.1} parent=1 // pred_check
      _
    $region7: #{tpu_custom_call.1} parent=1 // pred_check_branch
      %29 = sbr.rel (0) target = $region9
    $region8: #{tpu_custom_call.1} parent=1 // pred_region
      %s31 = ssub.s32 38912, 38912
      %32 = vsyncadd [#allocation7], %s31
      %s33 = sshll.u32 [#allocation6], 4
      %s34 = int_to_ptr.vmem [resolvable:$true] %s33
      %39 = dma.hbm_to_vmem [thread:$0]  %s1, 38912, %s34, [#allocation7], 1024, 1024, 64
    $region9: #{tpu_custom_call.1} parent=1 // pred_fallthru
      _
    // Predicated region
    $region10: #{tpu_custom_call.1} parent=1 // pred_check
      _
    $region11: #{tpu_custom_call.1} parent=1 // pred_check_branch
      %41 = sbr.rel (0) target = $region13
    $region12: #{tpu_custom_call.1} parent=1 // pred_region
      %s43 = ssub.s32 128, 128
      %44 = vsyncadd [#allocation7], %s43
      %s46 = sshll.u32 [#allocation8], 4
      %s47 = int_to_ptr.vmem [resolvable:$true] %s46
      %49 = dma.hbm_to_vmem [thread:$0]  %s2, 128, %s47, [#allocation7]
    $region13: #{tpu_custom_call.1} parent=1 // pred_fallthru
      _
    // Predicated region
    $region14: #{tpu_custom_call.1} parent=1 // pred_check
      _
    $region15: #{tpu_custom_call.1} parent=1 // pred_check_branch
      %51 = sbr.rel (0) target = $region17
    $region16: #{tpu_custom_call.1} parent=1 // pred_region
      %s53 = ssub.s32 32768, 32768
      %54 = vsyncadd [#allocation10], %s53
      %s55 = sshll.u32 [#allocation9], 4
      %s56 = int_to_ptr.vmem [resolvable:$true] %s55
      %61 = dma.hbm_to_vmem [thread:$0]  %s3, 32768, %s56, [#allocation10], 1024, 1024, 64
    $region17: #{tpu_custom_call.1} parent=1 // pred_fallthru
      _
    // Predicated region
    $region18: #{tpu_custom_call.1} parent=1 // pred_check
      _
    $region19: #{tpu_custom_call.1} parent=1 // pred_check_branch
      %63 = sbr.rel (0) target = $region21
    $region20: #{tpu_custom_call.1} parent=1 // pred_region
      %s65 = ssub.s32 4096, 4096
      %66 = vsyncadd [#allocation10], %s65
      %s67 = sshll.u32 [#allocation11], 4
      %s68 = int_to_ptr.vmem [resolvable:$true] %s67
      %73 = dma.hbm_to_vmem [thread:$0]  %s4, 4096, %s68, [#allocation10], 128, 128, 8
    $region21: #{tpu_custom_call.1} parent=1 // pred_fallthru
      _
    // Predicated region
    $region22: #{tpu_custom_call.1} parent=1 // pred_check
      _
    $region23: #{tpu_custom_call.1} parent=1 // pred_check_branch
      %75 = sbr.rel (0) target = $region25
    $region24: #{tpu_custom_call.1} parent=1 // pred_region
      %s77 = ssub.s32 16, 16
      %78 = vsyncadd [#allocation13], %s77
      %s80 = sshll.u32 [#allocation12], 4
      %s81 = int_to_ptr.vmem [resolvable:$true] %s80
      %83 = dma.hbm_to_vmem [thread:$0]  %s5, 16, %s81, [#allocation13]
    $region25: #{tpu_custom_call.1} parent=1 // pred_fallthru
      _
    // Predicated region
    $region26: #{tpu_custom_call.1} parent=1 // pred_check
      _
    $region27: #{tpu_custom_call.1} parent=1 // pred_check_branch
      %85 = sbr.rel (0) target = $region29
    $region28: #{tpu_custom_call.1} parent=1 // pred_region
      %86 = dma.done [#allocation4], 768
    $region29: #{tpu_custom_call.1} parent=1 // pred_fallthru
      _
    // Predicated region
    $region30: #{tpu_custom_call.1} parent=1 // pred_check
      _
    $region31: #{tpu_custom_call.1} parent=1 // pred_check_branch
      %88 = sbr.rel (0) target = $region33
    $region32: #{tpu_custom_call.1} parent=1 // pred_region
      %89 = dma.done [#allocation7], 38912
    $region33: #{tpu_custom_call.1} parent=1 // pred_fallthru
      _
    // Predicated region
    $region34: #{tpu_custom_call.1} parent=1 // pred_check
      _
    $region35: #{tpu_custom_call.1} parent=1 // pred_check_branch
      %91 = sbr.rel (0) target = $region37
    $region36: #{tpu_custom_call.1} parent=1 // pred_region
      %92 = dma.done [#allocation7], 128
    $region37: #{tpu_custom_call.1} parent=1 // pred_fallthru
      _
    // Predicated region
    $region38: #{tpu_custom_call.1} parent=1 // pred_check
      _
    $region39: #{tpu_custom_call.1} parent=1 // pred_check_branch
      %94 = sbr.rel (0) target = $region41
    $region40: #{tpu_custom_call.1} parent=1 // pred_region
      %95 = dma.done [#allocation10], 32768
    $region41: #{tpu_custom_call.1} parent=1 // pred_fallthru
      _
    // Predicated region
    $region42: #{tpu_custom_call.1} parent=1 // pred_check
      _
    $region43: #{tpu_custom_call.1} parent=1 // pred_check_branch
      %97 = sbr.rel (0) target = $region45
    $region44: #{tpu_custom_call.1} parent=1 // pred_region
      %98 = dma.done [#allocation10], 4096
    $region45: #{tpu_custom_call.1} parent=1 // pred_fallthru
      _
    // Predicated region
    $region46: #{tpu_custom_call.1} parent=1 // pred_check
      _
    $region47: #{tpu_custom_call.1} parent=1 // pred_check_branch
      %100 = sbr.rel (0) target = $region49
    $region48: #{tpu_custom_call.1} parent=1 // pred_region
      %101 = dma.done [#allocation13], 16
    $region49: #{tpu_custom_call.1} parent=1 // pred_fallthru
      _
    %v102 = vld [vmem:[#allocation3] sm:$0xff]
    %v103 = vld [vmem:[#allocation3 + $0x8] sm:$0xff]
    %v104 = vld [vmem:[#allocation3 + $0x10] sm:$0xff]
    %v105 = vld [vmem:[#allocation3 + $0x18] sm:$0xff]
    %v106 = vld [vmem:[#allocation3 + $0x20] sm:$0xff]
    %v107 = vld [vmem:[#allocation3 + $0x28] sm:$0xff]
    %v108 = vld [vmem:[#allocation6] sm:$0xff]
    %v109 = vld [vmem:[#allocation6 + $0x8] sm:$0xff]
    %v110 = vld [vmem:[#allocation6 + $0x10] sm:$0xff]
    %v111 = vld [vmem:[#allocation6 + $0x18] sm:$0xff]
    %v112 = vld [vmem:[#allocation6 + $0x20] sm:$0xff]
    %v113 = vld [vmem:[#allocation6 + $0x28] sm:$0xff]
    %v114 = vld [vmem:[#allocation6 + $0x30] sm:$0xff]
    %v115 = vld [vmem:[#allocation6 + $0x38] sm:$0xff]
    %v116 = vld [vmem:[#allocation6 + $0x40] sm:$0xff]
    %v117 = vld [vmem:[#allocation6 + $0x48] sm:$0xff]
    %v118 = vld [vmem:[#allocation6 + $0x50] sm:$0xff]
    %v119 = vld [vmem:[#allocation6 + $0x58] sm:$0xff]
    %v120 = vld [vmem:[#allocation6 + $0x60] sm:$0xff]
    %v121 = vld [vmem:[#allocation6 + $0x68] sm:$0xff]
    %v122 = vld [vmem:[#allocation6 + $0x70] sm:$0xff]
    %v123 = vld [vmem:[#allocation6 + $0x78] sm:$0xff]
    %v124 = vld [vmem:[#allocation6 + $0x80] sm:$0xff]
    %v125 = vld [vmem:[#allocation6 + $0x88] sm:$0xff]
    %v126 = vld [vmem:[#allocation6 + $0x90] sm:$0xff]
    %v127 = vld [vmem:[#allocation6 + $0x98] sm:$0xff]
    %v128 = vld [vmem:[#allocation6 + $0xa0] sm:$0xff]
    %v129 = vld [vmem:[#allocation6 + $0xa8] sm:$0xff]
    %v130 = vld [vmem:[#allocation6 + $0xb0] sm:$0xff]
    %v131 = vld [vmem:[#allocation6 + $0xb8] sm:$0xff]
    %v132 = vld [vmem:[#allocation6 + $0xc0] sm:$0xff]
    %v133 = vld [vmem:[#allocation6 + $0xc8] sm:$0xff]
    %v134 = vld [vmem:[#allocation6 + $0xd0] sm:$0xff]
    %v135 = vld [vmem:[#allocation6 + $0xd8] sm:$0xff]
    %v136 = vld [vmem:[#allocation6 + $0xe0] sm:$0xff]
    %v137 = vld [vmem:[#allocation6 + $0xe8] sm:$0xff]
    %v138 = vld [vmem:[#allocation6 + $0xf0] sm:$0xff]
    %v139 = vld [vmem:[#allocation6 + $0xf8] sm:$0xff]
    %v140 = vld [vmem:[#allocation6 + $0x100] sm:$0xff]
    %v141 = vld [vmem:[#allocation6 + $0x108] sm:$0xff]
    %v142 = vld [vmem:[#allocation6 + $0x110] sm:$0xff]
    %v143 = vld [vmem:[#allocation6 + $0x118] sm:$0xff]
    %v144 = vld [vmem:[#allocation6 + $0x120] sm:$0xff]
    %v145 = vld [vmem:[#allocation6 + $0x128] sm:$0xff]
    %v146 = vld [vmem:[#allocation6 + $0x130] sm:$0xff]
    %v147 = vld [vmem:[#allocation6 + $0x138] sm:$0xff]
    %v148 = vld [vmem:[#allocation6 + $0x140] sm:$0xff]
    %v149 = vld [vmem:[#allocation6 + $0x148] sm:$0xff]
    %v150 = vld [vmem:[#allocation6 + $0x150] sm:$0xff]
    %v151 = vld [vmem:[#allocation6 + $0x158] sm:$0xff]
    %v152 = vld [vmem:[#allocation6 + $0x160] sm:$0xff]
    %v153 = vld [vmem:[#allocation6 + $0x168] sm:$0xff]
    %v154 = vld [vmem:[#allocation6 + $0x170] sm:$0xff]
    %v155 = vld [vmem:[#allocation6 + $0x178] sm:$0xff]
    %v156 = vld [vmem:[#allocation6 + $0x180] sm:$0xff]
    %v157 = vld [vmem:[#allocation6 + $0x188] sm:$0xff]
    %v158 = vld [vmem:[#allocation6 + $0x190] sm:$0xff]
    %v159 = vld [vmem:[#allocation6 + $0x198] sm:$0xff]
    %v160 = vld [vmem:[#allocation6 + $0x1a0] sm:$0xff]
    %v161 = vld [vmem:[#allocation6 + $0x1a8] sm:$0xff]
    %v162 = vld [vmem:[#allocation6 + $0x1b0] sm:$0xff]
    %v163 = vld [vmem:[#allocation6 + $0x1b8] sm:$0xff]
    %v164 = vld [vmem:[#allocation6 + $0x1c0] sm:$0xff]
    %v165 = vld [vmem:[#allocation6 + $0x1c8] sm:$0xff]
    %v166 = vld [vmem:[#allocation6 + $0x1d0] sm:$0xff]
    %v167 = vld [vmem:[#allocation6 + $0x1d8] sm:$0xff]
    %v168 = vld [vmem:[#allocation6 + $0x1e0] sm:$0xff]
    %v169 = vld [vmem:[#allocation6 + $0x1e8] sm:$0xff]
    %v170 = vld [vmem:[#allocation6 + $0x1f0] sm:$0xff]
    %v171 = vld [vmem:[#allocation6 + $0x1f8] sm:$0xff]
    %v172 = vld [vmem:[#allocation6 + $0x200] sm:$0xff]
    %v173 = vld [vmem:[#allocation6 + $0x208] sm:$0xff]
    %v174 = vld [vmem:[#allocation6 + $0x210] sm:$0xff]
    %v175 = vld [vmem:[#allocation6 + $0x218] sm:$0xff]
    %v176 = vld [vmem:[#allocation6 + $0x220] sm:$0xff]
    %v177 = vld [vmem:[#allocation6 + $0x228] sm:$0xff]
    %v178 = vld [vmem:[#allocation6 + $0x230] sm:$0xff]
    %v179 = vld [vmem:[#allocation6 + $0x238] sm:$0xff]
    %v180 = vld [vmem:[#allocation6 + $0x240] sm:$0xff]
    %v181 = vld [vmem:[#allocation6 + $0x248] sm:$0xff]
    %v182 = vld [vmem:[#allocation6 + $0x250] sm:$0xff]
    %v183 = vld [vmem:[#allocation6 + $0x258] sm:$0xff]
    %v184 = vld [vmem:[#allocation6 + $0x260] sm:$0xff]
    %v185 = vld [vmem:[#allocation6 + $0x268] sm:$0xff]
    %v186 = vld [vmem:[#allocation6 + $0x270] sm:$0xff]
    %v187 = vld [vmem:[#allocation6 + $0x278] sm:$0xff]
    %v188 = vld [vmem:[#allocation6 + $0x280] sm:$0xff]
    %v189 = vld [vmem:[#allocation6 + $0x288] sm:$0xff]
    %v190 = vld [vmem:[#allocation6 + $0x290] sm:$0xff]
    %v191 = vld [vmem:[#allocation6 + $0x298] sm:$0xff]
    %v192 = vld [vmem:[#allocation6 + $0x2a0] sm:$0xff]
    %v193 = vld [vmem:[#allocation6 + $0x2a8] sm:$0xff]
    %v194 = vld [vmem:[#allocation6 + $0x2b0] sm:$0xff]
    %v195 = vld [vmem:[#allocation6 + $0x2b8] sm:$0xff]
    %v196 = vld [vmem:[#allocation6 + $0x2c0] sm:$0xff]
    %v197 = vld [vmem:[#allocation6 + $0x2c8] sm:$0xff]
    %v198 = vld [vmem:[#allocation6 + $0x2d0] sm:$0xff]
    %v199 = vld [vmem:[#allocation6 + $0x2d8] sm:$0xff]
    %v200 = vld [vmem:[#allocation6 + $0x2e0] sm:$0xff]
    %v201 = vld [vmem:[#allocation6 + $0x2e8] sm:$0xff]
    %v202 = vld [vmem:[#allocation6 + $0x2f0] sm:$0xff]
    %v203 = vld [vmem:[#allocation6 + $0x2f8] sm:$0xff]
    %v204 = vld [vmem:[#allocation6 + $0x300] sm:$0xff]
    %v205 = vld [vmem:[#allocation6 + $0x308] sm:$0xff]
    %v206 = vld [vmem:[#allocation6 + $0x310] sm:$0xff]
    %v207 = vld [vmem:[#allocation6 + $0x318] sm:$0xff]
    %v208 = vld [vmem:[#allocation6 + $0x320] sm:$0xff]
    %v209 = vld [vmem:[#allocation6 + $0x328] sm:$0xff]
    %v210 = vld [vmem:[#allocation6 + $0x330] sm:$0xff]
    %v211 = vld [vmem:[#allocation6 + $0x338] sm:$0xff]
    %v212 = vld [vmem:[#allocation6 + $0x340] sm:$0xff]
    %v213 = vld [vmem:[#allocation6 + $0x348] sm:$0xff]
    %v214 = vld [vmem:[#allocation6 + $0x350] sm:$0xff]
    %v215 = vld [vmem:[#allocation6 + $0x358] sm:$0xff]
    %v216 = vld [vmem:[#allocation6 + $0x360] sm:$0xff]
    %v217 = vld [vmem:[#allocation6 + $0x368] sm:$0xff]
    %v218 = vld [vmem:[#allocation6 + $0x370] sm:$0xff]
    %v219 = vld [vmem:[#allocation6 + $0x378] sm:$0xff]
    %v220 = vld [vmem:[#allocation6 + $0x380] sm:$0xff]
    %v221 = vld [vmem:[#allocation6 + $0x388] sm:$0xff]
    %v222 = vld [vmem:[#allocation6 + $0x390] sm:$0xff]
    %v223 = vld [vmem:[#allocation6 + $0x398] sm:$0xff]
    %v224 = vld [vmem:[#allocation6 + $0x3a0] sm:$0xff]
    %v225 = vld [vmem:[#allocation6 + $0x3a8] sm:$0xff]
    %v226 = vld [vmem:[#allocation6 + $0x3b0] sm:$0xff]
    %v227 = vld [vmem:[#allocation6 + $0x3b8] sm:$0xff]
    %v228 = vld [vmem:[#allocation6 + $0x3c0] sm:$0xff]
    %v229 = vld [vmem:[#allocation6 + $0x3c8] sm:$0xff]
    %v230 = vld [vmem:[#allocation6 + $0x3d0] sm:$0xff]
    %v231 = vld [vmem:[#allocation6 + $0x3d8] sm:$0xff]
    %v232 = vld [vmem:[#allocation6 + $0x3e0] sm:$0xff]
    %v233 = vld [vmem:[#allocation6 + $0x3e8] sm:$0xff]
    %v234 = vld [vmem:[#allocation6 + $0x3f0] sm:$0xff]
    %v235 = vld [vmem:[#allocation6 + $0x3f8] sm:$0xff]
    %v236 = vld [vmem:[#allocation6 + $0x400] sm:$0xff]
    %v237 = vld [vmem:[#allocation6 + $0x408] sm:$0xff]
    %v238 = vld [vmem:[#allocation6 + $0x410] sm:$0xff]
    %v239 = vld [vmem:[#allocation6 + $0x418] sm:$0xff]
    %v240 = vld [vmem:[#allocation6 + $0x420] sm:$0xff]
    %v241 = vld [vmem:[#allocation6 + $0x428] sm:$0xff]
    %v242 = vld [vmem:[#allocation6 + $0x430] sm:$0xff]
    %v243 = vld [vmem:[#allocation6 + $0x438] sm:$0xff]
    %v244 = vld [vmem:[#allocation6 + $0x440] sm:$0xff]
    %v245 = vld [vmem:[#allocation6 + $0x448] sm:$0xff]
    %v246 = vld [vmem:[#allocation6 + $0x450] sm:$0xff]
    %v247 = vld [vmem:[#allocation6 + $0x458] sm:$0xff]
    %v248 = vld [vmem:[#allocation6 + $0x460] sm:$0xff]
    %v249 = vld [vmem:[#allocation6 + $0x468] sm:$0xff]
    %v250 = vld [vmem:[#allocation6 + $0x470] sm:$0xff]
    %v251 = vld [vmem:[#allocation6 + $0x478] sm:$0xff]
    %v252 = vld [vmem:[#allocation6 + $0x480] sm:$0xff]
    %v253 = vld [vmem:[#allocation6 + $0x488] sm:$0xff]
    %v254 = vld [vmem:[#allocation6 + $0x490] sm:$0xff]
    %v255 = vld [vmem:[#allocation6 + $0x498] sm:$0xff]
    %v256 = vld [vmem:[#allocation6 + $0x4a0] sm:$0xff]
    %v257 = vld [vmem:[#allocation6 + $0x4a8] sm:$0xff]
    %v258 = vld [vmem:[#allocation6 + $0x4b0] sm:$0xff]
    %v259 = vld [vmem:[#allocation6 + $0x4b8] sm:$0xff]
    %v260 = vld [vmem:[#allocation6 + $0x4c0] sm:$0xff]
    %v261 = vld [vmem:[#allocation6 + $0x4c8] sm:$0xff]
    %v262 = vld [vmem:[#allocation6 + $0x4d0] sm:$0xff]
    %v263 = vld [vmem:[#allocation6 + $0x4d8] sm:$0xff]
    %v264 = vld [vmem:[#allocation6 + $0x4e0] sm:$0xff]
    %v265 = vld [vmem:[#allocation6 + $0x4e8] sm:$0xff]
    %v266 = vld [vmem:[#allocation6 + $0x4f0] sm:$0xff]
    %v267 = vld [vmem:[#allocation6 + $0x4f8] sm:$0xff]
    %v268 = vld [vmem:[#allocation6 + $0x500] sm:$0xff]
    %v269 = vld [vmem:[#allocation6 + $0x508] sm:$0xff]
    %v270 = vld [vmem:[#allocation6 + $0x510] sm:$0xff]
    %v271 = vld [vmem:[#allocation6 + $0x518] sm:$0xff]
    %v272 = vld [vmem:[#allocation6 + $0x520] sm:$0xff]
    %v273 = vld [vmem:[#allocation6 + $0x528] sm:$0xff]
    %v274 = vld [vmem:[#allocation6 + $0x530] sm:$0xff]
    %v275 = vld [vmem:[#allocation6 + $0x538] sm:$0xff]
    %v276 = vld [vmem:[#allocation6 + $0x540] sm:$0xff]
    %v277 = vld [vmem:[#allocation6 + $0x548] sm:$0xff]
    %v278 = vld [vmem:[#allocation6 + $0x550] sm:$0xff]
    %v279 = vld [vmem:[#allocation6 + $0x558] sm:$0xff]
    %v280 = vld [vmem:[#allocation6 + $0x560] sm:$0xff]
    %v281 = vld [vmem:[#allocation6 + $0x568] sm:$0xff]
    %v282 = vld [vmem:[#allocation6 + $0x570] sm:$0xff]
    %v283 = vld [vmem:[#allocation6 + $0x578] sm:$0xff]
    %v284 = vld [vmem:[#allocation6 + $0x580] sm:$0xff]
    %v285 = vld [vmem:[#allocation6 + $0x588] sm:$0xff]
    %v286 = vld [vmem:[#allocation6 + $0x590] sm:$0xff]
    %v287 = vld [vmem:[#allocation6 + $0x598] sm:$0xff]
    %v288 = vld [vmem:[#allocation6 + $0x5a0] sm:$0xff]
    %v289 = vld [vmem:[#allocation6 + $0x5a8] sm:$0xff]
    %v290 = vld [vmem:[#allocation6 + $0x5b0] sm:$0xff]
    %v291 = vld [vmem:[#allocation6 + $0x5b8] sm:$0xff]
    %v292 = vld [vmem:[#allocation6 + $0x5c0] sm:$0xff]
    %v293 = vld [vmem:[#allocation6 + $0x5c8] sm:$0xff]
    %v294 = vld [vmem:[#allocation6 + $0x5d0] sm:$0xff]
    %v295 = vld [vmem:[#allocation6 + $0x5d8] sm:$0xff]
    %v296 = vld [vmem:[#allocation6 + $0x5e0] sm:$0xff]
    %v297 = vld [vmem:[#allocation6 + $0x5e8] sm:$0xff]
    %v298 = vld [vmem:[#allocation6 + $0x5f0] sm:$0xff]
    %v299 = vld [vmem:[#allocation6 + $0x5f8] sm:$0xff]
    %v300 = vld [vmem:[#allocation6 + $0x600] sm:$0xff]
    %v301 = vld [vmem:[#allocation6 + $0x608] sm:$0xff]
    %v302 = vld [vmem:[#allocation6 + $0x610] sm:$0xff]
    %v303 = vld [vmem:[#allocation6 + $0x618] sm:$0xff]
    %v304 = vld [vmem:[#allocation6 + $0x620] sm:$0xff]
    %v305 = vld [vmem:[#allocation6 + $0x628] sm:$0xff]
    %v306 = vld [vmem:[#allocation6 + $0x630] sm:$0xff]
    %v307 = vld [vmem:[#allocation6 + $0x638] sm:$0xff]
    %v308 = vld [vmem:[#allocation6 + $0x640] sm:$0xff]
    %v309 = vld [vmem:[#allocation6 + $0x648] sm:$0xff]
    %v310 = vld [vmem:[#allocation6 + $0x650] sm:$0xff]
    %v311 = vld [vmem:[#allocation6 + $0x658] sm:$0xff]
    %v312 = vld [vmem:[#allocation6 + $0x660] sm:$0xff]
    %v313 = vld [vmem:[#allocation6 + $0x668] sm:$0xff]
    %v314 = vld [vmem:[#allocation6 + $0x670] sm:$0xff]
    %v315 = vld [vmem:[#allocation6 + $0x678] sm:$0xff]
    %v316 = vld [vmem:[#allocation6 + $0x680] sm:$0xff]
    %v317 = vld [vmem:[#allocation6 + $0x688] sm:$0xff]
    %v318 = vld [vmem:[#allocation6 + $0x690] sm:$0xff]
    %v319 = vld [vmem:[#allocation6 + $0x698] sm:$0xff]
    %v320 = vld [vmem:[#allocation6 + $0x6a0] sm:$0xff]
    %v321 = vld [vmem:[#allocation6 + $0x6a8] sm:$0xff]
    %v322 = vld [vmem:[#allocation6 + $0x6b0] sm:$0xff]
    %v323 = vld [vmem:[#allocation6 + $0x6b8] sm:$0xff]
    %v324 = vld [vmem:[#allocation6 + $0x6c0] sm:$0xff]
    %v325 = vld [vmem:[#allocation6 + $0x6c8] sm:$0xff]
    %v326 = vld [vmem:[#allocation6 + $0x6d0] sm:$0xff]
    %v327 = vld [vmem:[#allocation6 + $0x6d8] sm:$0xff]
    %v328 = vld [vmem:[#allocation6 + $0x6e0] sm:$0xff]
    %v329 = vld [vmem:[#allocation6 + $0x6e8] sm:$0xff]
    %v330 = vld [vmem:[#allocation6 + $0x6f0] sm:$0xff]
    %v331 = vld [vmem:[#allocation6 + $0x6f8] sm:$0xff]
    %v332 = vld [vmem:[#allocation6 + $0x700] sm:$0xff]
    %v333 = vld [vmem:[#allocation6 + $0x708] sm:$0xff]
    %v334 = vld [vmem:[#allocation6 + $0x710] sm:$0xff]
    %v335 = vld [vmem:[#allocation6 + $0x718] sm:$0xff]
    %v336 = vld [vmem:[#allocation6 + $0x720] sm:$0xff]
    %v337 = vld [vmem:[#allocation6 + $0x728] sm:$0xff]
    %v338 = vld [vmem:[#allocation6 + $0x730] sm:$0xff]
    %v339 = vld [vmem:[#allocation6 + $0x738] sm:$0xff]
    %v340 = vld [vmem:[#allocation6 + $0x740] sm:$0xff]
    %v341 = vld [vmem:[#allocation6 + $0x748] sm:$0xff]
    %v342 = vld [vmem:[#allocation6 + $0x750] sm:$0xff]
    %v343 = vld [vmem:[#allocation6 + $0x758] sm:$0xff]
    %v344 = vld [vmem:[#allocation6 + $0x760] sm:$0xff]
    %v345 = vld [vmem:[#allocation6 + $0x768] sm:$0xff]
    %v346 = vld [vmem:[#allocation6 + $0x770] sm:$0xff]
    %v347 = vld [vmem:[#allocation6 + $0x778] sm:$0xff]
    %v348 = vld [vmem:[#allocation6 + $0x780] sm:$0xff]
    %v349 = vld [vmem:[#allocation6 + $0x788] sm:$0xff]
    %v350 = vld [vmem:[#allocation6 + $0x790] sm:$0xff]
    %v351 = vld [vmem:[#allocation6 + $0x798] sm:$0xff]
    %v352 = vld [vmem:[#allocation6 + $0x7a0] sm:$0xff]
    %v353 = vld [vmem:[#allocation6 + $0x7a8] sm:$0xff]
    %v354 = vld [vmem:[#allocation6 + $0x7b0] sm:$0xff]
    %v355 = vld [vmem:[#allocation6 + $0x7b8] sm:$0xff]
    %v356 = vld [vmem:[#allocation6 + $0x7c0] sm:$0xff]
    %v357 = vld [vmem:[#allocation6 + $0x7c8] sm:$0xff]
    %v358 = vld [vmem:[#allocation6 + $0x7d0] sm:$0xff]
    %v359 = vld [vmem:[#allocation6 + $0x7d8] sm:$0xff]
    %v360 = vld [vmem:[#allocation6 + $0x7e0] sm:$0xff]
    %v361 = vld [vmem:[#allocation6 + $0x7e8] sm:$0xff]
    %v362 = vld [vmem:[#allocation6 + $0x7f0] sm:$0xff]
    %v363 = vld [vmem:[#allocation6 + $0x7f8] sm:$0xff]
    %v364 = vld [vmem:[#allocation6 + $0x800] sm:$0xff]
    %v365 = vld [vmem:[#allocation6 + $0x808] sm:$0xff]
    %v366 = vld [vmem:[#allocation6 + $0x810] sm:$0xff]
    %v367 = vld [vmem:[#allocation6 + $0x818] sm:$0xff]
    %v368 = vld [vmem:[#allocation6 + $0x820] sm:$0xff]
    %v369 = vld [vmem:[#allocation6 + $0x828] sm:$0xff]
    %v370 = vld [vmem:[#allocation6 + $0x830] sm:$0xff]
    %v371 = vld [vmem:[#allocation6 + $0x838] sm:$0xff]
    %v372 = vld [vmem:[#allocation6 + $0x840] sm:$0xff]
    %v373 = vld [vmem:[#allocation6 + $0x848] sm:$0xff]
    %v374 = vld [vmem:[#allocation6 + $0x850] sm:$0xff]
    %v375 = vld [vmem:[#allocation6 + $0x858] sm:$0xff]
    %v376 = vld [vmem:[#allocation6 + $0x860] sm:$0xff]
    %v377 = vld [vmem:[#allocation6 + $0x868] sm:$0xff]
    %v378 = vld [vmem:[#allocation6 + $0x870] sm:$0xff]
    %v379 = vld [vmem:[#allocation6 + $0x878] sm:$0xff]
    %v380 = vld [vmem:[#allocation6 + $0x880] sm:$0xff]
    %v381 = vld [vmem:[#allocation6 + $0x888] sm:$0xff]
    %v382 = vld [vmem:[#allocation6 + $0x890] sm:$0xff]
    %v383 = vld [vmem:[#allocation6 + $0x898] sm:$0xff]
    %v384 = vld [vmem:[#allocation6 + $0x8a0] sm:$0xff]
    %v385 = vld [vmem:[#allocation6 + $0x8a8] sm:$0xff]
    %v386 = vld [vmem:[#allocation6 + $0x8b0] sm:$0xff]
    %v387 = vld [vmem:[#allocation6 + $0x8b8] sm:$0xff]
    %v388 = vld [vmem:[#allocation6 + $0x8c0] sm:$0xff]
    %v389 = vld [vmem:[#allocation6 + $0x8c8] sm:$0xff]
    %v390 = vld [vmem:[#allocation6 + $0x8d0] sm:$0xff]
    %v391 = vld [vmem:[#allocation6 + $0x8d8] sm:$0xff]
    %v392 = vld [vmem:[#allocation6 + $0x8e0] sm:$0xff]
    %v393 = vld [vmem:[#allocation6 + $0x8e8] sm:$0xff]
    %v394 = vld [vmem:[#allocation6 + $0x8f0] sm:$0xff]
    %v395 = vld [vmem:[#allocation6 + $0x8f8] sm:$0xff]
    %v396 = vld [vmem:[#allocation6 + $0x900] sm:$0xff]
    %v397 = vld [vmem:[#allocation6 + $0x908] sm:$0xff]
    %v398 = vld [vmem:[#allocation6 + $0x910] sm:$0xff]
    %v399 = vld [vmem:[#allocation6 + $0x918] sm:$0xff]
    %v400 = vld [vmem:[#allocation6 + $0x920] sm:$0xff]
    %v401 = vld [vmem:[#allocation6 + $0x928] sm:$0xff]
    %v402 = vld [vmem:[#allocation6 + $0x930] sm:$0xff]
    %v403 = vld [vmem:[#allocation6 + $0x938] sm:$0xff]
    %v404 = vld [vmem:[#allocation6 + $0x940] sm:$0xf]
    %v405 = vld [vmem:[#allocation6 + $0x948] sm:$0xf]
    %v406 = vld [vmem:[#allocation6 + $0x950] sm:$0xf]
    %v407 = vld [vmem:[#allocation6 + $0x958] sm:$0xf]
    %v408 = vld [vmem:[#allocation6 + $0x960] sm:$0xf]
    %v409 = vld [vmem:[#allocation6 + $0x968] sm:$0xf]
    %v410 = vld [vmem:[#allocation6 + $0x970] sm:$0xf]
    %v411 = vld [vmem:[#allocation6 + $0x978] sm:$0xf]
    %v412 = vld [vmem:[#allocation8] sm:$0xff]
    %v414 = vlaneseq
    %v415 = vshrl.u32 %v414, 7
    %v416 = vsub.s32 0, %v415
    %v417 = vrot.slane %v412, %v416
    %v418 = vlaneseq
    %v419 = vshrl.u32 %v418, 7
    %v420 = vsub.s32 1, %v419
    %v421 = vrot.slane %v412, %v420
    %v422 = vlaneseq
    %v423 = vshrl.u32 %v422, 7
    %v424 = vsub.s32 2, %v423
    %v425 = vrot.slane %v412, %v424
    %v426 = vlaneseq
    %v427 = vshrl.u32 %v426, 7
    %v428 = vsub.s32 3, %v427
    %v429 = vrot.slane %v412, %v428
    %v430 = vlaneseq
    %v431 = vshrl.u32 %v430, 7
    %v432 = vsub.s32 4, %v431
    %v433 = vrot.slane %v412, %v432
    %v434 = vlaneseq
    %v435 = vshrl.u32 %v434, 7
    %v436 = vsub.s32 5, %v435
    %v437 = vrot.slane %v412, %v436
    %v438 = vlaneseq
    %v439 = vshrl.u32 %v438, 7
    %v440 = vsub.s32 6, %v439
    %v441 = vrot.slane %v412, %v440
    %v442 = vlaneseq
    %v443 = vshrl.u32 %v442, 7
    %v444 = vsub.s32 7, %v443
    %v445 = vrot.slane %v412, %v444
    %vm454 = vcmask 359424
    %v456 = vsel %vm454, %v104, 0
    %v459 = vsel %vm454, %v107, 0
    %vm461 = vcmask 1043456
    %v463 = vsel %vm461, %v404, 0
    %v466 = vsel %vm461, %v405, 0
    %v469 = vsel %vm461, %v406, 0
    %v472 = vsel %vm461, %v407, 0
    %v475 = vsel %vm461, %v408, 0
    %v478 = vsel %vm461, %v409, 0
    %v481 = vsel %vm461, %v410, 0
    %v484 = vsel %vm461, %v411, 0
    %486 = vmatprep.subr.mxu0 %v229
    %487 = vmatpush1.msra.mxu0 %v228
    %488 = vmatprep.subr.mxu0 %v221
    %489 = vmatpush1.msra.mxu0 %v220
    %490 = vmatprep.subr.mxu0 %v213
    %491 = vmatpush1.msra.mxu0 %v212
    %492 = vmatprep.subr.mxu0 %v205
    %493 = vmatpush1.msra.mxu0 %v204
    %494 = vmatprep.subr.mxu0 %v197
    %495 = vmatpush1.msra.mxu0 %v196
    %496 = vmatprep.subr.mxu0 %v189
    %497 = vmatpush1.msra.mxu0 %v188
    %498 = vmatprep.subr.mxu0 %v181
    %499 = vmatpush1.msra.mxu0 %v180
    %500 = vmatprep.subr.mxu0 %v173
    %501 = vmatpush1.msra.mxu0 %v172
    %502 = vmatprep.subr.mxu0 %v165
    %503 = vmatpush1.msra.mxu0 %v164
    %504 = vmatprep.subr.mxu0 %v157
    %505 = vmatpush1.msra.mxu0 %v156
    %506 = vmatprep.subr.mxu0 %v149
    %507 = vmatpush1.msra.mxu0 %v148
    %508 = vmatprep.subr.mxu0 %v141
    %509 = vmatpush1.msra.mxu0 %v140
    %510 = vmatprep.subr.mxu0 %v133
    %511 = vmatpush1.msra.mxu0 %v132
    %512 = vmatprep.subr.mxu0 %v125
    %513 = vmatpush1.msra.mxu0 %v124
    %514 = vmatprep.subr.mxu0 %v117
    %515 = vmatpush1.msra.mxu0 %v116
    %516 = vmatprep.subr.mxu0 %v109
    %517 = vmatpush1.msra.mxu0 %v108
    %518 = vmatprep.subr.mxu0 %v357
    %519 = vmatpush2.msra.mxu0 %v356
    %520 = vmatprep.subr.mxu0 %v349
    %521 = vmatpush2.msra.mxu0 %v348
    %522 = vmatprep.subr.mxu0 %v341
    %523 = vmatpush2.msra.mxu0 %v340
    %524 = vmatprep.subr.mxu0 %v333
    %525 = vmatpush2.msra.mxu0 %v332
    %526 = vmatprep.subr.mxu0 %v325
    %527 = vmatpush2.msra.mxu0 %v324
    %528 = vmatprep.subr.mxu0 %v317
    %529 = vmatpush2.msra.mxu0 %v316
    %530 = vmatprep.subr.mxu0 %v309
    %531 = vmatpush2.msra.mxu0 %v308
    %532 = vmatprep.subr.mxu0 %v301
    %533 = vmatpush2.msra.mxu0 %v300
    %534 = vmatprep.subr.mxu0 %v293
    %535 = vmatpush2.msra.mxu0 %v292
    %536 = vmatprep.subr.mxu0 %v285
    %537 = vmatpush2.msra.mxu0 %v284
    %538 = vmatprep.subr.mxu0 %v277
    %539 = vmatpush2.msra.mxu0 %v276
    %540 = vmatprep.subr.mxu0 %v269
    %541 = vmatpush2.msra.mxu0 %v268
    %542 = vmatprep.subr.mxu0 %v261
    %543 = vmatpush2.msra.mxu0 %v260
    %544 = vmatprep.subr.mxu0 %v253
    %545 = vmatpush2.msra.mxu0 %v252
    %546 = vmatprep.subr.mxu0 %v245
    %547 = vmatpush2.msra.mxu0 %v244
    %548 = vmatprep.subr.mxu0 %v237
    %549 = vmatpush2.msra.mxu0 %v236
    %550 = vmatprep.mubr.f32.mxu0 %v103
    %551 = vmatmul.mubr.f32.gmra.mxu0 %v102
    %v552 = vpop.f32.mrf.mxu0
    %v553 = vadd.f32 %v417, %v552
    %v554 = vpop.f32.mrf.mxu0
    %v555 = vadd.f32 %v421, %v554
    %556 = vmatprep.mubr.f32.mxu0 %v106
    %557 = vmatmul.mubr.f32.gmra.mxu0 %v105
    %v558 = vpop.f32.mrf.mxu0
    %v559 = vadd.f32 %v417, %v558
    %v560 = vpop.f32.mrf.mxu0
    %v561 = vadd.f32 %v421, %v560
    %562 = vdwg.mxu0
    %563 = vmatprep.subr.mxu0 0.0
    %564 = vmatpush1.msra.mxu0 0.0
    %565 = vmatprep.subr.mxu0 0.0
    %566 = vmatpush1.msra.mxu0 0.0
    %567 = vmatprep.subr.mxu0 0.0
    %568 = vmatpush1.msra.mxu0 0.0
    %569 = vmatprep.subr.mxu0 0.0
    %570 = vmatpush1.msra.mxu0 0.0
    %571 = vmatprep.subr.mxu0 0.0
    %572 = vmatpush1.msra.mxu0 0.0
    %573 = vmatprep.subr.mxu0 0.0
    %574 = vmatpush1.msra.mxu0 0.0
    %575 = vmatprep.subr.mxu0 0.0
    %576 = vmatpush1.msra.mxu0 0.0
    %577 = vmatprep.subr.mxu0 0.0
    %578 = vmatpush1.msra.mxu0 0.0
    %579 = vmatprep.subr.mxu0 0.0
    %580 = vmatpush1.msra.mxu0 0.0
    %581 = vmatprep.subr.mxu0 0.0
    %582 = vmatpush1.msra.mxu0 0.0
    %583 = vmatprep.subr.mxu0 %v466
    %584 = vmatpush1.msra.mxu0 %v463
    %585 = vmatprep.subr.mxu0 %v397
    %586 = vmatpush1.msra.mxu0 %v396
    %587 = vmatprep.subr.mxu0 %v389
    %588 = vmatpush1.msra.mxu0 %v388
    %589 = vmatprep.subr.mxu0 %v381
    %590 = vmatpush1.msra.mxu0 %v380
    %591 = vmatprep.subr.mxu0 %v373
    %592 = vmatpush1.msra.mxu0 %v372
    %593 = vmatprep.subr.mxu0 %v365
    %594 = vmatpush1.msra.mxu0 %v364
    %595 = vmatprep.subr.mxu0 0.0
    %596 = vmatpush2.msra.mxu0 0.0
    %597 = vmatprep.subr.mxu0 0.0
    %598 = vmatpush2.msra.mxu0 0.0
    %599 = vmatprep.subr.mxu0 0.0
    %600 = vmatpush2.msra.mxu0 0.0
    %601 = vmatprep.subr.mxu0 0.0
    %602 = vmatpush2.msra.mxu0 0.0
    %603 = vmatprep.subr.mxu0 0.0
    %604 = vmatpush2.msra.mxu0 0.0
    %605 = vmatprep.subr.mxu0 0.0
    %606 = vmatpush2.msra.mxu0 0.0
    %607 = vmatprep.subr.mxu0 0.0
    %608 = vmatpush2.msra.mxu0 0.0
    %609 = vmatprep.subr.mxu0 0.0
    %610 = vmatpush2.msra.mxu0 0.0
    %611 = vmatprep.subr.mxu0 0.0
    %612 = vmatpush2.msra.mxu0 0.0
    %613 = vmatprep.subr.mxu0 0.0
    %614 = vmatpush2.msra.mxu0 0.0
    %615 = vmatprep.subr.mxu0 0.0
    %616 = vmatpush2.msra.mxu0 0.0
    %617 = vmatprep.subr.mxu0 0.0
    %618 = vmatpush2.msra.mxu0 0.0
    %619 = vmatprep.subr.mxu0 0.0
    %620 = vmatpush2.msra.mxu0 0.0
    %621 = vmatprep.subr.mxu0 0.0
    %622 = vmatpush2.msra.mxu0 0.0
    %623 = vmatprep.subr.mxu0 0.0
    %624 = vmatpush2.msra.mxu0 0.0
    %625 = vmatprep.subr.mxu0 0.0
    %626 = vmatpush2.msra.mxu0 0.0
    %627 = vmatprep.mubr.f32.mxu0 0.0
    %628 = vmatmul.mubr.f32.gmra.mxu0 %v456
    %v629 = vpop.f32.mrf.mxu0
    %v630 = vadd.f32 %v553, %v629
    %v631 = vpop.f32.mrf.mxu0
    %v632 = vadd.f32 %v555, %v631
    %633 = vmatprep.mubr.f32.mxu0 0.0
    %634 = vmatmul.mubr.f32.gmra.mxu0 %v459
    %v635 = vpop.f32.mrf.mxu0
    %v636 = vadd.f32 %v559, %v635
    %v637 = vpop.f32.mrf.mxu0
    %v638 = vadd.f32 %v561, %v637
    %639 = vdwg.mxu0
    %640 = vmatprep.subr.mxu0 %v231
    %641 = vmatpush1.msra.mxu0 %v230
    %642 = vmatprep.subr.mxu0 %v223
    %643 = vmatpush1.msra.mxu0 %v222
    %644 = vmatprep.subr.mxu0 %v215
    %645 = vmatpush1.msra.mxu0 %v214
    %646 = vmatprep.subr.mxu0 %v207
    %647 = vmatpush1.msra.mxu0 %v206
    %648 = vmatprep.subr.mxu0 %v199
    %649 = vmatpush1.msra.mxu0 %v198
    %650 = vmatprep.subr.mxu0 %v191
    %651 = vmatpush1.msra.mxu0 %v190
    %652 = vmatprep.subr.mxu0 %v183
    %653 = vmatpush1.msra.mxu0 %v182
    %654 = vmatprep.subr.mxu0 %v175
    %655 = vmatpush1.msra.mxu0 %v174
    %656 = vmatprep.subr.mxu0 %v167
    %657 = vmatpush1.msra.mxu0 %v166
    %658 = vmatprep.subr.mxu0 %v159
    %659 = vmatpush1.msra.mxu0 %v158
    %660 = vmatprep.subr.mxu0 %v151
    %661 = vmatpush1.msra.mxu0 %v150
    %662 = vmatprep.subr.mxu0 %v143
    %663 = vmatpush1.msra.mxu0 %v142
    %664 = vmatprep.subr.mxu0 %v135
    %665 = vmatpush1.msra.mxu0 %v134
    %666 = vmatprep.subr.mxu0 %v127
    %667 = vmatpush1.msra.mxu0 %v126
    %668 = vmatprep.subr.mxu0 %v119
    %669 = vmatpush1.msra.mxu0 %v118
    %670 = vmatprep.subr.mxu0 %v111
    %671 = vmatpush1.msra.mxu0 %v110
    %672 = vmatprep.subr.mxu0 %v359
    %673 = vmatpush2.msra.mxu0 %v358
    %674 = vmatprep.subr.mxu0 %v351
    %675 = vmatpush2.msra.mxu0 %v350
    %676 = vmatprep.subr.mxu0 %v343
    %677 = vmatpush2.msra.mxu0 %v342
    %678 = vmatprep.subr.mxu0 %v335
    %679 = vmatpush2.msra.mxu0 %v334
    %680 = vmatprep.subr.mxu0 %v327
    %681 = vmatpush2.msra.mxu0 %v326
    %682 = vmatprep.subr.mxu0 %v319
    %683 = vmatpush2.msra.mxu0 %v318
    %684 = vmatprep.subr.mxu0 %v311
    %685 = vmatpush2.msra.mxu0 %v310
    %686 = vmatprep.subr.mxu0 %v303
    %687 = vmatpush2.msra.mxu0 %v302
    %688 = vmatprep.subr.mxu0 %v295
    %689 = vmatpush2.msra.mxu0 %v294
    %690 = vmatprep.subr.mxu0 %v287
    %691 = vmatpush2.msra.mxu0 %v286
    %692 = vmatprep.subr.mxu0 %v279
    %693 = vmatpush2.msra.mxu0 %v278
    %694 = vmatprep.subr.mxu0 %v271
    %695 = vmatpush2.msra.mxu0 %v270
    %696 = vmatprep.subr.mxu0 %v263
    %697 = vmatpush2.msra.mxu0 %v262
    %698 = vmatprep.subr.mxu0 %v255
    %699 = vmatpush2.msra.mxu0 %v254
    %700 = vmatprep.subr.mxu0 %v247
    %701 = vmatpush2.msra.mxu0 %v246
    %702 = vmatprep.subr.mxu0 %v239
    %703 = vmatpush2.msra.mxu0 %v238
    %704 = vmatprep.mubr.f32.mxu0 %v103
    %705 = vmatmul.mubr.f32.gmra.mxu0 %v102
    %v706 = vpop.f32.mrf.mxu0
    %v707 = vadd.f32 %v425, %v706
    %v708 = vpop.f32.mrf.mxu0
    %v709 = vadd.f32 %v429, %v708
    %710 = vmatprep.mubr.f32.mxu0 %v106
    %711 = vmatmul.mubr.f32.gmra.mxu0 %v105
    %v712 = vpop.f32.mrf.mxu0
    %v713 = vadd.f32 %v425, %v712
    %v714 = vpop.f32.mrf.mxu0
    %v715 = vadd.f32 %v429, %v714
    %716 = vdwg.mxu0
    %717 = vmatprep.subr.mxu0 0.0
    %718 = vmatpush1.msra.mxu0 0.0
    %719 = vmatprep.subr.mxu0 0.0
    %720 = vmatpush1.msra.mxu0 0.0
    %721 = vmatprep.subr.mxu0 0.0
    %722 = vmatpush1.msra.mxu0 0.0
    %723 = vmatprep.subr.mxu0 0.0
    %724 = vmatpush1.msra.mxu0 0.0
    %725 = vmatprep.subr.mxu0 0.0
    %726 = vmatpush1.msra.mxu0 0.0
    %727 = vmatprep.subr.mxu0 0.0
    %728 = vmatpush1.msra.mxu0 0.0
    %729 = vmatprep.subr.mxu0 0.0
    %730 = vmatpush1.msra.mxu0 0.0
    %731 = vmatprep.subr.mxu0 0.0
    %732 = vmatpush1.msra.mxu0 0.0
    %733 = vmatprep.subr.mxu0 0.0
    %734 = vmatpush1.msra.mxu0 0.0
    %735 = vmatprep.subr.mxu0 0.0
    %736 = vmatpush1.msra.mxu0 0.0
    %737 = vmatprep.subr.mxu0 %v472
    %738 = vmatpush1.msra.mxu0 %v469
    %739 = vmatprep.subr.mxu0 %v399
    %740 = vmatpush1.msra.mxu0 %v398
    %741 = vmatprep.subr.mxu0 %v391
    %742 = vmatpush1.msra.mxu0 %v390
    %743 = vmatprep.subr.mxu0 %v383
    %744 = vmatpush1.msra.mxu0 %v382
    %745 = vmatprep.subr.mxu0 %v375
    %746 = vmatpush1.msra.mxu0 %v374
    %747 = vmatprep.subr.mxu0 %v367
    %748 = vmatpush1.msra.mxu0 %v366
    %749 = vmatprep.subr.mxu0 0.0
    %750 = vmatpush2.msra.mxu0 0.0
    %751 = vmatprep.subr.mxu0 0.0
    %752 = vmatpush2.msra.mxu0 0.0
    %753 = vmatprep.subr.mxu0 0.0
    %754 = vmatpush2.msra.mxu0 0.0
    %755 = vmatprep.subr.mxu0 0.0
    %756 = vmatpush2.msra.mxu0 0.0
    %757 = vmatprep.subr.mxu0 0.0
    %758 = vmatpush2.msra.mxu0 0.0
    %759 = vmatprep.subr.mxu0 0.0
    %760 = vmatpush2.msra.mxu0 0.0
    %761 = vmatprep.subr.mxu0 0.0
    %762 = vmatpush2.msra.mxu0 0.0
    %763 = vmatprep.subr.mxu0 0.0
    %764 = vmatpush2.msra.mxu0 0.0
    %765 = vmatprep.subr.mxu0 0.0
    %766 = vmatpush2.msra.mxu0 0.0
    %767 = vmatprep.subr.mxu0 0.0
    %768 = vmatpush2.msra.mxu0 0.0
    %769 = vmatprep.subr.mxu0 0.0
    %770 = vmatpush2.msra.mxu0 0.0
    %771 = vmatprep.subr.mxu0 0.0
    %772 = vmatpush2.msra.mxu0 0.0
    %773 = vmatprep.subr.mxu0 0.0
    %774 = vmatpush2.msra.mxu0 0.0
    %775 = vmatprep.subr.mxu0 0.0
    %776 = vmatpush2.msra.mxu0 0.0
    %777 = vmatprep.subr.mxu0 0.0
    %778 = vmatpush2.msra.mxu0 0.0
    %779 = vmatprep.subr.mxu0 0.0
    %780 = vmatpush2.msra.mxu0 0.0
    %781 = vmatprep.mubr.f32.mxu0 0.0
    %782 = vmatmul.mubr.f32.gmra.mxu0 %v456
    %v783 = vpop.f32.mrf.mxu0
    %v784 = vadd.f32 %v707, %v783
    %v785 = vpop.f32.mrf.mxu0
    %v786 = vadd.f32 %v709, %v785
    %787 = vmatprep.mubr.f32.mxu0 0.0
    %788 = vmatmul.mubr.f32.gmra.mxu0 %v459
    %v789 = vpop.f32.mrf.mxu0
    %v790 = vadd.f32 %v713, %v789
    %v791 = vpop.f32.mrf.mxu0
    %v792 = vadd.f32 %v715, %v791
    %793 = vdwg.mxu0
    %794 = vmatprep.subr.mxu0 %v233
    %795 = vmatpush1.msra.mxu0 %v232
    %796 = vmatprep.subr.mxu0 %v225
    %797 = vmatpush1.msra.mxu0 %v224
    %798 = vmatprep.subr.mxu0 %v217
    %799 = vmatpush1.msra.mxu0 %v216
    %800 = vmatprep.subr.mxu0 %v209
    %801 = vmatpush1.msra.mxu0 %v208
    %802 = vmatprep.subr.mxu0 %v201
    %803 = vmatpush1.msra.mxu0 %v200
    %804 = vmatprep.subr.mxu0 %v193
    %805 = vmatpush1.msra.mxu0 %v192
    %806 = vmatprep.subr.mxu0 %v185
    %807 = vmatpush1.msra.mxu0 %v184
    %808 = vmatprep.subr.mxu0 %v177
    %809 = vmatpush1.msra.mxu0 %v176
    %810 = vmatprep.subr.mxu0 %v169
    %811 = vmatpush1.msra.mxu0 %v168
    %812 = vmatprep.subr.mxu0 %v161
    %813 = vmatpush1.msra.mxu0 %v160
    %814 = vmatprep.subr.mxu0 %v153
    %815 = vmatpush1.msra.mxu0 %v152
    %816 = vmatprep.subr.mxu0 %v145
    %817 = vmatpush1.msra.mxu0 %v144
    %818 = vmatprep.subr.mxu0 %v137
    %819 = vmatpush1.msra.mxu0 %v136
    %820 = vmatprep.subr.mxu0 %v129
    %821 = vmatpush1.msra.mxu0 %v128
    %822 = vmatprep.subr.mxu0 %v121
    %823 = vmatpush1.msra.mxu0 %v120
    %824 = vmatprep.subr.mxu0 %v113
    %825 = vmatpush1.msra.mxu0 %v112
    %826 = vmatprep.subr.mxu0 %v361
    %827 = vmatpush2.msra.mxu0 %v360
    %828 = vmatprep.subr.mxu0 %v353
    %829 = vmatpush2.msra.mxu0 %v352
    %830 = vmatprep.subr.mxu0 %v345
    %831 = vmatpush2.msra.mxu0 %v344
    %832 = vmatprep.subr.mxu0 %v337
    %833 = vmatpush2.msra.mxu0 %v336
    %834 = vmatprep.subr.mxu0 %v329
    %835 = vmatpush2.msra.mxu0 %v328
    %836 = vmatprep.subr.mxu0 %v321
    %837 = vmatpush2.msra.mxu0 %v320
    %838 = vmatprep.subr.mxu0 %v313
    %839 = vmatpush2.msra.mxu0 %v312
    %840 = vmatprep.subr.mxu0 %v305
    %841 = vmatpush2.msra.mxu0 %v304
    %842 = vmatprep.subr.mxu0 %v297
    %843 = vmatpush2.msra.mxu0 %v296
    %844 = vmatprep.subr.mxu0 %v289
    %845 = vmatpush2.msra.mxu0 %v288
    %846 = vmatprep.subr.mxu0 %v281
    %847 = vmatpush2.msra.mxu0 %v280
    %848 = vmatprep.subr.mxu0 %v273
    %849 = vmatpush2.msra.mxu0 %v272
    %850 = vmatprep.subr.mxu0 %v265
    %851 = vmatpush2.msra.mxu0 %v264
    %852 = vmatprep.subr.mxu0 %v257
    %853 = vmatpush2.msra.mxu0 %v256
    %854 = vmatprep.subr.mxu0 %v249
    %855 = vmatpush2.msra.mxu0 %v248
    %856 = vmatprep.subr.mxu0 %v241
    %857 = vmatpush2.msra.mxu0 %v240
    %858 = vmatprep.mubr.f32.mxu0 %v103
    %859 = vmatmul.mubr.f32.gmra.mxu0 %v102
    %v860 = vpop.f32.mrf.mxu0
    %v861 = vadd.f32 %v433, %v860
    %v862 = vpop.f32.mrf.mxu0
    %v863 = vadd.f32 %v437, %v862
    %864 = vmatprep.mubr.f32.mxu0 %v106
    %865 = vmatmul.mubr.f32.gmra.mxu0 %v105
    %v866 = vpop.f32.mrf.mxu0
    %v867 = vadd.f32 %v433, %v866
    %v868 = vpop.f32.mrf.mxu0
    %v869 = vadd.f32 %v437, %v868
    %870 = vdwg.mxu0
    %871 = vmatprep.subr.mxu0 0.0
    %872 = vmatpush1.msra.mxu0 0.0
    %873 = vmatprep.subr.mxu0 0.0
    %874 = vmatpush1.msra.mxu0 0.0
    %875 = vmatprep.subr.mxu0 0.0
    %876 = vmatpush1.msra.mxu0 0.0
    %877 = vmatprep.subr.mxu0 0.0
    %878 = vmatpush1.msra.mxu0 0.0
    %879 = vmatprep.subr.mxu0 0.0
    %880 = vmatpush1.msra.mxu0 0.0
    %881 = vmatprep.subr.mxu0 0.0
    %882 = vmatpush1.msra.mxu0 0.0
    %883 = vmatprep.subr.mxu0 0.0
    %884 = vmatpush1.msra.mxu0 0.0
    %885 = vmatprep.subr.mxu0 0.0
    %886 = vmatpush1.msra.mxu0 0.0
    %887 = vmatprep.subr.mxu0 0.0
    %888 = vmatpush1.msra.mxu0 0.0
    %889 = vmatprep.subr.mxu0 0.0
    %890 = vmatpush1.msra.mxu0 0.0
    %891 = vmatprep.subr.mxu0 %v478
    %892 = vmatpush1.msra.mxu0 %v475
    %893 = vmatprep.subr.mxu0 %v401
    %894 = vmatpush1.msra.mxu0 %v400
    %895 = vmatprep.subr.mxu0 %v393
    %896 = vmatpush1.msra.mxu0 %v392
    %897 = vmatprep.subr.mxu0 %v385
    %898 = vmatpush1.msra.mxu0 %v384
    %899 = vmatprep.subr.mxu0 %v377
    %900 = vmatpush1.msra.mxu0 %v376
    %901 = vmatprep.subr.mxu0 %v369
    %902 = vmatpush1.msra.mxu0 %v368
    %903 = vmatprep.subr.mxu0 0.0
    %904 = vmatpush2.msra.mxu0 0.0
    %905 = vmatprep.subr.mxu0 0.0
    %906 = vmatpush2.msra.mxu0 0.0
    %907 = vmatprep.subr.mxu0 0.0
    %908 = vmatpush2.msra.mxu0 0.0
    %909 = vmatprep.subr.mxu0 0.0
    %910 = vmatpush2.msra.mxu0 0.0
    %911 = vmatprep.subr.mxu0 0.0
    %912 = vmatpush2.msra.mxu0 0.0
    %913 = vmatprep.subr.mxu0 0.0
    %914 = vmatpush2.msra.mxu0 0.0
    %915 = vmatprep.subr.mxu0 0.0
    %916 = vmatpush2.msra.mxu0 0.0
    %917 = vmatprep.subr.mxu0 0.0
    %918 = vmatpush2.msra.mxu0 0.0
    %919 = vmatprep.subr.mxu0 0.0
    %920 = vmatpush2.msra.mxu0 0.0
    %921 = vmatprep.subr.mxu0 0.0
    %922 = vmatpush2.msra.mxu0 0.0
    %923 = vmatprep.subr.mxu0 0.0
    %924 = vmatpush2.msra.mxu0 0.0
    %925 = vmatprep.subr.mxu0 0.0
    %926 = vmatpush2.msra.mxu0 0.0
    %927 = vmatprep.subr.mxu0 0.0
    %928 = vmatpush2.msra.mxu0 0.0
    %929 = vmatprep.subr.mxu0 0.0
    %930 = vmatpush2.msra.mxu0 0.0
    %931 = vmatprep.subr.mxu0 0.0
    %932 = vmatpush2.msra.mxu0 0.0
    %933 = vmatprep.subr.mxu0 0.0
    %934 = vmatpush2.msra.mxu0 0.0
    %935 = vmatprep.mubr.f32.mxu0 0.0
    %936 = vmatmul.mubr.f32.gmra.mxu0 %v456
    %v937 = vpop.f32.mrf.mxu0
    %v938 = vadd.f32 %v861, %v937
    %v939 = vpop.f32.mrf.mxu0
    %v940 = vadd.f32 %v863, %v939
    %941 = vmatprep.mubr.f32.mxu0 0.0
    %942 = vmatmul.mubr.f32.gmra.mxu0 %v459
    %v943 = vpop.f32.mrf.mxu0
    %v944 = vadd.f32 %v867, %v943
    %v945 = vpop.f32.mrf.mxu0
    %v946 = vadd.f32 %v869, %v945
    %947 = vdwg.mxu0
    %948 = vmatprep.subr.mxu0 %v235
    %949 = vmatpush1.msra.mxu0 %v234
    %950 = vmatprep.subr.mxu0 %v227
    %951 = vmatpush1.msra.mxu0 %v226
    %952 = vmatprep.subr.mxu0 %v219
    %953 = vmatpush1.msra.mxu0 %v218
    %954 = vmatprep.subr.mxu0 %v211
    %955 = vmatpush1.msra.mxu0 %v210
    %956 = vmatprep.subr.mxu0 %v203
    %957 = vmatpush1.msra.mxu0 %v202
    %958 = vmatprep.subr.mxu0 %v195
    %959 = vmatpush1.msra.mxu0 %v194
    %960 = vmatprep.subr.mxu0 %v187
    %961 = vmatpush1.msra.mxu0 %v186
    %962 = vmatprep.subr.mxu0 %v179
    %963 = vmatpush1.msra.mxu0 %v178
    %964 = vmatprep.subr.mxu0 %v171
    %965 = vmatpush1.msra.mxu0 %v170
    %966 = vmatprep.subr.mxu0 %v163
    %967 = vmatpush1.msra.mxu0 %v162
    %968 = vmatprep.subr.mxu0 %v155
    %969 = vmatpush1.msra.mxu0 %v154
    %970 = vmatprep.subr.mxu0 %v147
    %971 = vmatpush1.msra.mxu0 %v146
    %972 = vmatprep.subr.mxu0 %v139
    %973 = vmatpush1.msra.mxu0 %v138
    %974 = vmatprep.subr.mxu0 %v131
    %975 = vmatpush1.msra.mxu0 %v130
    %976 = vmatprep.subr.mxu0 %v123
    %977 = vmatpush1.msra.mxu0 %v122
    %978 = vmatprep.subr.mxu0 %v115
    %979 = vmatpush1.msra.mxu0 %v114
    %980 = vmatprep.subr.mxu0 %v363
    %981 = vmatpush2.msra.mxu0 %v362
    %982 = vmatprep.subr.mxu0 %v355
    %983 = vmatpush2.msra.mxu0 %v354
    %984 = vmatprep.subr.mxu0 %v347
    %985 = vmatpush2.msra.mxu0 %v346
    %986 = vmatprep.subr.mxu0 %v339
    %987 = vmatpush2.msra.mxu0 %v338
    %988 = vmatprep.subr.mxu0 %v331
    %989 = vmatpush2.msra.mxu0 %v330
    %990 = vmatprep.subr.mxu0 %v323
    %991 = vmatpush2.msra.mxu0 %v322
    %992 = vmatprep.subr.mxu0 %v315
    %993 = vmatpush2.msra.mxu0 %v314
    %994 = vmatprep.subr.mxu0 %v307
    %995 = vmatpush2.msra.mxu0 %v306
    %996 = vmatprep.subr.mxu0 %v299
    %997 = vmatpush2.msra.mxu0 %v298
    %998 = vmatprep.subr.mxu0 %v291
    %999 = vmatpush2.msra.mxu0 %v290
    %1000 = vmatprep.subr.mxu0 %v283
    %1001 = vmatpush2.msra.mxu0 %v282
    %1002 = vmatprep.subr.mxu0 %v275
    %1003 = vmatpush2.msra.mxu0 %v274
    %1004 = vmatprep.subr.mxu0 %v267
    %1005 = vmatpush2.msra.mxu0 %v266
    %1006 = vmatprep.subr.mxu0 %v259
    %1007 = vmatpush2.msra.mxu0 %v258
    %1008 = vmatprep.subr.mxu0 %v251
    %1009 = vmatpush2.msra.mxu0 %v250
    %1010 = vmatprep.subr.mxu0 %v243
    %1011 = vmatpush2.msra.mxu0 %v242
    %1012 = vmatprep.mubr.f32.mxu0 %v103
    %1013 = vmatmul.mubr.f32.gmra.mxu0 %v102
    %v1014 = vpop.f32.mrf.mxu0
    %v1015 = vadd.f32 %v441, %v1014
    %v1016 = vpop.f32.mrf.mxu0
    %v1017 = vadd.f32 %v445, %v1016
    %1018 = vmatprep.mubr.f32.mxu0 %v106
    %1019 = vmatmul.mubr.f32.gmra.mxu0 %v105
    %v1020 = vpop.f32.mrf.mxu0
    %v1021 = vadd.f32 %v441, %v1020
    %v1022 = vpop.f32.mrf.mxu0
    %v1023 = vadd.f32 %v445, %v1022
    %1024 = vdwg.mxu0
    %1025 = vmatprep.subr.mxu0 0.0
    %1026 = vmatpush1.msra.mxu0 0.0
    %1027 = vmatprep.subr.mxu0 0.0
    %1028 = vmatpush1.msra.mxu0 0.0
    %1029 = vmatprep.subr.mxu0 0.0
    %1030 = vmatpush1.msra.mxu0 0.0
    %1031 = vmatprep.subr.mxu0 0.0
    %1032 = vmatpush1.msra.mxu0 0.0
    %1033 = vmatprep.subr.mxu0 0.0
    %1034 = vmatpush1.msra.mxu0 0.0
    %1035 = vmatprep.subr.mxu0 0.0
    %1036 = vmatpush1.msra.mxu0 0.0
    %1037 = vmatprep.subr.mxu0 0.0
    %1038 = vmatpush1.msra.mxu0 0.0
    %1039 = vmatprep.subr.mxu0 0.0
    %1040 = vmatpush1.msra.mxu0 0.0
    %1041 = vmatprep.subr.mxu0 0.0
    %1042 = vmatpush1.msra.mxu0 0.0
    %1043 = vmatprep.subr.mxu0 0.0
    %1044 = vmatpush1.msra.mxu0 0.0
    %1045 = vmatprep.subr.mxu0 %v484
    %1046 = vmatpush1.msra.mxu0 %v481
    %1047 = vmatprep.subr.mxu0 %v403
    %1048 = vmatpush1.msra.mxu0 %v402
    %1049 = vmatprep.subr.mxu0 %v395
    %1050 = vmatpush1.msra.mxu0 %v394
    %1051 = vmatprep.subr.mxu0 %v387
    %1052 = vmatpush1.msra.mxu0 %v386
    %1053 = vmatprep.subr.mxu0 %v379
    %1054 = vmatpush1.msra.mxu0 %v378
    %1055 = vmatprep.subr.mxu0 %v371
    %1056 = vmatpush1.msra.mxu0 %v370
    %1057 = vmatprep.subr.mxu0 0.0
    %1058 = vmatpush2.msra.mxu0 0.0
    %1059 = vmatprep.subr.mxu0 0.0
    %1060 = vmatpush2.msra.mxu0 0.0
    %1061 = vmatprep.subr.mxu0 0.0
    %1062 = vmatpush2.msra.mxu0 0.0
    %1063 = vmatprep.subr.mxu0 0.0
    %1064 = vmatpush2.msra.mxu0 0.0
    %1065 = vmatprep.subr.mxu0 0.0
    %1066 = vmatpush2.msra.mxu0 0.0
    %1067 = vmatprep.subr.mxu0 0.0
    %1068 = vmatpush2.msra.mxu0 0.0
    %1069 = vmatprep.subr.mxu0 0.0
    %1070 = vmatpush2.msra.mxu0 0.0
    %1071 = vmatprep.subr.mxu0 0.0
    %1072 = vmatpush2.msra.mxu0 0.0
    %1073 = vmatprep.subr.mxu0 0.0
    %1074 = vmatpush2.msra.mxu0 0.0
    %1075 = vmatprep.subr.mxu0 0.0
    %1076 = vmatpush2.msra.mxu0 0.0
    %1077 = vmatprep.subr.mxu0 0.0
    %1078 = vmatpush2.msra.mxu0 0.0
    %1079 = vmatprep.subr.mxu0 0.0
    %1080 = vmatpush2.msra.mxu0 0.0
    %1081 = vmatprep.subr.mxu0 0.0
    %1082 = vmatpush2.msra.mxu0 0.0
    %1083 = vmatprep.subr.mxu0 0.0
    %1084 = vmatpush2.msra.mxu0 0.0
    %1085 = vmatprep.subr.mxu0 0.0
    %1086 = vmatpush2.msra.mxu0 0.0
    %1087 = vmatprep.subr.mxu0 0.0
    %1088 = vmatpush2.msra.mxu0 0.0
    %1089 = vmatprep.mubr.f32.mxu0 0.0
    %1090 = vmatmul.mubr.f32.gmra.mxu0 %v456
    %v1091 = vpop.f32.mrf.mxu0
    %v1092 = vadd.f32 %v1015, %v1091
    %v1093 = vpop.f32.mrf.mxu0
    %v1094 = vadd.f32 %v1017, %v1093
    %1095 = vmatprep.mubr.f32.mxu0 0.0
    %1096 = vmatmul.mubr.f32.gmra.mxu0 %v459
    %v1097 = vpop.f32.mrf.mxu0
    %v1098 = vadd.f32 %v1021, %v1097
    %v1099 = vpop.f32.mrf.mxu0
    %v1100 = vadd.f32 %v1023, %v1099
    %1101 = vdwg.mxu0
    %v1102 = vld [vmem:[#allocation9] sm:$0xff]
    %v1103 = vld [vmem:[#allocation9 + $0x8] sm:$0xff]
    %v1104 = vld [vmem:[#allocation9 + $0x10] sm:$0xff]
    %v1105 = vld [vmem:[#allocation9 + $0x18] sm:$0xff]
    %v1106 = vld [vmem:[#allocation9 + $0x20] sm:$0xff]
    %v1107 = vld [vmem:[#allocation9 + $0x28] sm:$0xff]
    %v1108 = vld [vmem:[#allocation9 + $0x30] sm:$0xff]
    %v1109 = vld [vmem:[#allocation9 + $0x38] sm:$0xff]
    %v1110 = vld [vmem:[#allocation9 + $0x40] sm:$0xff]
    %v1111 = vld [vmem:[#allocation9 + $0x48] sm:$0xff]
    %v1112 = vld [vmem:[#allocation9 + $0x50] sm:$0xff]
    %v1113 = vld [vmem:[#allocation9 + $0x58] sm:$0xff]
    %v1114 = vld [vmem:[#allocation9 + $0x60] sm:$0xff]
    %v1115 = vld [vmem:[#allocation9 + $0x68] sm:$0xff]
    %v1116 = vld [vmem:[#allocation9 + $0x70] sm:$0xff]
    %v1117 = vld [vmem:[#allocation9 + $0x78] sm:$0xff]
    %v1118 = vld [vmem:[#allocation9 + $0x80] sm:$0xff]
    %v1119 = vld [vmem:[#allocation9 + $0x88] sm:$0xff]
    %v1120 = vld [vmem:[#allocation9 + $0x90] sm:$0xff]
    %v1121 = vld [vmem:[#allocation9 + $0x98] sm:$0xff]
    %v1122 = vld [vmem:[#allocation9 + $0xa0] sm:$0xff]
    %v1123 = vld [vmem:[#allocation9 + $0xa8] sm:$0xff]
    %v1124 = vld [vmem:[#allocation9 + $0xb0] sm:$0xff]
    %v1125 = vld [vmem:[#allocation9 + $0xb8] sm:$0xff]
    %v1126 = vld [vmem:[#allocation9 + $0xc0] sm:$0xff]
    %v1127 = vld [vmem:[#allocation9 + $0xc8] sm:$0xff]
    %v1128 = vld [vmem:[#allocation9 + $0xd0] sm:$0xff]
    %v1129 = vld [vmem:[#allocation9 + $0xd8] sm:$0xff]
    %v1130 = vld [vmem:[#allocation9 + $0xe0] sm:$0xff]
    %v1131 = vld [vmem:[#allocation9 + $0xe8] sm:$0xff]
    %v1132 = vld [vmem:[#allocation9 + $0xf0] sm:$0xff]
    %v1133 = vld [vmem:[#allocation9 + $0xf8] sm:$0xff]
    %v1134 = vld [vmem:[#allocation9 + $0x100] sm:$0xff]
    %v1135 = vld [vmem:[#allocation9 + $0x108] sm:$0xff]
    %v1136 = vld [vmem:[#allocation9 + $0x110] sm:$0xff]
    %v1137 = vld [vmem:[#allocation9 + $0x118] sm:$0xff]
    %v1138 = vld [vmem:[#allocation9 + $0x120] sm:$0xff]
    %v1139 = vld [vmem:[#allocation9 + $0x128] sm:$0xff]
    %v1140 = vld [vmem:[#allocation9 + $0x130] sm:$0xff]
    %v1141 = vld [vmem:[#allocation9 + $0x138] sm:$0xff]
    %v1142 = vld [vmem:[#allocation9 + $0x140] sm:$0xff]
    %v1143 = vld [vmem:[#allocation9 + $0x148] sm:$0xff]
    %v1144 = vld [vmem:[#allocation9 + $0x150] sm:$0xff]
    %v1145 = vld [vmem:[#allocation9 + $0x158] sm:$0xff]
    %v1146 = vld [vmem:[#allocation9 + $0x160] sm:$0xff]
    %v1147 = vld [vmem:[#allocation9 + $0x168] sm:$0xff]
    %v1148 = vld [vmem:[#allocation9 + $0x170] sm:$0xff]
    %v1149 = vld [vmem:[#allocation9 + $0x178] sm:$0xff]
    %v1150 = vld [vmem:[#allocation9 + $0x180] sm:$0xff]
    %v1151 = vld [vmem:[#allocation9 + $0x188] sm:$0xff]
    %v1152 = vld [vmem:[#allocation9 + $0x190] sm:$0xff]
    %v1153 = vld [vmem:[#allocation9 + $0x198] sm:$0xff]
    %v1154 = vld [vmem:[#allocation9 + $0x1a0] sm:$0xff]
    %v1155 = vld [vmem:[#allocation9 + $0x1a8] sm:$0xff]
    %v1156 = vld [vmem:[#allocation9 + $0x1b0] sm:$0xff]
    %v1157 = vld [vmem:[#allocation9 + $0x1b8] sm:$0xff]
    %v1158 = vld [vmem:[#allocation9 + $0x1c0] sm:$0xff]
    %v1159 = vld [vmem:[#allocation9 + $0x1c8] sm:$0xff]
    %v1160 = vld [vmem:[#allocation9 + $0x1d0] sm:$0xff]
    %v1161 = vld [vmem:[#allocation9 + $0x1d8] sm:$0xff]
    %v1162 = vld [vmem:[#allocation9 + $0x1e0] sm:$0xff]
    %v1163 = vld [vmem:[#allocation9 + $0x1e8] sm:$0xff]
    %v1164 = vld [vmem:[#allocation9 + $0x1f0] sm:$0xff]
    %v1165 = vld [vmem:[#allocation9 + $0x1f8] sm:$0xff]
    %v1166 = vld [vmem:[#allocation9 + $0x200] sm:$0xff]
    %v1167 = vld [vmem:[#allocation9 + $0x208] sm:$0xff]
    %v1168 = vld [vmem:[#allocation9 + $0x210] sm:$0xff]
    %v1169 = vld [vmem:[#allocation9 + $0x218] sm:$0xff]
    %v1170 = vld [vmem:[#allocation9 + $0x220] sm:$0xff]
    %v1171 = vld [vmem:[#allocation9 + $0x228] sm:$0xff]
    %v1172 = vld [vmem:[#allocation9 + $0x230] sm:$0xff]
    %v1173 = vld [vmem:[#allocation9 + $0x238] sm:$0xff]
    %v1174 = vld [vmem:[#allocation9 + $0x240] sm:$0xff]
    %v1175 = vld [vmem:[#allocation9 + $0x248] sm:$0xff]
    %v1176 = vld [vmem:[#allocation9 + $0x250] sm:$0xff]
    %v1177 = vld [vmem:[#allocation9 + $0x258] sm:$0xff]
    %v1178 = vld [vmem:[#allocation9 + $0x260] sm:$0xff]
    %v1179 = vld [vmem:[#allocation9 + $0x268] sm:$0xff]
    %v1180 = vld [vmem:[#allocation9 + $0x270] sm:$0xff]
    %v1181 = vld [vmem:[#allocation9 + $0x278] sm:$0xff]
    %v1182 = vld [vmem:[#allocation9 + $0x280] sm:$0xff]
    %v1183 = vld [vmem:[#allocation9 + $0x288] sm:$0xff]
    %v1184 = vld [vmem:[#allocation9 + $0x290] sm:$0xff]
    %v1185 = vld [vmem:[#allocation9 + $0x298] sm:$0xff]
    %v1186 = vld [vmem:[#allocation9 + $0x2a0] sm:$0xff]
    %v1187 = vld [vmem:[#allocation9 + $0x2a8] sm:$0xff]
    %v1188 = vld [vmem:[#allocation9 + $0x2b0] sm:$0xff]
    %v1189 = vld [vmem:[#allocation9 + $0x2b8] sm:$0xff]
    %v1190 = vld [vmem:[#allocation9 + $0x2c0] sm:$0xff]
    %v1191 = vld [vmem:[#allocation9 + $0x2c8] sm:$0xff]
    %v1192 = vld [vmem:[#allocation9 + $0x2d0] sm:$0xff]
    %v1193 = vld [vmem:[#allocation9 + $0x2d8] sm:$0xff]
    %v1194 = vld [vmem:[#allocation9 + $0x2e0] sm:$0xff]
    %v1195 = vld [vmem:[#allocation9 + $0x2e8] sm:$0xff]
    %v1196 = vld [vmem:[#allocation9 + $0x2f0] sm:$0xff]
    %v1197 = vld [vmem:[#allocation9 + $0x2f8] sm:$0xff]
    %v1198 = vld [vmem:[#allocation9 + $0x300] sm:$0xff]
    %v1199 = vld [vmem:[#allocation9 + $0x308] sm:$0xff]
    %v1200 = vld [vmem:[#allocation9 + $0x310] sm:$0xff]
    %v1201 = vld [vmem:[#allocation9 + $0x318] sm:$0xff]
    %v1202 = vld [vmem:[#allocation9 + $0x320] sm:$0xff]
    %v1203 = vld [vmem:[#allocation9 + $0x328] sm:$0xff]
    %v1204 = vld [vmem:[#allocation9 + $0x330] sm:$0xff]
    %v1205 = vld [vmem:[#allocation9 + $0x338] sm:$0xff]
    %v1206 = vld [vmem:[#allocation9 + $0x340] sm:$0xff]
    %v1207 = vld [vmem:[#allocation9 + $0x348] sm:$0xff]
    %v1208 = vld [vmem:[#allocation9 + $0x350] sm:$0xff]
    %v1209 = vld [vmem:[#allocation9 + $0x358] sm:$0xff]
    %v1210 = vld [vmem:[#allocation9 + $0x360] sm:$0xff]
    %v1211 = vld [vmem:[#allocation9 + $0x368] sm:$0xff]
    %v1212 = vld [vmem:[#allocation9 + $0x370] sm:$0xff]
    %v1213 = vld [vmem:[#allocation9 + $0x378] sm:$0xff]
    %v1214 = vld [vmem:[#allocation9 + $0x380] sm:$0xff]
    %v1215 = vld [vmem:[#allocation9 + $0x388] sm:$0xff]
    %v1216 = vld [vmem:[#allocation9 + $0x390] sm:$0xff]
    %v1217 = vld [vmem:[#allocation9 + $0x398] sm:$0xff]
    %v1218 = vld [vmem:[#allocation9 + $0x3a0] sm:$0xff]
    %v1219 = vld [vmem:[#allocation9 + $0x3a8] sm:$0xff]
    %v1220 = vld [vmem:[#allocation9 + $0x3b0] sm:$0xff]
    %v1221 = vld [vmem:[#allocation9 + $0x3b8] sm:$0xff]
    %v1222 = vld [vmem:[#allocation9 + $0x3c0] sm:$0xff]
    %v1223 = vld [vmem:[#allocation9 + $0x3c8] sm:$0xff]
    %v1224 = vld [vmem:[#allocation9 + $0x3d0] sm:$0xff]
    %v1225 = vld [vmem:[#allocation9 + $0x3d8] sm:$0xff]
    %v1226 = vld [vmem:[#allocation9 + $0x3e0] sm:$0xff]
    %v1227 = vld [vmem:[#allocation9 + $0x3e8] sm:$0xff]
    %v1228 = vld [vmem:[#allocation9 + $0x3f0] sm:$0xff]
    %v1229 = vld [vmem:[#allocation9 + $0x3f8] sm:$0xff]
    %v1230 = vld [vmem:[#allocation9 + $0x400] sm:$0xff]
    %v1231 = vld [vmem:[#allocation9 + $0x408] sm:$0xff]
    %v1232 = vld [vmem:[#allocation9 + $0x410] sm:$0xff]
    %v1233 = vld [vmem:[#allocation9 + $0x418] sm:$0xff]
    %v1234 = vld [vmem:[#allocation9 + $0x420] sm:$0xff]
    %v1235 = vld [vmem:[#allocation9 + $0x428] sm:$0xff]
    %v1236 = vld [vmem:[#allocation9 + $0x430] sm:$0xff]
    %v1237 = vld [vmem:[#allocation9 + $0x438] sm:$0xff]
    %v1238 = vld [vmem:[#allocation9 + $0x440] sm:$0xff]
    %v1239 = vld [vmem:[#allocation9 + $0x448] sm:$0xff]
    %v1240 = vld [vmem:[#allocation9 + $0x450] sm:$0xff]
    %v1241 = vld [vmem:[#allocation9 + $0x458] sm:$0xff]
    %v1242 = vld [vmem:[#allocation9 + $0x460] sm:$0xff]
    %v1243 = vld [vmem:[#allocation9 + $0x468] sm:$0xff]
    %v1244 = vld [vmem:[#allocation9 + $0x470] sm:$0xff]
    %v1245 = vld [vmem:[#allocation9 + $0x478] sm:$0xff]
    %v1246 = vld [vmem:[#allocation9 + $0x480] sm:$0xff]
    %v1247 = vld [vmem:[#allocation9 + $0x488] sm:$0xff]
    %v1248 = vld [vmem:[#allocation9 + $0x490] sm:$0xff]
    %v1249 = vld [vmem:[#allocation9 + $0x498] sm:$0xff]
    %v1250 = vld [vmem:[#allocation9 + $0x4a0] sm:$0xff]
    %v1251 = vld [vmem:[#allocation9 + $0x4a8] sm:$0xff]
    %v1252 = vld [vmem:[#allocation9 + $0x4b0] sm:$0xff]
    %v1253 = vld [vmem:[#allocation9 + $0x4b8] sm:$0xff]
    %v1254 = vld [vmem:[#allocation9 + $0x4c0] sm:$0xff]
    %v1255 = vld [vmem:[#allocation9 + $0x4c8] sm:$0xff]
    %v1256 = vld [vmem:[#allocation9 + $0x4d0] sm:$0xff]
    %v1257 = vld [vmem:[#allocation9 + $0x4d8] sm:$0xff]
    %v1258 = vld [vmem:[#allocation9 + $0x4e0] sm:$0xff]
    %v1259 = vld [vmem:[#allocation9 + $0x4e8] sm:$0xff]
    %v1260 = vld [vmem:[#allocation9 + $0x4f0] sm:$0xff]
    %v1261 = vld [vmem:[#allocation9 + $0x4f8] sm:$0xff]
    %v1262 = vld [vmem:[#allocation9 + $0x500] sm:$0xff]
    %v1263 = vld [vmem:[#allocation9 + $0x508] sm:$0xff]
    %v1264 = vld [vmem:[#allocation9 + $0x510] sm:$0xff]
    %v1265 = vld [vmem:[#allocation9 + $0x518] sm:$0xff]
    %v1266 = vld [vmem:[#allocation9 + $0x520] sm:$0xff]
    %v1267 = vld [vmem:[#allocation9 + $0x528] sm:$0xff]
    %v1268 = vld [vmem:[#allocation9 + $0x530] sm:$0xff]
    %v1269 = vld [vmem:[#allocation9 + $0x538] sm:$0xff]
    %v1270 = vld [vmem:[#allocation9 + $0x540] sm:$0xff]
    %v1271 = vld [vmem:[#allocation9 + $0x548] sm:$0xff]
    %v1272 = vld [vmem:[#allocation9 + $0x550] sm:$0xff]
    %v1273 = vld [vmem:[#allocation9 + $0x558] sm:$0xff]
    %v1274 = vld [vmem:[#allocation9 + $0x560] sm:$0xff]
    %v1275 = vld [vmem:[#allocation9 + $0x568] sm:$0xff]
    %v1276 = vld [vmem:[#allocation9 + $0x570] sm:$0xff]
    %v1277 = vld [vmem:[#allocation9 + $0x578] sm:$0xff]
    %v1278 = vld [vmem:[#allocation9 + $0x580] sm:$0xff]
    %v1279 = vld [vmem:[#allocation9 + $0x588] sm:$0xff]
    %v1280 = vld [vmem:[#allocation9 + $0x590] sm:$0xff]
    %v1281 = vld [vmem:[#allocation9 + $0x598] sm:$0xff]
    %v1282 = vld [vmem:[#allocation9 + $0x5a0] sm:$0xff]
    %v1283 = vld [vmem:[#allocation9 + $0x5a8] sm:$0xff]
    %v1284 = vld [vmem:[#allocation9 + $0x5b0] sm:$0xff]
    %v1285 = vld [vmem:[#allocation9 + $0x5b8] sm:$0xff]
    %v1286 = vld [vmem:[#allocation9 + $0x5c0] sm:$0xff]
    %v1287 = vld [vmem:[#allocation9 + $0x5c8] sm:$0xff]
    %v1288 = vld [vmem:[#allocation9 + $0x5d0] sm:$0xff]
    %v1289 = vld [vmem:[#allocation9 + $0x5d8] sm:$0xff]
    %v1290 = vld [vmem:[#allocation9 + $0x5e0] sm:$0xff]
    %v1291 = vld [vmem:[#allocation9 + $0x5e8] sm:$0xff]
    %v1292 = vld [vmem:[#allocation9 + $0x5f0] sm:$0xff]
    %v1293 = vld [vmem:[#allocation9 + $0x5f8] sm:$0xff]
    %v1294 = vld [vmem:[#allocation9 + $0x600] sm:$0xff]
    %v1295 = vld [vmem:[#allocation9 + $0x608] sm:$0xff]
    %v1296 = vld [vmem:[#allocation9 + $0x610] sm:$0xff]
    %v1297 = vld [vmem:[#allocation9 + $0x618] sm:$0xff]
    %v1298 = vld [vmem:[#allocation9 + $0x620] sm:$0xff]
    %v1299 = vld [vmem:[#allocation9 + $0x628] sm:$0xff]
    %v1300 = vld [vmem:[#allocation9 + $0x630] sm:$0xff]
    %v1301 = vld [vmem:[#allocation9 + $0x638] sm:$0xff]
    %v1302 = vld [vmem:[#allocation9 + $0x640] sm:$0xff]
    %v1303 = vld [vmem:[#allocation9 + $0x648] sm:$0xff]
    %v1304 = vld [vmem:[#allocation9 + $0x650] sm:$0xff]
    %v1305 = vld [vmem:[#allocation9 + $0x658] sm:$0xff]
    %v1306 = vld [vmem:[#allocation9 + $0x660] sm:$0xff]
    %v1307 = vld [vmem:[#allocation9 + $0x668] sm:$0xff]
    %v1308 = vld [vmem:[#allocation9 + $0x670] sm:$0xff]
    %v1309 = vld [vmem:[#allocation9 + $0x678] sm:$0xff]
    %v1310 = vld [vmem:[#allocation9 + $0x680] sm:$0xff]
    %v1311 = vld [vmem:[#allocation9 + $0x688] sm:$0xff]
    %v1312 = vld [vmem:[#allocation9 + $0x690] sm:$0xff]
    %v1313 = vld [vmem:[#allocation9 + $0x698] sm:$0xff]
    %v1314 = vld [vmem:[#allocation9 + $0x6a0] sm:$0xff]
    %v1315 = vld [vmem:[#allocation9 + $0x6a8] sm:$0xff]
    %v1316 = vld [vmem:[#allocation9 + $0x6b0] sm:$0xff]
    %v1317 = vld [vmem:[#allocation9 + $0x6b8] sm:$0xff]
    %v1318 = vld [vmem:[#allocation9 + $0x6c0] sm:$0xff]
    %v1319 = vld [vmem:[#allocation9 + $0x6c8] sm:$0xff]
    %v1320 = vld [vmem:[#allocation9 + $0x6d0] sm:$0xff]
    %v1321 = vld [vmem:[#allocation9 + $0x6d8] sm:$0xff]
    %v1322 = vld [vmem:[#allocation9 + $0x6e0] sm:$0xff]
    %v1323 = vld [vmem:[#allocation9 + $0x6e8] sm:$0xff]
    %v1324 = vld [vmem:[#allocation9 + $0x6f0] sm:$0xff]
    %v1325 = vld [vmem:[#allocation9 + $0x6f8] sm:$0xff]
    %v1326 = vld [vmem:[#allocation9 + $0x700] sm:$0xff]
    %v1327 = vld [vmem:[#allocation9 + $0x708] sm:$0xff]
    %v1328 = vld [vmem:[#allocation9 + $0x710] sm:$0xff]
    %v1329 = vld [vmem:[#allocation9 + $0x718] sm:$0xff]
    %v1330 = vld [vmem:[#allocation9 + $0x720] sm:$0xff]
    %v1331 = vld [vmem:[#allocation9 + $0x728] sm:$0xff]
    %v1332 = vld [vmem:[#allocation9 + $0x730] sm:$0xff]
    %v1333 = vld [vmem:[#allocation9 + $0x738] sm:$0xff]
    %v1334 = vld [vmem:[#allocation9 + $0x740] sm:$0xff]
    %v1335 = vld [vmem:[#allocation9 + $0x748] sm:$0xff]
    %v1336 = vld [vmem:[#allocation9 + $0x750] sm:$0xff]
    %v1337 = vld [vmem:[#allocation9 + $0x758] sm:$0xff]
    %v1338 = vld [vmem:[#allocation9 + $0x760] sm:$0xff]
    %v1339 = vld [vmem:[#allocation9 + $0x768] sm:$0xff]
    %v1340 = vld [vmem:[#allocation9 + $0x770] sm:$0xff]
    %v1341 = vld [vmem:[#allocation9 + $0x778] sm:$0xff]
    %v1342 = vld [vmem:[#allocation9 + $0x780] sm:$0xff]
    %v1343 = vld [vmem:[#allocation9 + $0x788] sm:$0xff]
    %v1344 = vld [vmem:[#allocation9 + $0x790] sm:$0xff]
    %v1345 = vld [vmem:[#allocation9 + $0x798] sm:$0xff]
    %v1346 = vld [vmem:[#allocation9 + $0x7a0] sm:$0xff]
    %v1347 = vld [vmem:[#allocation9 + $0x7a8] sm:$0xff]
    %v1348 = vld [vmem:[#allocation9 + $0x7b0] sm:$0xff]
    %v1349 = vld [vmem:[#allocation9 + $0x7b8] sm:$0xff]
    %v1350 = vld [vmem:[#allocation9 + $0x7c0] sm:$0xff]
    %v1351 = vld [vmem:[#allocation9 + $0x7c8] sm:$0xff]
    %v1352 = vld [vmem:[#allocation9 + $0x7d0] sm:$0xff]
    %v1353 = vld [vmem:[#allocation9 + $0x7d8] sm:$0xff]
    %v1354 = vld [vmem:[#allocation9 + $0x7e0] sm:$0xff]
    %v1355 = vld [vmem:[#allocation9 + $0x7e8] sm:$0xff]
    %v1356 = vld [vmem:[#allocation9 + $0x7f0] sm:$0xff]
    %v1357 = vld [vmem:[#allocation9 + $0x7f8] sm:$0xff]
    %1358 = vmatprep.subr.mxu0 %v1223
    %1359 = vmatpush1.msra.mxu0 %v1222
    %1360 = vmatprep.subr.mxu0 %v1215
    %1361 = vmatpush1.msra.mxu0 %v1214
    %1362 = vmatprep.subr.mxu0 %v1207
    %1363 = vmatpush1.msra.mxu0 %v1206
    %1364 = vmatprep.subr.mxu0 %v1199
    %1365 = vmatpush1.msra.mxu0 %v1198
    %1366 = vmatprep.subr.mxu0 %v1191
    %1367 = vmatpush1.msra.mxu0 %v1190
    %1368 = vmatprep.subr.mxu0 %v1183
    %1369 = vmatpush1.msra.mxu0 %v1182
    %1370 = vmatprep.subr.mxu0 %v1175
    %1371 = vmatpush1.msra.mxu0 %v1174
    %1372 = vmatprep.subr.mxu0 %v1167
    %1373 = vmatpush1.msra.mxu0 %v1166
    %1374 = vmatprep.subr.mxu0 %v1159
    %1375 = vmatpush1.msra.mxu0 %v1158
    %1376 = vmatprep.subr.mxu0 %v1151
    %1377 = vmatpush1.msra.mxu0 %v1150
    %1378 = vmatprep.subr.mxu0 %v1143
    %1379 = vmatpush1.msra.mxu0 %v1142
    %1380 = vmatprep.subr.mxu0 %v1135
    %1381 = vmatpush1.msra.mxu0 %v1134
    %1382 = vmatprep.subr.mxu0 %v1127
    %1383 = vmatpush1.msra.mxu0 %v1126
    %1384 = vmatprep.subr.mxu0 %v1119
    %1385 = vmatpush1.msra.mxu0 %v1118
    %1386 = vmatprep.subr.mxu0 %v1111
    %1387 = vmatpush1.msra.mxu0 %v1110
    %1388 = vmatprep.subr.mxu0 %v1103
    %1389 = vmatpush1.msra.mxu0 %v1102
    %1390 = vmatprep.subr.mxu0 %v1351
    %1391 = vmatpush2.msra.mxu0 %v1350
    %1392 = vmatprep.subr.mxu0 %v1343
    %1393 = vmatpush2.msra.mxu0 %v1342
    %1394 = vmatprep.subr.mxu0 %v1335
    %1395 = vmatpush2.msra.mxu0 %v1334
    %1396 = vmatprep.subr.mxu0 %v1327
    %1397 = vmatpush2.msra.mxu0 %v1326
    %1398 = vmatprep.subr.mxu0 %v1319
    %1399 = vmatpush2.msra.mxu0 %v1318
    %1400 = vmatprep.subr.mxu0 %v1311
    %1401 = vmatpush2.msra.mxu0 %v1310
    %1402 = vmatprep.subr.mxu0 %v1303
    %1403 = vmatpush2.msra.mxu0 %v1302
    %1404 = vmatprep.subr.mxu0 %v1295
    %1405 = vmatpush2.msra.mxu0 %v1294
    %1406 = vmatprep.subr.mxu0 %v1287
    %1407 = vmatpush2.msra.mxu0 %v1286
    %1408 = vmatprep.subr.mxu0 %v1279
    %1409 = vmatpush2.msra.mxu0 %v1278
    %1410 = vmatprep.subr.mxu0 %v1271
    %1411 = vmatpush2.msra.mxu0 %v1270
    %1412 = vmatprep.subr.mxu0 %v1263
    %1413 = vmatpush2.msra.mxu0 %v1262
    %1414 = vmatprep.subr.mxu0 %v1255
    %1415 = vmatpush2.msra.mxu0 %v1254
    %1416 = vmatprep.subr.mxu0 %v1247
    %1417 = vmatpush2.msra.mxu0 %v1246
    %1418 = vmatprep.subr.mxu0 %v1239
    %1419 = vmatpush2.msra.mxu0 %v1238
    %1420 = vmatprep.subr.mxu0 %v1231
    %1421 = vmatpush2.msra.mxu0 %v1230
    %1422 = vmatprep.mubr.f32.mxu0 0.0
    %1423 = vmatmul.mubr.f32.gmra.mxu0 0.0
    %v1424 = vpop.f32.mrf.mxu0
    %v1425 = vadd.f32 0.0, %v1424
    %v1426 = vpop.f32.mrf.mxu0
    %v1427 = vadd.f32 0.0, %v1426
    %1428 = vdwg.mxu0
    %1429 = vmatprep.subr.mxu0 %v1225
    %1430 = vmatpush1.msra.mxu0 %v1224
    %1431 = vmatprep.subr.mxu0 %v1217
    %1432 = vmatpush1.msra.mxu0 %v1216
    %1433 = vmatprep.subr.mxu0 %v1209
    %1434 = vmatpush1.msra.mxu0 %v1208
    %1435 = vmatprep.subr.mxu0 %v1201
    %1436 = vmatpush1.msra.mxu0 %v1200
    %1437 = vmatprep.subr.mxu0 %v1193
    %1438 = vmatpush1.msra.mxu0 %v1192
    %1439 = vmatprep.subr.mxu0 %v1185
    %1440 = vmatpush1.msra.mxu0 %v1184
    %1441 = vmatprep.subr.mxu0 %v1177
    %1442 = vmatpush1.msra.mxu0 %v1176
    %1443 = vmatprep.subr.mxu0 %v1169
    %1444 = vmatpush1.msra.mxu0 %v1168
    %1445 = vmatprep.subr.mxu0 %v1161
    %1446 = vmatpush1.msra.mxu0 %v1160
    %1447 = vmatprep.subr.mxu0 %v1153
    %1448 = vmatpush1.msra.mxu0 %v1152
    %1449 = vmatprep.subr.mxu0 %v1145
    %1450 = vmatpush1.msra.mxu0 %v1144
    %1451 = vmatprep.subr.mxu0 %v1137
    %1452 = vmatpush1.msra.mxu0 %v1136
    %1453 = vmatprep.subr.mxu0 %v1129
    %1454 = vmatpush1.msra.mxu0 %v1128
    %1455 = vmatprep.subr.mxu0 %v1121
    %1456 = vmatpush1.msra.mxu0 %v1120
    %1457 = vmatprep.subr.mxu0 %v1113
    %1458 = vmatpush1.msra.mxu0 %v1112
    %1459 = vmatprep.subr.mxu0 %v1105
    %1460 = vmatpush1.msra.mxu0 %v1104
    %1461 = vmatprep.subr.mxu0 %v1353
    %1462 = vmatpush2.msra.mxu0 %v1352
    %1463 = vmatprep.subr.mxu0 %v1345
    %1464 = vmatpush2.msra.mxu0 %v1344
    %1465 = vmatprep.subr.mxu0 %v1337
    %1466 = vmatpush2.msra.mxu0 %v1336
    %1467 = vmatprep.subr.mxu0 %v1329
    %1468 = vmatpush2.msra.mxu0 %v1328
    %1469 = vmatprep.subr.mxu0 %v1321
    %1470 = vmatpush2.msra.mxu0 %v1320
    %1471 = vmatprep.subr.mxu0 %v1313
    %1472 = vmatpush2.msra.mxu0 %v1312
    %1473 = vmatprep.subr.mxu0 %v1305
    %1474 = vmatpush2.msra.mxu0 %v1304
    %1475 = vmatprep.subr.mxu0 %v1297
    %1476 = vmatpush2.msra.mxu0 %v1296
    %1477 = vmatprep.subr.mxu0 %v1289
    %1478 = vmatpush2.msra.mxu0 %v1288
    %1479 = vmatprep.subr.mxu0 %v1281
    %1480 = vmatpush2.msra.mxu0 %v1280
    %1481 = vmatprep.subr.mxu0 %v1273
    %1482 = vmatpush2.msra.mxu0 %v1272
    %1483 = vmatprep.subr.mxu0 %v1265
    %1484 = vmatpush2.msra.mxu0 %v1264
    %1485 = vmatprep.subr.mxu0 %v1257
    %1486 = vmatpush2.msra.mxu0 %v1256
    %1487 = vmatprep.subr.mxu0 %v1249
    %1488 = vmatpush2.msra.mxu0 %v1248
    %1489 = vmatprep.subr.mxu0 %v1241
    %1490 = vmatpush2.msra.mxu0 %v1240
    %1491 = vmatprep.subr.mxu0 %v1233
    %1492 = vmatpush2.msra.mxu0 %v1232
    %1493 = vmatprep.mubr.f32.mxu0 0.0
    %1494 = vmatmul.mubr.f32.gmra.mxu0 0.0
    %v1495 = vpop.f32.mrf.mxu0
    %v1496 = vadd.f32 0.0, %v1495
    %v1497 = vpop.f32.mrf.mxu0
    %v1498 = vadd.f32 0.0, %v1497
    %1499 = vdwg.mxu0
    %1500 = vmatprep.subr.mxu0 %v1227
    %1501 = vmatpush1.msra.mxu0 %v1226
    %1502 = vmatprep.subr.mxu0 %v1219
    %1503 = vmatpush1.msra.mxu0 %v1218
    %1504 = vmatprep.subr.mxu0 %v1211
    %1505 = vmatpush1.msra.mxu0 %v1210
    %1506 = vmatprep.subr.mxu0 %v1203
    %1507 = vmatpush1.msra.mxu0 %v1202
    %1508 = vmatprep.subr.mxu0 %v1195
    %1509 = vmatpush1.msra.mxu0 %v1194
    %1510 = vmatprep.subr.mxu0 %v1187
    %1511 = vmatpush1.msra.mxu0 %v1186
    %1512 = vmatprep.subr.mxu0 %v1179
    %1513 = vmatpush1.msra.mxu0 %v1178
    %1514 = vmatprep.subr.mxu0 %v1171
    %1515 = vmatpush1.msra.mxu0 %v1170
    %1516 = vmatprep.subr.mxu0 %v1163
    %1517 = vmatpush1.msra.mxu0 %v1162
    %1518 = vmatprep.subr.mxu0 %v1155
    %1519 = vmatpush1.msra.mxu0 %v1154
    %1520 = vmatprep.subr.mxu0 %v1147
    %1521 = vmatpush1.msra.mxu0 %v1146
    %1522 = vmatprep.subr.mxu0 %v1139
    %1523 = vmatpush1.msra.mxu0 %v1138
    %1524 = vmatprep.subr.mxu0 %v1131
    %1525 = vmatpush1.msra.mxu0 %v1130
    %1526 = vmatprep.subr.mxu0 %v1123
    %1527 = vmatpush1.msra.mxu0 %v1122
    %1528 = vmatprep.subr.mxu0 %v1115
    %1529 = vmatpush1.msra.mxu0 %v1114
    %1530 = vmatprep.subr.mxu0 %v1107
    %1531 = vmatpush1.msra.mxu0 %v1106
    %1532 = vmatprep.subr.mxu0 %v1355
    %1533 = vmatpush2.msra.mxu0 %v1354
    %1534 = vmatprep.subr.mxu0 %v1347
    %1535 = vmatpush2.msra.mxu0 %v1346
    %1536 = vmatprep.subr.mxu0 %v1339
    %1537 = vmatpush2.msra.mxu0 %v1338
    %1538 = vmatprep.subr.mxu0 %v1331
    %1539 = vmatpush2.msra.mxu0 %v1330
    %1540 = vmatprep.subr.mxu0 %v1323
    %1541 = vmatpush2.msra.mxu0 %v1322
    %1542 = vmatprep.subr.mxu0 %v1315
    %1543 = vmatpush2.msra.mxu0 %v1314
    %1544 = vmatprep.subr.mxu0 %v1307
    %1545 = vmatpush2.msra.mxu0 %v1306
    %1546 = vmatprep.subr.mxu0 %v1299
    %1547 = vmatpush2.msra.mxu0 %v1298
    %1548 = vmatprep.subr.mxu0 %v1291
    %1549 = vmatpush2.msra.mxu0 %v1290
    %1550 = vmatprep.subr.mxu0 %v1283
    %1551 = vmatpush2.msra.mxu0 %v1282
    %1552 = vmatprep.subr.mxu0 %v1275
    %1553 = vmatpush2.msra.mxu0 %v1274
    %1554 = vmatprep.subr.mxu0 %v1267
    %1555 = vmatpush2.msra.mxu0 %v1266
    %1556 = vmatprep.subr.mxu0 %v1259
    %1557 = vmatpush2.msra.mxu0 %v1258
    %1558 = vmatprep.subr.mxu0 %v1251
    %1559 = vmatpush2.msra.mxu0 %v1250
    %1560 = vmatprep.subr.mxu0 %v1243
    %1561 = vmatpush2.msra.mxu0 %v1242
    %1562 = vmatprep.subr.mxu0 %v1235
    %1563 = vmatpush2.msra.mxu0 %v1234
    %1564 = vmatprep.mubr.f32.mxu0 0.0
    %1565 = vmatmul.mubr.f32.gmra.mxu0 0.0
    %v1566 = vpop.f32.mrf.mxu0
    %v1567 = vadd.f32 0.0, %v1566
    %v1568 = vpop.f32.mrf.mxu0
    %v1569 = vadd.f32 0.0, %v1568
    %1570 = vdwg.mxu0
    %1571 = vmatprep.subr.mxu0 %v1229
    %1572 = vmatpush1.msra.mxu0 %v1228
    %1573 = vmatprep.subr.mxu0 %v1221
    %1574 = vmatpush1.msra.mxu0 %v1220
    %1575 = vmatprep.subr.mxu0 %v1213
    %1576 = vmatpush1.msra.mxu0 %v1212
    %1577 = vmatprep.subr.mxu0 %v1205
    %1578 = vmatpush1.msra.mxu0 %v1204
    %1579 = vmatprep.subr.mxu0 %v1197
    %1580 = vmatpush1.msra.mxu0 %v1196
    %1581 = vmatprep.subr.mxu0 %v1189
    %1582 = vmatpush1.msra.mxu0 %v1188
    %1583 = vmatprep.subr.mxu0 %v1181
    %1584 = vmatpush1.msra.mxu0 %v1180
    %1585 = vmatprep.subr.mxu0 %v1173
    %1586 = vmatpush1.msra.mxu0 %v1172
    %1587 = vmatprep.subr.mxu0 %v1165
    %1588 = vmatpush1.msra.mxu0 %v1164
    %1589 = vmatprep.subr.mxu0 %v1157
    %1590 = vmatpush1.msra.mxu0 %v1156
    %1591 = vmatprep.subr.mxu0 %v1149
    %1592 = vmatpush1.msra.mxu0 %v1148
    %1593 = vmatprep.subr.mxu0 %v1141
    %1594 = vmatpush1.msra.mxu0 %v1140
    %1595 = vmatprep.subr.mxu0 %v1133
    %1596 = vmatpush1.msra.mxu0 %v1132
    %1597 = vmatprep.subr.mxu0 %v1125
    %1598 = vmatpush1.msra.mxu0 %v1124
    %1599 = vmatprep.subr.mxu0 %v1117
    %1600 = vmatpush1.msra.mxu0 %v1116
    %1601 = vmatprep.subr.mxu0 %v1109
    %1602 = vmatpush1.msra.mxu0 %v1108
    %1603 = vmatprep.subr.mxu0 %v1357
    %1604 = vmatpush2.msra.mxu0 %v1356
    %1605 = vmatprep.subr.mxu0 %v1349
    %1606 = vmatpush2.msra.mxu0 %v1348
    %1607 = vmatprep.subr.mxu0 %v1341
    %1608 = vmatpush2.msra.mxu0 %v1340
    %1609 = vmatprep.subr.mxu0 %v1333
    %1610 = vmatpush2.msra.mxu0 %v1332
    %1611 = vmatprep.subr.mxu0 %v1325
    %1612 = vmatpush2.msra.mxu0 %v1324
    %1613 = vmatprep.subr.mxu0 %v1317
    %1614 = vmatpush2.msra.mxu0 %v1316
    %1615 = vmatprep.subr.mxu0 %v1309
    %1616 = vmatpush2.msra.mxu0 %v1308
    %1617 = vmatprep.subr.mxu0 %v1301
    %1618 = vmatpush2.msra.mxu0 %v1300
    %1619 = vmatprep.subr.mxu0 %v1293
    %1620 = vmatpush2.msra.mxu0 %v1292
    %1621 = vmatprep.subr.mxu0 %v1285
    %1622 = vmatpush2.msra.mxu0 %v1284
    %1623 = vmatprep.subr.mxu0 %v1277
    %1624 = vmatpush2.msra.mxu0 %v1276
    %1625 = vmatprep.subr.mxu0 %v1269
    %1626 = vmatpush2.msra.mxu0 %v1268
    %1627 = vmatprep.subr.mxu0 %v1261
    %1628 = vmatpush2.msra.mxu0 %v1260
    %1629 = vmatprep.subr.mxu0 %v1253
    %1630 = vmatpush2.msra.mxu0 %v1252
    %1631 = vmatprep.subr.mxu0 %v1245
    %1632 = vmatpush2.msra.mxu0 %v1244
    %1633 = vmatprep.subr.mxu0 %v1237
    %1634 = vmatpush2.msra.mxu0 %v1236
    %1635 = vmatprep.mubr.f32.mxu0 0.0
    %1636 = vmatmul.mubr.f32.gmra.mxu0 0.0
    %v1637 = vpop.f32.mrf.mxu0
    %v1638 = vadd.f32 0.0, %v1637
    %v1639 = vpop.f32.mrf.mxu0
    %v1640 = vadd.f32 0.0, %v1639
    %1641 = vdwg.mxu0
    %v1642 = vadd.f32 %v630, %v1425
    %v1643 = vadd.f32 %v632, %v1427
    %v1644 = vadd.f32 %v784, %v1496
    %v1645 = vadd.f32 %v786, %v1498
    %v1646 = vadd.f32 %v938, %v1567
    %v1647 = vadd.f32 %v940, %v1569
    %v1648 = vadd.f32 %v1092, %v1638
    %v1649 = vadd.f32 %v1094, %v1640
    %v1650 = vxor.u32 %v1642, 2147483648
    %v1651 = vxor.u32 %v1643, 2147483648
    %v1652 = vmul.f32 %v1650, 1.442695
    %v1653 = vpow.pop %v1652
    %v1654 = vmul.f32 %v1651, 1.442695
    %v1655 = vpow.pop %v1654
    %v1656 = vadd.f32 %v1653, 1.0
    %v1657 = vadd.f32 %v1655, 1.0
    %v1658 = vrcp.pop %v1656
    %v1659 = vmul.f32 1.0, %v1658
    %v1660 = vrcp.pop %v1657
    %v1661 = vmul.f32 1.0, %v1660
    %v1662 = vxor.u32 %v1644, 2147483648
    %v1663 = vxor.u32 %v1645, 2147483648
    %v1664 = vmul.f32 %v1662, 1.442695
    %v1665 = vpow.pop %v1664
    %v1666 = vmul.f32 %v1663, 1.442695
    %v1667 = vpow.pop %v1666
    %v1668 = vadd.f32 %v1665, 1.0
    %v1669 = vadd.f32 %v1667, 1.0
    %v1670 = vrcp.pop %v1668
    %v1671 = vmul.f32 1.0, %v1670
    %v1672 = vrcp.pop %v1669
    %v1673 = vmul.f32 1.0, %v1672
    %v1674 = vtanh.pop %v1646
    %v1675 = vtanh.pop %v1647
    %v1676 = vxor.u32 %v1648, 2147483648
    %v1677 = vxor.u32 %v1649, 2147483648
    %v1678 = vmul.f32 %v1676, 1.442695
    %v1679 = vpow.pop %v1678
    %v1680 = vmul.f32 %v1677, 1.442695
    %v1681 = vpow.pop %v1680
    %v1682 = vadd.f32 %v1679, 1.0
    %v1683 = vadd.f32 %v1681, 1.0
    %v1684 = vrcp.pop %v1682
    %v1685 = vmul.f32 1.0, %v1684
    %v1686 = vrcp.pop %v1683
    %v1687 = vmul.f32 1.0, %v1686
    %v1688 = vmul.f32 %v1671, 0.0
    %v1689 = vmul.f32 %v1673, 0.0
    %v1690 = vmul.f32 %v1659, %v1674
    %v1691 = vmul.f32 %v1661, %v1675
    %v1692 = vadd.f32 %v1688, %v1690
    %v1693 = vadd.f32 %v1689, %v1691
    %v1694 = vtanh.pop %v1692
    %v1695 = vtanh.pop %v1693
    %v1696 = vmul.f32 %v1685, %v1694
    %v1697 = vmul.f32 %v1687, %v1695
    %1698 = vst [vmem:[#allocation2] sm:$0x3] %v1696
    %1699 = vst [vmem:[#allocation2 + $0x8] sm:$0x3] %v1697
    %1700 = vmatprep.subr.mxu0 %v1223
    %1701 = vmatpush1.msra.mxu0 %v1222
    %1702 = vmatprep.subr.mxu0 %v1215
    %1703 = vmatpush1.msra.mxu0 %v1214
    %1704 = vmatprep.subr.mxu0 %v1207
    %1705 = vmatpush1.msra.mxu0 %v1206
    %1706 = vmatprep.subr.mxu0 %v1199
    %1707 = vmatpush1.msra.mxu0 %v1198
    %1708 = vmatprep.subr.mxu0 %v1191
    %1709 = vmatpush1.msra.mxu0 %v1190
    %1710 = vmatprep.subr.mxu0 %v1183
    %1711 = vmatpush1.msra.mxu0 %v1182
    %1712 = vmatprep.subr.mxu0 %v1175
    %1713 = vmatpush1.msra.mxu0 %v1174
    %1714 = vmatprep.subr.mxu0 %v1167
    %1715 = vmatpush1.msra.mxu0 %v1166
    %1716 = vmatprep.subr.mxu0 %v1159
    %1717 = vmatpush1.msra.mxu0 %v1158
    %1718 = vmatprep.subr.mxu0 %v1151
    %1719 = vmatpush1.msra.mxu0 %v1150
    %1720 = vmatprep.subr.mxu0 %v1143
    %1721 = vmatpush1.msra.mxu0 %v1142
    %1722 = vmatprep.subr.mxu0 %v1135
    %1723 = vmatpush1.msra.mxu0 %v1134
    %1724 = vmatprep.subr.mxu0 %v1127
    %1725 = vmatpush1.msra.mxu0 %v1126
    %1726 = vmatprep.subr.mxu0 %v1119
    %1727 = vmatpush1.msra.mxu0 %v1118
    %1728 = vmatprep.subr.mxu0 %v1111
    %1729 = vmatpush1.msra.mxu0 %v1110
    %1730 = vmatprep.subr.mxu0 %v1103
    %1731 = vmatpush1.msra.mxu0 %v1102
    %1732 = vmatprep.subr.mxu0 %v1351
    %1733 = vmatpush2.msra.mxu0 %v1350
    %1734 = vmatprep.subr.mxu0 %v1343
    %1735 = vmatpush2.msra.mxu0 %v1342
    %1736 = vmatprep.subr.mxu0 %v1335
    %1737 = vmatpush2.msra.mxu0 %v1334
    %1738 = vmatprep.subr.mxu0 %v1327
    %1739 = vmatpush2.msra.mxu0 %v1326
    %1740 = vmatprep.subr.mxu0 %v1319
    %1741 = vmatpush2.msra.mxu0 %v1318
    %1742 = vmatprep.subr.mxu0 %v1311
    %1743 = vmatpush2.msra.mxu0 %v1310
    %1744 = vmatprep.subr.mxu0 %v1303
    %1745 = vmatpush2.msra.mxu0 %v1302
    %1746 = vmatprep.subr.mxu0 %v1295
    %1747 = vmatpush2.msra.mxu0 %v1294
    %1748 = vmatprep.subr.mxu0 %v1287
    %1749 = vmatpush2.msra.mxu0 %v1286
    %1750 = vmatprep.subr.mxu0 %v1279
    %1751 = vmatpush2.msra.mxu0 %v1278
    %1752 = vmatprep.subr.mxu0 %v1271
    %1753 = vmatpush2.msra.mxu0 %v1270
    %1754 = vmatprep.subr.mxu0 %v1263
    %1755 = vmatpush2.msra.mxu0 %v1262
    %1756 = vmatprep.subr.mxu0 %v1255
    %1757 = vmatpush2.msra.mxu0 %v1254
    %1758 = vmatprep.subr.mxu0 %v1247
    %1759 = vmatpush2.msra.mxu0 %v1246
    %1760 = vmatprep.subr.mxu0 %v1239
    %1761 = vmatpush2.msra.mxu0 %v1238
    %1762 = vmatprep.subr.mxu0 %v1231
    %1763 = vmatpush2.msra.mxu0 %v1230
    %1764 = vmatprep.mubr.f32.mxu0 %v1697
    %1765 = vmatmul.mubr.f32.gmra.mxu0 %v1696
    %v1766 = vpop.f32.mrf.mxu0
    %v1767 = vadd.f32 0.0, %v1766
    %v1768 = vpop.f32.mrf.mxu0
    %v1769 = vadd.f32 0.0, %v1768
    %1770 = vdwg.mxu0
    %1771 = vmatprep.subr.mxu0 %v1225
    %1772 = vmatpush1.msra.mxu0 %v1224
    %1773 = vmatprep.subr.mxu0 %v1217
    %1774 = vmatpush1.msra.mxu0 %v1216
    %1775 = vmatprep.subr.mxu0 %v1209
    %1776 = vmatpush1.msra.mxu0 %v1208
    %1777 = vmatprep.subr.mxu0 %v1201
    %1778 = vmatpush1.msra.mxu0 %v1200
    %1779 = vmatprep.subr.mxu0 %v1193
    %1780 = vmatpush1.msra.mxu0 %v1192
    %1781 = vmatprep.subr.mxu0 %v1185
    %1782 = vmatpush1.msra.mxu0 %v1184
    %1783 = vmatprep.subr.mxu0 %v1177
    %1784 = vmatpush1.msra.mxu0 %v1176
    %1785 = vmatprep.subr.mxu0 %v1169
    %1786 = vmatpush1.msra.mxu0 %v1168
    %1787 = vmatprep.subr.mxu0 %v1161
    %1788 = vmatpush1.msra.mxu0 %v1160
    %1789 = vmatprep.subr.mxu0 %v1153
    %1790 = vmatpush1.msra.mxu0 %v1152
    %1791 = vmatprep.subr.mxu0 %v1145
    %1792 = vmatpush1.msra.mxu0 %v1144
    %1793 = vmatprep.subr.mxu0 %v1137
    %1794 = vmatpush1.msra.mxu0 %v1136
    %1795 = vmatprep.subr.mxu0 %v1129
    %1796 = vmatpush1.msra.mxu0 %v1128
    %1797 = vmatprep.subr.mxu0 %v1121
    %1798 = vmatpush1.msra.mxu0 %v1120
    %1799 = vmatprep.subr.mxu0 %v1113
    %1800 = vmatpush1.msra.mxu0 %v1112
    %1801 = vmatprep.subr.mxu0 %v1105
    %1802 = vmatpush1.msra.mxu0 %v1104
    %1803 = vmatprep.subr.mxu0 %v1353
    %1804 = vmatpush2.msra.mxu0 %v1352
    %1805 = vmatprep.subr.mxu0 %v1345
    %1806 = vmatpush2.msra.mxu0 %v1344
    %1807 = vmatprep.subr.mxu0 %v1337
    %1808 = vmatpush2.msra.mxu0 %v1336
    %1809 = vmatprep.subr.mxu0 %v1329
    %1810 = vmatpush2.msra.mxu0 %v1328
    %1811 = vmatprep.subr.mxu0 %v1321
    %1812 = vmatpush2.msra.mxu0 %v1320
    %1813 = vmatprep.subr.mxu0 %v1313
    %1814 = vmatpush2.msra.mxu0 %v1312
    %1815 = vmatprep.subr.mxu0 %v1305
    %1816 = vmatpush2.msra.mxu0 %v1304
    %1817 = vmatprep.subr.mxu0 %v1297
    %1818 = vmatpush2.msra.mxu0 %v1296
    %1819 = vmatprep.subr.mxu0 %v1289
    %1820 = vmatpush2.msra.mxu0 %v1288
    %1821 = vmatprep.subr.mxu0 %v1281
    %1822 = vmatpush2.msra.mxu0 %v1280
    %1823 = vmatprep.subr.mxu0 %v1273
    %1824 = vmatpush2.msra.mxu0 %v1272
    %1825 = vmatprep.subr.mxu0 %v1265
    %1826 = vmatpush2.msra.mxu0 %v1264
    %1827 = vmatprep.subr.mxu0 %v1257
    %1828 = vmatpush2.msra.mxu0 %v1256
    %1829 = vmatprep.subr.mxu0 %v1249
    %1830 = vmatpush2.msra.mxu0 %v1248
    %1831 = vmatprep.subr.mxu0 %v1241
    %1832 = vmatpush2.msra.mxu0 %v1240
    %1833 = vmatprep.subr.mxu0 %v1233
    %1834 = vmatpush2.msra.mxu0 %v1232
    %1835 = vmatprep.mubr.f32.mxu0 %v1697
    %1836 = vmatmul.mubr.f32.gmra.mxu0 %v1696
    %v1837 = vpop.f32.mrf.mxu0
    %v1838 = vadd.f32 0.0, %v1837
    %v1839 = vpop.f32.mrf.mxu0
    %v1840 = vadd.f32 0.0, %v1839
    %1841 = vdwg.mxu0
    %1842 = vmatprep.subr.mxu0 %v1227
    %1843 = vmatpush1.msra.mxu0 %v1226
    %1844 = vmatprep.subr.mxu0 %v1219
    %1845 = vmatpush1.msra.mxu0 %v1218
    %1846 = vmatprep.subr.mxu0 %v1211
    %1847 = vmatpush1.msra.mxu0 %v1210
    %1848 = vmatprep.subr.mxu0 %v1203
    %1849 = vmatpush1.msra.mxu0 %v1202
    %1850 = vmatprep.subr.mxu0 %v1195
    %1851 = vmatpush1.msra.mxu0 %v1194
    %1852 = vmatprep.subr.mxu0 %v1187
    %1853 = vmatpush1.msra.mxu0 %v1186
    %1854 = vmatprep.subr.mxu0 %v1179
    %1855 = vmatpush1.msra.mxu0 %v1178
    %1856 = vmatprep.subr.mxu0 %v1171
    %1857 = vmatpush1.msra.mxu0 %v1170
    %1858 = vmatprep.subr.mxu0 %v1163
    %1859 = vmatpush1.msra.mxu0 %v1162
    %1860 = vmatprep.subr.mxu0 %v1155
    %1861 = vmatpush1.msra.mxu0 %v1154
    %1862 = vmatprep.subr.mxu0 %v1147
    %1863 = vmatpush1.msra.mxu0 %v1146
    %1864 = vmatprep.subr.mxu0 %v1139
    %1865 = vmatpush1.msra.mxu0 %v1138
    %1866 = vmatprep.subr.mxu0 %v1131
    %1867 = vmatpush1.msra.mxu0 %v1130
    %1868 = vmatprep.subr.mxu0 %v1123
    %1869 = vmatpush1.msra.mxu0 %v1122
    %1870 = vmatprep.subr.mxu0 %v1115
    %1871 = vmatpush1.msra.mxu0 %v1114
    %1872 = vmatprep.subr.mxu0 %v1107
    %1873 = vmatpush1.msra.mxu0 %v1106
    %1874 = vmatprep.subr.mxu0 %v1355
    %1875 = vmatpush2.msra.mxu0 %v1354
    %1876 = vmatprep.subr.mxu0 %v1347
    %1877 = vmatpush2.msra.mxu0 %v1346
    %1878 = vmatprep.subr.mxu0 %v1339
    %1879 = vmatpush2.msra.mxu0 %v1338
    %1880 = vmatprep.subr.mxu0 %v1331
    %1881 = vmatpush2.msra.mxu0 %v1330
    %1882 = vmatprep.subr.mxu0 %v1323
    %1883 = vmatpush2.msra.mxu0 %v1322
    %1884 = vmatprep.subr.mxu0 %v1315
    %1885 = vmatpush2.msra.mxu0 %v1314
    %1886 = vmatprep.subr.mxu0 %v1307
    %1887 = vmatpush2.msra.mxu0 %v1306
    %1888 = vmatprep.subr.mxu0 %v1299
    %1889 = vmatpush2.msra.mxu0 %v1298
    %1890 = vmatprep.subr.mxu0 %v1291
    %1891 = vmatpush2.msra.mxu0 %v1290
    %1892 = vmatprep.subr.mxu0 %v1283
    %1893 = vmatpush2.msra.mxu0 %v1282
    %1894 = vmatprep.subr.mxu0 %v1275
    %1895 = vmatpush2.msra.mxu0 %v1274
    %1896 = vmatprep.subr.mxu0 %v1267
    %1897 = vmatpush2.msra.mxu0 %v1266
    %1898 = vmatprep.subr.mxu0 %v1259
    %1899 = vmatpush2.msra.mxu0 %v1258
    %1900 = vmatprep.subr.mxu0 %v1251
    %1901 = vmatpush2.msra.mxu0 %v1250
    %1902 = vmatprep.subr.mxu0 %v1243
    %1903 = vmatpush2.msra.mxu0 %v1242
    %1904 = vmatprep.subr.mxu0 %v1235
    %1905 = vmatpush2.msra.mxu0 %v1234
    %1906 = vmatprep.mubr.f32.mxu0 %v1697
    %1907 = vmatmul.mubr.f32.gmra.mxu0 %v1696
    %v1908 = vpop.f32.mrf.mxu0
    %v1909 = vadd.f32 0.0, %v1908
    %v1910 = vpop.f32.mrf.mxu0
    %v1911 = vadd.f32 0.0, %v1910
    %1912 = vdwg.mxu0
    %1913 = vmatprep.subr.mxu0 %v1229
    %1914 = vmatpush1.msra.mxu0 %v1228
    %1915 = vmatprep.subr.mxu0 %v1221
    %1916 = vmatpush1.msra.mxu0 %v1220
    %1917 = vmatprep.subr.mxu0 %v1213
    %1918 = vmatpush1.msra.mxu0 %v1212
    %1919 = vmatprep.subr.mxu0 %v1205
    %1920 = vmatpush1.msra.mxu0 %v1204
    %1921 = vmatprep.subr.mxu0 %v1197
    %1922 = vmatpush1.msra.mxu0 %v1196
    %1923 = vmatprep.subr.mxu0 %v1189
    %1924 = vmatpush1.msra.mxu0 %v1188
    %1925 = vmatprep.subr.mxu0 %v1181
    %1926 = vmatpush1.msra.mxu0 %v1180
    %1927 = vmatprep.subr.mxu0 %v1173
    %1928 = vmatpush1.msra.mxu0 %v1172
    %1929 = vmatprep.subr.mxu0 %v1165
    %1930 = vmatpush1.msra.mxu0 %v1164
    %1931 = vmatprep.subr.mxu0 %v1157
    %1932 = vmatpush1.msra.mxu0 %v1156
    %1933 = vmatprep.subr.mxu0 %v1149
    %1934 = vmatpush1.msra.mxu0 %v1148
    %1935 = vmatprep.subr.mxu0 %v1141
    %1936 = vmatpush1.msra.mxu0 %v1140
    %1937 = vmatprep.subr.mxu0 %v1133
    %1938 = vmatpush1.msra.mxu0 %v1132
    %1939 = vmatprep.subr.mxu0 %v1125
    %1940 = vmatpush1.msra.mxu0 %v1124
    %1941 = vmatprep.subr.mxu0 %v1117
    %1942 = vmatpush1.msra.mxu0 %v1116
    %1943 = vmatprep.subr.mxu0 %v1109
    %1944 = vmatpush1.msra.mxu0 %v1108
    %1945 = vmatprep.subr.mxu0 %v1357
    %1946 = vmatpush2.msra.mxu0 %v1356
    %1947 = vmatprep.subr.mxu0 %v1349
    %1948 = vmatpush2.msra.mxu0 %v1348
    %1949 = vmatprep.subr.mxu0 %v1341
    %1950 = vmatpush2.msra.mxu0 %v1340
    %1951 = vmatprep.subr.mxu0 %v1333
    %1952 = vmatpush2.msra.mxu0 %v1332
    %1953 = vmatprep.subr.mxu0 %v1325
    %1954 = vmatpush2.msra.mxu0 %v1324
    %1955 = vmatprep.subr.mxu0 %v1317
    %1956 = vmatpush2.msra.mxu0 %v1316
    %1957 = vmatprep.subr.mxu0 %v1309
    %1958 = vmatpush2.msra.mxu0 %v1308
    %1959 = vmatprep.subr.mxu0 %v1301
    %1960 = vmatpush2.msra.mxu0 %v1300
    %1961 = vmatprep.subr.mxu0 %v1293
    %1962 = vmatpush2.msra.mxu0 %v1292
    %1963 = vmatprep.subr.mxu0 %v1285
    %1964 = vmatpush2.msra.mxu0 %v1284
    %1965 = vmatprep.subr.mxu0 %v1277
    %1966 = vmatpush2.msra.mxu0 %v1276
    %1967 = vmatprep.subr.mxu0 %v1269
    %1968 = vmatpush2.msra.mxu0 %v1268
    %1969 = vmatprep.subr.mxu0 %v1261
    %1970 = vmatpush2.msra.mxu0 %v1260
    %1971 = vmatprep.subr.mxu0 %v1253
    %1972 = vmatpush2.msra.mxu0 %v1252
    %1973 = vmatprep.subr.mxu0 %v1245
    %1974 = vmatpush2.msra.mxu0 %v1244
    %1975 = vmatprep.subr.mxu0 %v1237
    %1976 = vmatpush2.msra.mxu0 %v1236
    %1977 = vmatprep.mubr.f32.mxu0 %v1697
    %1978 = vmatmul.mubr.f32.gmra.mxu0 %v1696
    %v1979 = vpop.f32.mrf.mxu0
    %v1980 = vadd.f32 0.0, %v1979
    %v1981 = vpop.f32.mrf.mxu0
    %v1982 = vadd.f32 0.0, %v1981
    %1983 = vdwg.mxu0
    %v1992 = vrot.slane %v1767, 6
    %v1993 = vrot.slane %v1769, 6
    %v1994 = vrot.slane %v1838, 6
    %v1995 = vrot.slane %v1840, 6
    %v1996 = vrot.slane %v1909, 6
    %v1997 = vrot.slane %v1911, 6
    %v1998 = vrot.slane %v1980, 6
    %v1999 = vrot.slane %v1982, 6
    %v2008 = vadd.f32 %v630, %v1992
    %v2009 = vadd.f32 %v632, %v1993
    %v2010 = vadd.f32 %v784, %v1994
    %v2011 = vadd.f32 %v786, %v1995
    %v2012 = vadd.f32 %v938, %v1996
    %v2013 = vadd.f32 %v940, %v1997
    %v2014 = vadd.f32 %v1092, %v1998
    %v2015 = vadd.f32 %v1094, %v1999
    %v2016 = vxor.u32 %v2008, 2147483648
    %v2017 = vxor.u32 %v2009, 2147483648
    %v2018 = vmul.f32 %v2016, 1.442695
    %v2019 = vpow.pop %v2018
    %v2020 = vmul.f32 %v2017, 1.442695
    %v2021 = vpow.pop %v2020
    %v2022 = vadd.f32 %v2019, 1.0
    %v2023 = vadd.f32 %v2021, 1.0
    %v2024 = vrcp.pop %v2022
    %v2025 = vmul.f32 1.0, %v2024
    %v2026 = vrcp.pop %v2023
    %v2027 = vmul.f32 1.0, %v2026
    %v2028 = vxor.u32 %v2010, 2147483648
    %v2029 = vxor.u32 %v2011, 2147483648
    %v2030 = vmul.f32 %v2028, 1.442695
    %v2031 = vpow.pop %v2030
    %v2032 = vmul.f32 %v2029, 1.442695
    %v2033 = vpow.pop %v2032
    %v2034 = vadd.f32 %v2031, 1.0
    %v2035 = vadd.f32 %v2033, 1.0
    %v2036 = vrcp.pop %v2034
    %v2037 = vmul.f32 1.0, %v2036
    %v2038 = vrcp.pop %v2035
    %v2039 = vmul.f32 1.0, %v2038
    %v2040 = vtanh.pop %v2012
    %v2041 = vtanh.pop %v2013
    %v2042 = vxor.u32 %v2014, 2147483648
    %v2043 = vxor.u32 %v2015, 2147483648
    %v2044 = vmul.f32 %v2042, 1.442695
    %v2045 = vpow.pop %v2044
    %v2046 = vmul.f32 %v2043, 1.442695
    %v2047 = vpow.pop %v2046
    %v2048 = vadd.f32 %v2045, 1.0
    %v2049 = vadd.f32 %v2047, 1.0
    %v2050 = vrcp.pop %v2048
    %v2051 = vmul.f32 1.0, %v2050
    %v2052 = vrcp.pop %v2049
    %v2053 = vmul.f32 1.0, %v2052
    %v2056 = vrot.slane %v1692, 6
    %v2057 = vrot.slane %v1693, 6
    %v2060 = vmul.f32 %v2037, %v2056
    %v2061 = vmul.f32 %v2039, %v2057
    %v2062 = vmul.f32 %v2025, %v2040
    %v2063 = vmul.f32 %v2027, %v2041
    %v2064 = vadd.f32 %v2060, %v2062
    %v2065 = vadd.f32 %v2061, %v2063
    %v2066 = vtanh.pop %v2064
    %v2067 = vtanh.pop %v2065
    %v2068 = vmul.f32 %v2051, %v2066
    %v2069 = vmul.f32 %v2053, %v2067
    %2070 = vst [vmem:[#allocation2] sm:$0xc] %v2068
    %2071 = vst [vmem:[#allocation2 + $0x8] sm:$0xc] %v2069
    %v2074 = vrot.slane %v2068, 2
    %v2075 = vrot.slane %v2069, 2
    %2078 = vmatprep.subr.mxu0 %v1223
    %2079 = vmatpush1.msra.mxu0 %v1222
    %2080 = vmatprep.subr.mxu0 %v1215
    %2081 = vmatpush1.msra.mxu0 %v1214
    %2082 = vmatprep.subr.mxu0 %v1207
    %2083 = vmatpush1.msra.mxu0 %v1206
    %2084 = vmatprep.subr.mxu0 %v1199
    %2085 = vmatpush1.msra.mxu0 %v1198
    %2086 = vmatprep.subr.mxu0 %v1191
    %2087 = vmatpush1.msra.mxu0 %v1190
    %2088 = vmatprep.subr.mxu0 %v1183
    %2089 = vmatpush1.msra.mxu0 %v1182
    %2090 = vmatprep.subr.mxu0 %v1175
    %2091 = vmatpush1.msra.mxu0 %v1174
    %2092 = vmatprep.subr.mxu0 %v1167
    %2093 = vmatpush1.msra.mxu0 %v1166
    %2094 = vmatprep.subr.mxu0 %v1159
    %2095 = vmatpush1.msra.mxu0 %v1158
    %2096 = vmatprep.subr.mxu0 %v1151
    %2097 = vmatpush1.msra.mxu0 %v1150
    %2098 = vmatprep.subr.mxu0 %v1143
    %2099 = vmatpush1.msra.mxu0 %v1142
    %2100 = vmatprep.subr.mxu0 %v1135
    %2101 = vmatpush1.msra.mxu0 %v1134
    %2102 = vmatprep.subr.mxu0 %v1127
    %2103 = vmatpush1.msra.mxu0 %v1126
    %2104 = vmatprep.subr.mxu0 %v1119
    %2105 = vmatpush1.msra.mxu0 %v1118
    %2106 = vmatprep.subr.mxu0 %v1111
    %2107 = vmatpush1.msra.mxu0 %v1110
    %2108 = vmatprep.subr.mxu0 %v1103
    %2109 = vmatpush1.msra.mxu0 %v1102
    %2110 = vmatprep.subr.mxu0 %v1351
    %2111 = vmatpush2.msra.mxu0 %v1350
    %2112 = vmatprep.subr.mxu0 %v1343
    %2113 = vmatpush2.msra.mxu0 %v1342
    %2114 = vmatprep.subr.mxu0 %v1335
    %2115 = vmatpush2.msra.mxu0 %v1334
    %2116 = vmatprep.subr.mxu0 %v1327
    %2117 = vmatpush2.msra.mxu0 %v1326
    %2118 = vmatprep.subr.mxu0 %v1319
    %2119 = vmatpush2.msra.mxu0 %v1318
    %2120 = vmatprep.subr.mxu0 %v1311
    %2121 = vmatpush2.msra.mxu0 %v1310
    %2122 = vmatprep.subr.mxu0 %v1303
    %2123 = vmatpush2.msra.mxu0 %v1302
    %2124 = vmatprep.subr.mxu0 %v1295
    %2125 = vmatpush2.msra.mxu0 %v1294
    %2126 = vmatprep.subr.mxu0 %v1287
    %2127 = vmatpush2.msra.mxu0 %v1286
    %2128 = vmatprep.subr.mxu0 %v1279
    %2129 = vmatpush2.msra.mxu0 %v1278
    %2130 = vmatprep.subr.mxu0 %v1271
    %2131 = vmatpush2.msra.mxu0 %v1270
    %2132 = vmatprep.subr.mxu0 %v1263
    %2133 = vmatpush2.msra.mxu0 %v1262
    %2134 = vmatprep.subr.mxu0 %v1255
    %2135 = vmatpush2.msra.mxu0 %v1254
    %2136 = vmatprep.subr.mxu0 %v1247
    %2137 = vmatpush2.msra.mxu0 %v1246
    %2138 = vmatprep.subr.mxu0 %v1239
    %2139 = vmatpush2.msra.mxu0 %v1238
    %2140 = vmatprep.subr.mxu0 %v1231
    %2141 = vmatpush2.msra.mxu0 %v1230
    %2142 = vmatprep.mubr.f32.mxu0 %v2075
    %2143 = vmatmul.mubr.f32.gmra.mxu0 %v2074
    %v2144 = vpop.f32.mrf.mxu0
    %v2145 = vadd.f32 0.0, %v2144
    %v2146 = vpop.f32.mrf.mxu0
    %v2147 = vadd.f32 0.0, %v2146
    %2148 = vdwg.mxu0
    %2149 = vmatprep.subr.mxu0 %v1225
    %2150 = vmatpush1.msra.mxu0 %v1224
    %2151 = vmatprep.subr.mxu0 %v1217
    %2152 = vmatpush1.msra.mxu0 %v1216
    %2153 = vmatprep.subr.mxu0 %v1209
    %2154 = vmatpush1.msra.mxu0 %v1208
    %2155 = vmatprep.subr.mxu0 %v1201
    %2156 = vmatpush1.msra.mxu0 %v1200
    %2157 = vmatprep.subr.mxu0 %v1193
    %2158 = vmatpush1.msra.mxu0 %v1192
    %2159 = vmatprep.subr.mxu0 %v1185
    %2160 = vmatpush1.msra.mxu0 %v1184
    %2161 = vmatprep.subr.mxu0 %v1177
    %2162 = vmatpush1.msra.mxu0 %v1176
    %2163 = vmatprep.subr.mxu0 %v1169
    %2164 = vmatpush1.msra.mxu0 %v1168
    %2165 = vmatprep.subr.mxu0 %v1161
    %2166 = vmatpush1.msra.mxu0 %v1160
    %2167 = vmatprep.subr.mxu0 %v1153
    %2168 = vmatpush1.msra.mxu0 %v1152
    %2169 = vmatprep.subr.mxu0 %v1145
    %2170 = vmatpush1.msra.mxu0 %v1144
    %2171 = vmatprep.subr.mxu0 %v1137
    %2172 = vmatpush1.msra.mxu0 %v1136
    %2173 = vmatprep.subr.mxu0 %v1129
    %2174 = vmatpush1.msra.mxu0 %v1128
    %2175 = vmatprep.subr.mxu0 %v1121
    %2176 = vmatpush1.msra.mxu0 %v1120
    %2177 = vmatprep.subr.mxu0 %v1113
    %2178 = vmatpush1.msra.mxu0 %v1112
    %2179 = vmatprep.subr.mxu0 %v1105
    %2180 = vmatpush1.msra.mxu0 %v1104
    %2181 = vmatprep.subr.mxu0 %v1353
    %2182 = vmatpush2.msra.mxu0 %v1352
    %2183 = vmatprep.subr.mxu0 %v1345
    %2184 = vmatpush2.msra.mxu0 %v1344
    %2185 = vmatprep.subr.mxu0 %v1337
    %2186 = vmatpush2.msra.mxu0 %v1336
    %2187 = vmatprep.subr.mxu0 %v1329
    %2188 = vmatpush2.msra.mxu0 %v1328
    %2189 = vmatprep.subr.mxu0 %v1321
    %2190 = vmatpush2.msra.mxu0 %v1320
    %2191 = vmatprep.subr.mxu0 %v1313
    %2192 = vmatpush2.msra.mxu0 %v1312
    %2193 = vmatprep.subr.mxu0 %v1305
    %2194 = vmatpush2.msra.mxu0 %v1304
    %2195 = vmatprep.subr.mxu0 %v1297
    %2196 = vmatpush2.msra.mxu0 %v1296
    %2197 = vmatprep.subr.mxu0 %v1289
    %2198 = vmatpush2.msra.mxu0 %v1288
    %2199 = vmatprep.subr.mxu0 %v1281
    %2200 = vmatpush2.msra.mxu0 %v1280
    %2201 = vmatprep.subr.mxu0 %v1273
    %2202 = vmatpush2.msra.mxu0 %v1272
    %2203 = vmatprep.subr.mxu0 %v1265
    %2204 = vmatpush2.msra.mxu0 %v1264
    %2205 = vmatprep.subr.mxu0 %v1257
    %2206 = vmatpush2.msra.mxu0 %v1256
    %2207 = vmatprep.subr.mxu0 %v1249
    %2208 = vmatpush2.msra.mxu0 %v1248
    %2209 = vmatprep.subr.mxu0 %v1241
    %2210 = vmatpush2.msra.mxu0 %v1240
    %2211 = vmatprep.subr.mxu0 %v1233
    %2212 = vmatpush2.msra.mxu0 %v1232
    %2213 = vmatprep.mubr.f32.mxu0 %v2075
    %2214 = vmatmul.mubr.f32.gmra.mxu0 %v2074
    %v2215 = vpop.f32.mrf.mxu0
    %v2216 = vadd.f32 0.0, %v2215
    %v2217 = vpop.f32.mrf.mxu0
    %v2218 = vadd.f32 0.0, %v2217
    %2219 = vdwg.mxu0
    %2220 = vmatprep.subr.mxu0 %v1227
    %2221 = vmatpush1.msra.mxu0 %v1226
    %2222 = vmatprep.subr.mxu0 %v1219
    %2223 = vmatpush1.msra.mxu0 %v1218
    %2224 = vmatprep.subr.mxu0 %v1211
    %2225 = vmatpush1.msra.mxu0 %v1210
    %2226 = vmatprep.subr.mxu0 %v1203
    %2227 = vmatpush1.msra.mxu0 %v1202
    %2228 = vmatprep.subr.mxu0 %v1195
    %2229 = vmatpush1.msra.mxu0 %v1194
    %2230 = vmatprep.subr.mxu0 %v1187
    %2231 = vmatpush1.msra.mxu0 %v1186
    %2232 = vmatprep.subr.mxu0 %v1179
    %2233 = vmatpush1.msra.mxu0 %v1178
    %2234 = vmatprep.subr.mxu0 %v1171
    %2235 = vmatpush1.msra.mxu0 %v1170
    %2236 = vmatprep.subr.mxu0 %v1163
    %2237 = vmatpush1.msra.mxu0 %v1162
    %2238 = vmatprep.subr.mxu0 %v1155
    %2239 = vmatpush1.msra.mxu0 %v1154
    %2240 = vmatprep.subr.mxu0 %v1147
    %2241 = vmatpush1.msra.mxu0 %v1146
    %2242 = vmatprep.subr.mxu0 %v1139
    %2243 = vmatpush1.msra.mxu0 %v1138
    %2244 = vmatprep.subr.mxu0 %v1131
    %2245 = vmatpush1.msra.mxu0 %v1130
    %2246 = vmatprep.subr.mxu0 %v1123
    %2247 = vmatpush1.msra.mxu0 %v1122
    %2248 = vmatprep.subr.mxu0 %v1115
    %2249 = vmatpush1.msra.mxu0 %v1114
    %2250 = vmatprep.subr.mxu0 %v1107
    %2251 = vmatpush1.msra.mxu0 %v1106
    %2252 = vmatprep.subr.mxu0 %v1355
    %2253 = vmatpush2.msra.mxu0 %v1354
    %2254 = vmatprep.subr.mxu0 %v1347
    %2255 = vmatpush2.msra.mxu0 %v1346
    %2256 = vmatprep.subr.mxu0 %v1339
    %2257 = vmatpush2.msra.mxu0 %v1338
    %2258 = vmatprep.subr.mxu0 %v1331
    %2259 = vmatpush2.msra.mxu0 %v1330
    %2260 = vmatprep.subr.mxu0 %v1323
    %2261 = vmatpush2.msra.mxu0 %v1322
    %2262 = vmatprep.subr.mxu0 %v1315
    %2263 = vmatpush2.msra.mxu0 %v1314
    %2264 = vmatprep.subr.mxu0 %v1307
    %2265 = vmatpush2.msra.mxu0 %v1306
    %2266 = vmatprep.subr.mxu0 %v1299
    %2267 = vmatpush2.msra.mxu0 %v1298
    %2268 = vmatprep.subr.mxu0 %v1291
    %2269 = vmatpush2.msra.mxu0 %v1290
    %2270 = vmatprep.subr.mxu0 %v1283
    %2271 = vmatpush2.msra.mxu0 %v1282
    %2272 = vmatprep.subr.mxu0 %v1275
    %2273 = vmatpush2.msra.mxu0 %v1274
    %2274 = vmatprep.subr.mxu0 %v1267
    %2275 = vmatpush2.msra.mxu0 %v1266
    %2276 = vmatprep.subr.mxu0 %v1259
    %2277 = vmatpush2.msra.mxu0 %v1258
    %2278 = vmatprep.subr.mxu0 %v1251
    %2279 = vmatpush2.msra.mxu0 %v1250
    %2280 = vmatprep.subr.mxu0 %v1243
    %2281 = vmatpush2.msra.mxu0 %v1242
    %2282 = vmatprep.subr.mxu0 %v1235
    %2283 = vmatpush2.msra.mxu0 %v1234
    %2284 = vmatprep.mubr.f32.mxu0 %v2075
    %2285 = vmatmul.mubr.f32.gmra.mxu0 %v2074
    %v2286 = vpop.f32.mrf.mxu0
    %v2287 = vadd.f32 0.0, %v2286
    %v2288 = vpop.f32.mrf.mxu0
    %v2289 = vadd.f32 0.0, %v2288
    %2290 = vdwg.mxu0
    %2291 = vmatprep.subr.mxu0 %v1229
    %2292 = vmatpush1.msra.mxu0 %v1228
    %2293 = vmatprep.subr.mxu0 %v1221
    %2294 = vmatpush1.msra.mxu0 %v1220
    %2295 = vmatprep.subr.mxu0 %v1213
    %2296 = vmatpush1.msra.mxu0 %v1212
    %2297 = vmatprep.subr.mxu0 %v1205
    %2298 = vmatpush1.msra.mxu0 %v1204
    %2299 = vmatprep.subr.mxu0 %v1197
    %2300 = vmatpush1.msra.mxu0 %v1196
    %2301 = vmatprep.subr.mxu0 %v1189
    %2302 = vmatpush1.msra.mxu0 %v1188
    %2303 = vmatprep.subr.mxu0 %v1181
    %2304 = vmatpush1.msra.mxu0 %v1180
    %2305 = vmatprep.subr.mxu0 %v1173
    %2306 = vmatpush1.msra.mxu0 %v1172
    %2307 = vmatprep.subr.mxu0 %v1165
    %2308 = vmatpush1.msra.mxu0 %v1164
    %2309 = vmatprep.subr.mxu0 %v1157
    %2310 = vmatpush1.msra.mxu0 %v1156
    %2311 = vmatprep.subr.mxu0 %v1149
    %2312 = vmatpush1.msra.mxu0 %v1148
    %2313 = vmatprep.subr.mxu0 %v1141
    %2314 = vmatpush1.msra.mxu0 %v1140
    %2315 = vmatprep.subr.mxu0 %v1133
    %2316 = vmatpush1.msra.mxu0 %v1132
    %2317 = vmatprep.subr.mxu0 %v1125
    %2318 = vmatpush1.msra.mxu0 %v1124
    %2319 = vmatprep.subr.mxu0 %v1117
    %2320 = vmatpush1.msra.mxu0 %v1116
    %2321 = vmatprep.subr.mxu0 %v1109
    %2322 = vmatpush1.msra.mxu0 %v1108
    %2323 = vmatprep.subr.mxu0 %v1357
    %2324 = vmatpush2.msra.mxu0 %v1356
    %2325 = vmatprep.subr.mxu0 %v1349
    %2326 = vmatpush2.msra.mxu0 %v1348
    %2327 = vmatprep.subr.mxu0 %v1341
    %2328 = vmatpush2.msra.mxu0 %v1340
    %2329 = vmatprep.subr.mxu0 %v1333
    %2330 = vmatpush2.msra.mxu0 %v1332
    %2331 = vmatprep.subr.mxu0 %v1325
    %2332 = vmatpush2.msra.mxu0 %v1324
    %2333 = vmatprep.subr.mxu0 %v1317
    %2334 = vmatpush2.msra.mxu0 %v1316
    %2335 = vmatprep.subr.mxu0 %v1309
    %2336 = vmatpush2.msra.mxu0 %v1308
    %2337 = vmatprep.subr.mxu0 %v1301
    %2338 = vmatpush2.msra.mxu0 %v1300
    %2339 = vmatprep.subr.mxu0 %v1293
    %2340 = vmatpush2.msra.mxu0 %v1292
    %2341 = vmatprep.subr.mxu0 %v1285
    %2342 = vmatpush2.msra.mxu0 %v1284
    %2343 = vmatprep.subr.mxu0 %v1277
    %2344 = vmatpush2.msra.mxu0 %v1276
    %2345 = vmatprep.subr.mxu0 %v1269
    %2346 = vmatpush2.msra.mxu0 %v1268
    %2347 = vmatprep.subr.mxu0 %v1261
    %2348 = vmatpush2.msra.mxu0 %v1260
    %2349 = vmatprep.subr.mxu0 %v1253
    %2350 = vmatpush2.msra.mxu0 %v1252
    %2351 = vmatprep.subr.mxu0 %v1245
    %2352 = vmatpush2.msra.mxu0 %v1244
    %2353 = vmatprep.subr.mxu0 %v1237
    %2354 = vmatpush2.msra.mxu0 %v1236
    %2355 = vmatprep.mubr.f32.mxu0 %v2075
    %2356 = vmatmul.mubr.f32.gmra.mxu0 %v2074
    %v2357 = vpop.f32.mrf.mxu0
    %v2358 = vadd.f32 0.0, %v2357
    %v2359 = vpop.f32.mrf.mxu0
    %v2360 = vadd.f32 0.0, %v2359
    %2361 = vdwg.mxu0
    %v2370 = vrot.slane %v2145, 4
    %v2371 = vrot.slane %v2147, 4
    %v2372 = vrot.slane %v2216, 4
    %v2373 = vrot.slane %v2218, 4
    %v2374 = vrot.slane %v2287, 4
    %v2375 = vrot.slane %v2289, 4
    %v2376 = vrot.slane %v2358, 4
    %v2377 = vrot.slane %v2360, 4
    %v2386 = vadd.f32 %v630, %v2370
    %v2387 = vadd.f32 %v632, %v2371
    %v2388 = vadd.f32 %v784, %v2372
    %v2389 = vadd.f32 %v786, %v2373
    %v2390 = vadd.f32 %v938, %v2374
    %v2391 = vadd.f32 %v940, %v2375
    %v2392 = vadd.f32 %v1092, %v2376
    %v2393 = vadd.f32 %v1094, %v2377
    %v2394 = vxor.u32 %v2386, 2147483648
    %v2395 = vxor.u32 %v2387, 2147483648
    %v2396 = vmul.f32 %v2394, 1.442695
    %v2397 = vpow.pop %v2396
    %v2398 = vmul.f32 %v2395, 1.442695
    %v2399 = vpow.pop %v2398
    %v2400 = vadd.f32 %v2397, 1.0
    %v2401 = vadd.f32 %v2399, 1.0
    %v2402 = vrcp.pop %v2400
    %v2403 = vmul.f32 1.0, %v2402
    %v2404 = vrcp.pop %v2401
    %v2405 = vmul.f32 1.0, %v2404
    %v2406 = vxor.u32 %v2388, 2147483648
    %v2407 = vxor.u32 %v2389, 2147483648
    %v2408 = vmul.f32 %v2406, 1.442695
    %v2409 = vpow.pop %v2408
    %v2410 = vmul.f32 %v2407, 1.442695
    %v2411 = vpow.pop %v2410
    %v2412 = vadd.f32 %v2409, 1.0
    %v2413 = vadd.f32 %v2411, 1.0
    %v2414 = vrcp.pop %v2412
    %v2415 = vmul.f32 1.0, %v2414
    %v2416 = vrcp.pop %v2413
    %v2417 = vmul.f32 1.0, %v2416
    %v2418 = vtanh.pop %v2390
    %v2419 = vtanh.pop %v2391
    %v2420 = vxor.u32 %v2392, 2147483648
    %v2421 = vxor.u32 %v2393, 2147483648
    %v2422 = vmul.f32 %v2420, 1.442695
    %v2423 = vpow.pop %v2422
    %v2424 = vmul.f32 %v2421, 1.442695
    %v2425 = vpow.pop %v2424
    %v2426 = vadd.f32 %v2423, 1.0
    %v2427 = vadd.f32 %v2425, 1.0
    %v2428 = vrcp.pop %v2426
    %v2429 = vmul.f32 1.0, %v2428
    %v2430 = vrcp.pop %v2427
    %v2431 = vmul.f32 1.0, %v2430
    %v2434 = vrot.slane %v2064, 6
    %v2435 = vrot.slane %v2065, 6
    %v2438 = vmul.f32 %v2415, %v2434
    %v2439 = vmul.f32 %v2417, %v2435
    %v2440 = vmul.f32 %v2403, %v2418
    %v2441 = vmul.f32 %v2405, %v2419
    %v2442 = vadd.f32 %v2438, %v2440
    %v2443 = vadd.f32 %v2439, %v2441
    %v2444 = vtanh.pop %v2442
    %v2445 = vtanh.pop %v2443
    %v2446 = vmul.f32 %v2429, %v2444
    %v2447 = vmul.f32 %v2431, %v2445
    %2448 = vst [vmem:[#allocation2] sm:$0x30] %v2446
    %2449 = vst [vmem:[#allocation2 + $0x8] sm:$0x30] %v2447
    %v2452 = vrot.slane %v2446, 4
    %v2453 = vrot.slane %v2447, 4
    %2456 = vmatprep.subr.mxu0 %v1223
    %2457 = vmatpush1.msra.mxu0 %v1222
    %2458 = vmatprep.subr.mxu0 %v1215
    %2459 = vmatpush1.msra.mxu0 %v1214
    %2460 = vmatprep.subr.mxu0 %v1207
    %2461 = vmatpush1.msra.mxu0 %v1206
    %2462 = vmatprep.subr.mxu0 %v1199
    %2463 = vmatpush1.msra.mxu0 %v1198
    %2464 = vmatprep.subr.mxu0 %v1191
    %2465 = vmatpush1.msra.mxu0 %v1190
    %2466 = vmatprep.subr.mxu0 %v1183
    %2467 = vmatpush1.msra.mxu0 %v1182
    %2468 = vmatprep.subr.mxu0 %v1175
    %2469 = vmatpush1.msra.mxu0 %v1174
    %2470 = vmatprep.subr.mxu0 %v1167
    %2471 = vmatpush1.msra.mxu0 %v1166
    %2472 = vmatprep.subr.mxu0 %v1159
    %2473 = vmatpush1.msra.mxu0 %v1158
    %2474 = vmatprep.subr.mxu0 %v1151
    %2475 = vmatpush1.msra.mxu0 %v1150
    %2476 = vmatprep.subr.mxu0 %v1143
    %2477 = vmatpush1.msra.mxu0 %v1142
    %2478 = vmatprep.subr.mxu0 %v1135
    %2479 = vmatpush1.msra.mxu0 %v1134
    %2480 = vmatprep.subr.mxu0 %v1127
    %2481 = vmatpush1.msra.mxu0 %v1126
    %2482 = vmatprep.subr.mxu0 %v1119
    %2483 = vmatpush1.msra.mxu0 %v1118
    %2484 = vmatprep.subr.mxu0 %v1111
    %2485 = vmatpush1.msra.mxu0 %v1110
    %2486 = vmatprep.subr.mxu0 %v1103
    %2487 = vmatpush1.msra.mxu0 %v1102
    %2488 = vmatprep.subr.mxu0 %v1351
    %2489 = vmatpush2.msra.mxu0 %v1350
    %2490 = vmatprep.subr.mxu0 %v1343
    %2491 = vmatpush2.msra.mxu0 %v1342
    %2492 = vmatprep.subr.mxu0 %v1335
    %2493 = vmatpush2.msra.mxu0 %v1334
    %2494 = vmatprep.subr.mxu0 %v1327
    %2495 = vmatpush2.msra.mxu0 %v1326
    %2496 = vmatprep.subr.mxu0 %v1319
    %2497 = vmatpush2.msra.mxu0 %v1318
    %2498 = vmatprep.subr.mxu0 %v1311
    %2499 = vmatpush2.msra.mxu0 %v1310
    %2500 = vmatprep.subr.mxu0 %v1303
    %2501 = vmatpush2.msra.mxu0 %v1302
    %2502 = vmatprep.subr.mxu0 %v1295
    %2503 = vmatpush2.msra.mxu0 %v1294
    %2504 = vmatprep.subr.mxu0 %v1287
    %2505 = vmatpush2.msra.mxu0 %v1286
    %2506 = vmatprep.subr.mxu0 %v1279
    %2507 = vmatpush2.msra.mxu0 %v1278
    %2508 = vmatprep.subr.mxu0 %v1271
    %2509 = vmatpush2.msra.mxu0 %v1270
    %2510 = vmatprep.subr.mxu0 %v1263
    %2511 = vmatpush2.msra.mxu0 %v1262
    %2512 = vmatprep.subr.mxu0 %v1255
    %2513 = vmatpush2.msra.mxu0 %v1254
    %2514 = vmatprep.subr.mxu0 %v1247
    %2515 = vmatpush2.msra.mxu0 %v1246
    %2516 = vmatprep.subr.mxu0 %v1239
    %2517 = vmatpush2.msra.mxu0 %v1238
    %2518 = vmatprep.subr.mxu0 %v1231
    %2519 = vmatpush2.msra.mxu0 %v1230
    %2520 = vmatprep.mubr.f32.mxu0 %v2453
    %2521 = vmatmul.mubr.f32.gmra.mxu0 %v2452
    %v2522 = vpop.f32.mrf.mxu0
    %v2523 = vadd.f32 0.0, %v2522
    %v2524 = vpop.f32.mrf.mxu0
    %v2525 = vadd.f32 0.0, %v2524
    %2526 = vdwg.mxu0
    %2527 = vmatprep.subr.mxu0 %v1225
    %2528 = vmatpush1.msra.mxu0 %v1224
    %2529 = vmatprep.subr.mxu0 %v1217
    %2530 = vmatpush1.msra.mxu0 %v1216
    %2531 = vmatprep.subr.mxu0 %v1209
    %2532 = vmatpush1.msra.mxu0 %v1208
    %2533 = vmatprep.subr.mxu0 %v1201
    %2534 = vmatpush1.msra.mxu0 %v1200
    %2535 = vmatprep.subr.mxu0 %v1193
    %2536 = vmatpush1.msra.mxu0 %v1192
    %2537 = vmatprep.subr.mxu0 %v1185
    %2538 = vmatpush1.msra.mxu0 %v1184
    %2539 = vmatprep.subr.mxu0 %v1177
    %2540 = vmatpush1.msra.mxu0 %v1176
    %2541 = vmatprep.subr.mxu0 %v1169
    %2542 = vmatpush1.msra.mxu0 %v1168
    %2543 = vmatprep.subr.mxu0 %v1161
    %2544 = vmatpush1.msra.mxu0 %v1160
    %2545 = vmatprep.subr.mxu0 %v1153
    %2546 = vmatpush1.msra.mxu0 %v1152
    %2547 = vmatprep.subr.mxu0 %v1145
    %2548 = vmatpush1.msra.mxu0 %v1144
    %2549 = vmatprep.subr.mxu0 %v1137
    %2550 = vmatpush1.msra.mxu0 %v1136
    %2551 = vmatprep.subr.mxu0 %v1129
    %2552 = vmatpush1.msra.mxu0 %v1128
    %2553 = vmatprep.subr.mxu0 %v1121
    %2554 = vmatpush1.msra.mxu0 %v1120
    %2555 = vmatprep.subr.mxu0 %v1113
    %2556 = vmatpush1.msra.mxu0 %v1112
    %2557 = vmatprep.subr.mxu0 %v1105
    %2558 = vmatpush1.msra.mxu0 %v1104
    %2559 = vmatprep.subr.mxu0 %v1353
    %2560 = vmatpush2.msra.mxu0 %v1352
    %2561 = vmatprep.subr.mxu0 %v1345
    %2562 = vmatpush2.msra.mxu0 %v1344
    %2563 = vmatprep.subr.mxu0 %v1337
    %2564 = vmatpush2.msra.mxu0 %v1336
    %2565 = vmatprep.subr.mxu0 %v1329
    %2566 = vmatpush2.msra.mxu0 %v1328
    %2567 = vmatprep.subr.mxu0 %v1321
    %2568 = vmatpush2.msra.mxu0 %v1320
    %2569 = vmatprep.subr.mxu0 %v1313
    %2570 = vmatpush2.msra.mxu0 %v1312
    %2571 = vmatprep.subr.mxu0 %v1305
    %2572 = vmatpush2.msra.mxu0 %v1304
    %2573 = vmatprep.subr.mxu0 %v1297
    %2574 = vmatpush2.msra.mxu0 %v1296
    %2575 = vmatprep.subr.mxu0 %v1289
    %2576 = vmatpush2.msra.mxu0 %v1288
    %2577 = vmatprep.subr.mxu0 %v1281
    %2578 = vmatpush2.msra.mxu0 %v1280
    %2579 = vmatprep.subr.mxu0 %v1273
    %2580 = vmatpush2.msra.mxu0 %v1272
    %2581 = vmatprep.subr.mxu0 %v1265
    %2582 = vmatpush2.msra.mxu0 %v1264
    %2583 = vmatprep.subr.mxu0 %v1257
    %2584 = vmatpush2.msra.mxu0 %v1256
    %2585 = vmatprep.subr.mxu0 %v1249
    %2586 = vmatpush2.msra.mxu0 %v1248
    %2587 = vmatprep.subr.mxu0 %v1241
    %2588 = vmatpush2.msra.mxu0 %v1240
    %2589 = vmatprep.subr.mxu0 %v1233
    %2590 = vmatpush2.msra.mxu0 %v1232
    %2591 = vmatprep.mubr.f32.mxu0 %v2453
    %2592 = vmatmul.mubr.f32.gmra.mxu0 %v2452
    %v2593 = vpop.f32.mrf.mxu0
    %v2594 = vadd.f32 0.0, %v2593
    %v2595 = vpop.f32.mrf.mxu0
    %v2596 = vadd.f32 0.0, %v2595
    %2597 = vdwg.mxu0
    %2598 = vmatprep.subr.mxu0 %v1227
    %2599 = vmatpush1.msra.mxu0 %v1226
    %2600 = vmatprep.subr.mxu0 %v1219
    %2601 = vmatpush1.msra.mxu0 %v1218
    %2602 = vmatprep.subr.mxu0 %v1211
    %2603 = vmatpush1.msra.mxu0 %v1210
    %2604 = vmatprep.subr.mxu0 %v1203
    %2605 = vmatpush1.msra.mxu0 %v1202
    %2606 = vmatprep.subr.mxu0 %v1195
    %2607 = vmatpush1.msra.mxu0 %v1194
    %2608 = vmatprep.subr.mxu0 %v1187
    %2609 = vmatpush1.msra.mxu0 %v1186
    %2610 = vmatprep.subr.mxu0 %v1179
    %2611 = vmatpush1.msra.mxu0 %v1178
    %2612 = vmatprep.subr.mxu0 %v1171
    %2613 = vmatpush1.msra.mxu0 %v1170
    %2614 = vmatprep.subr.mxu0 %v1163
    %2615 = vmatpush1.msra.mxu0 %v1162
    %2616 = vmatprep.subr.mxu0 %v1155
    %2617 = vmatpush1.msra.mxu0 %v1154
    %2618 = vmatprep.subr.mxu0 %v1147
    %2619 = vmatpush1.msra.mxu0 %v1146
    %2620 = vmatprep.subr.mxu0 %v1139
    %2621 = vmatpush1.msra.mxu0 %v1138
    %2622 = vmatprep.subr.mxu0 %v1131
    %2623 = vmatpush1.msra.mxu0 %v1130
    %2624 = vmatprep.subr.mxu0 %v1123
    %2625 = vmatpush1.msra.mxu0 %v1122
    %2626 = vmatprep.subr.mxu0 %v1115
    %2627 = vmatpush1.msra.mxu0 %v1114
    %2628 = vmatprep.subr.mxu0 %v1107
    %2629 = vmatpush1.msra.mxu0 %v1106
    %2630 = vmatprep.subr.mxu0 %v1355
    %2631 = vmatpush2.msra.mxu0 %v1354
    %2632 = vmatprep.subr.mxu0 %v1347
    %2633 = vmatpush2.msra.mxu0 %v1346
    %2634 = vmatprep.subr.mxu0 %v1339
    %2635 = vmatpush2.msra.mxu0 %v1338
    %2636 = vmatprep.subr.mxu0 %v1331
    %2637 = vmatpush2.msra.mxu0 %v1330
    %2638 = vmatprep.subr.mxu0 %v1323
    %2639 = vmatpush2.msra.mxu0 %v1322
    %2640 = vmatprep.subr.mxu0 %v1315
    %2641 = vmatpush2.msra.mxu0 %v1314
    %2642 = vmatprep.subr.mxu0 %v1307
    %2643 = vmatpush2.msra.mxu0 %v1306
    %2644 = vmatprep.subr.mxu0 %v1299
    %2645 = vmatpush2.msra.mxu0 %v1298
    %2646 = vmatprep.subr.mxu0 %v1291
    %2647 = vmatpush2.msra.mxu0 %v1290
    %2648 = vmatprep.subr.mxu0 %v1283
    %2649 = vmatpush2.msra.mxu0 %v1282
    %2650 = vmatprep.subr.mxu0 %v1275
    %2651 = vmatpush2.msra.mxu0 %v1274
    %2652 = vmatprep.subr.mxu0 %v1267
    %2653 = vmatpush2.msra.mxu0 %v1266
    %2654 = vmatprep.subr.mxu0 %v1259
    %2655 = vmatpush2.msra.mxu0 %v1258
    %2656 = vmatprep.subr.mxu0 %v1251
    %2657 = vmatpush2.msra.mxu0 %v1250
    %2658 = vmatprep.subr.mxu0 %v1243
    %2659 = vmatpush2.msra.mxu0 %v1242
    %2660 = vmatprep.subr.mxu0 %v1235
    %2661 = vmatpush2.msra.mxu0 %v1234
    %2662 = vmatprep.mubr.f32.mxu0 %v2453
    %2663 = vmatmul.mubr.f32.gmra.mxu0 %v2452
    %v2664 = vpop.f32.mrf.mxu0
    %v2665 = vadd.f32 0.0, %v2664
    %v2666 = vpop.f32.mrf.mxu0
    %v2667 = vadd.f32 0.0, %v2666
    %2668 = vdwg.mxu0
    %2669 = vmatprep.subr.mxu0 %v1229
    %2670 = vmatpush1.msra.mxu0 %v1228
    %2671 = vmatprep.subr.mxu0 %v1221
    %2672 = vmatpush1.msra.mxu0 %v1220
    %2673 = vmatprep.subr.mxu0 %v1213
    %2674 = vmatpush1.msra.mxu0 %v1212
    %2675 = vmatprep.subr.mxu0 %v1205
    %2676 = vmatpush1.msra.mxu0 %v1204
    %2677 = vmatprep.subr.mxu0 %v1197
    %2678 = vmatpush1.msra.mxu0 %v1196
    %2679 = vmatprep.subr.mxu0 %v1189
    %2680 = vmatpush1.msra.mxu0 %v1188
    %2681 = vmatprep.subr.mxu0 %v1181
    %2682 = vmatpush1.msra.mxu0 %v1180
    %2683 = vmatprep.subr.mxu0 %v1173
    %2684 = vmatpush1.msra.mxu0 %v1172
    %2685 = vmatprep.subr.mxu0 %v1165
    %2686 = vmatpush1.msra.mxu0 %v1164
    %2687 = vmatprep.subr.mxu0 %v1157
    %2688 = vmatpush1.msra.mxu0 %v1156
    %2689 = vmatprep.subr.mxu0 %v1149
    %2690 = vmatpush1.msra.mxu0 %v1148
    %2691 = vmatprep.subr.mxu0 %v1141
    %2692 = vmatpush1.msra.mxu0 %v1140
    %2693 = vmatprep.subr.mxu0 %v1133
    %2694 = vmatpush1.msra.mxu0 %v1132
    %2695 = vmatprep.subr.mxu0 %v1125
    %2696 = vmatpush1.msra.mxu0 %v1124
    %2697 = vmatprep.subr.mxu0 %v1117
    %2698 = vmatpush1.msra.mxu0 %v1116
    %2699 = vmatprep.subr.mxu0 %v1109
    %2700 = vmatpush1.msra.mxu0 %v1108
    %2701 = vmatprep.subr.mxu0 %v1357
    %2702 = vmatpush2.msra.mxu0 %v1356
    %2703 = vmatprep.subr.mxu0 %v1349
    %2704 = vmatpush2.msra.mxu0 %v1348
    %2705 = vmatprep.subr.mxu0 %v1341
    %2706 = vmatpush2.msra.mxu0 %v1340
    %2707 = vmatprep.subr.mxu0 %v1333
    %2708 = vmatpush2.msra.mxu0 %v1332
    %2709 = vmatprep.subr.mxu0 %v1325
    %2710 = vmatpush2.msra.mxu0 %v1324
    %2711 = vmatprep.subr.mxu0 %v1317
    %2712 = vmatpush2.msra.mxu0 %v1316
    %2713 = vmatprep.subr.mxu0 %v1309
    %2714 = vmatpush2.msra.mxu0 %v1308
    %2715 = vmatprep.subr.mxu0 %v1301
    %2716 = vmatpush2.msra.mxu0 %v1300
    %2717 = vmatprep.subr.mxu0 %v1293
    %2718 = vmatpush2.msra.mxu0 %v1292
    %2719 = vmatprep.subr.mxu0 %v1285
    %2720 = vmatpush2.msra.mxu0 %v1284
    %2721 = vmatprep.subr.mxu0 %v1277
    %2722 = vmatpush2.msra.mxu0 %v1276
    %2723 = vmatprep.subr.mxu0 %v1269
    %2724 = vmatpush2.msra.mxu0 %v1268
    %2725 = vmatprep.subr.mxu0 %v1261
    %2726 = vmatpush2.msra.mxu0 %v1260
    %2727 = vmatprep.subr.mxu0 %v1253
    %2728 = vmatpush2.msra.mxu0 %v1252
    %2729 = vmatprep.subr.mxu0 %v1245
    %2730 = vmatpush2.msra.mxu0 %v1244
    %2731 = vmatprep.subr.mxu0 %v1237
    %2732 = vmatpush2.msra.mxu0 %v1236
    %2733 = vmatprep.mubr.f32.mxu0 %v2453
    %2734 = vmatmul.mubr.f32.gmra.mxu0 %v2452
    %v2735 = vpop.f32.mrf.mxu0
    %v2736 = vadd.f32 0.0, %v2735
    %v2737 = vpop.f32.mrf.mxu0
    %v2738 = vadd.f32 0.0, %v2737
    %2739 = vdwg.mxu0
    %v2748 = vrot.slane %v2523, 2
    %v2749 = vrot.slane %v2525, 2
    %v2750 = vrot.slane %v2594, 2
    %v2751 = vrot.slane %v2596, 2
    %v2752 = vrot.slane %v2665, 2
    %v2753 = vrot.slane %v2667, 2
    %v2754 = vrot.slane %v2736, 2
    %v2755 = vrot.slane %v2738, 2
    %v2764 = vadd.f32 %v630, %v2748
    %v2765 = vadd.f32 %v632, %v2749
    %v2766 = vadd.f32 %v784, %v2750
    %v2767 = vadd.f32 %v786, %v2751
    %v2768 = vadd.f32 %v938, %v2752
    %v2769 = vadd.f32 %v940, %v2753
    %v2770 = vadd.f32 %v1092, %v2754
    %v2771 = vadd.f32 %v1094, %v2755
    %v2772 = vxor.u32 %v2764, 2147483648
    %v2773 = vxor.u32 %v2765, 2147483648
    %v2774 = vmul.f32 %v2772, 1.442695
    %v2775 = vpow.pop %v2774
    %v2776 = vmul.f32 %v2773, 1.442695
    %v2777 = vpow.pop %v2776
    %v2778 = vadd.f32 %v2775, 1.0
    %v2779 = vadd.f32 %v2777, 1.0
    %v2780 = vrcp.pop %v2778
    %v2781 = vmul.f32 1.0, %v2780
    %v2782 = vrcp.pop %v2779
    %v2783 = vmul.f32 1.0, %v2782
    %v2784 = vxor.u32 %v2766, 2147483648
    %v2785 = vxor.u32 %v2767, 2147483648
    %v2786 = vmul.f32 %v2784, 1.442695
    %v2787 = vpow.pop %v2786
    %v2788 = vmul.f32 %v2785, 1.442695
    %v2789 = vpow.pop %v2788
    %v2790 = vadd.f32 %v2787, 1.0
    %v2791 = vadd.f32 %v2789, 1.0
    %v2792 = vrcp.pop %v2790
    %v2793 = vmul.f32 1.0, %v2792
    %v2794 = vrcp.pop %v2791
    %v2795 = vmul.f32 1.0, %v2794
    %v2796 = vtanh.pop %v2768
    %v2797 = vtanh.pop %v2769
    %v2798 = vxor.u32 %v2770, 2147483648
    %v2799 = vxor.u32 %v2771, 2147483648
    %v2800 = vmul.f32 %v2798, 1.442695
    %v2801 = vpow.pop %v2800
    %v2802 = vmul.f32 %v2799, 1.442695
    %v2803 = vpow.pop %v2802
    %v2804 = vadd.f32 %v2801, 1.0
    %v2805 = vadd.f32 %v2803, 1.0
    %v2806 = vrcp.pop %v2804
    %v2807 = vmul.f32 1.0, %v2806
    %v2808 = vrcp.pop %v2805
    %v2809 = vmul.f32 1.0, %v2808
    %v2812 = vrot.slane %v2442, 6
    %v2813 = vrot.slane %v2443, 6
    %v2816 = vmul.f32 %v2793, %v2812
    %v2817 = vmul.f32 %v2795, %v2813
    %v2818 = vmul.f32 %v2781, %v2796
    %v2819 = vmul.f32 %v2783, %v2797
    %v2820 = vadd.f32 %v2816, %v2818
    %v2821 = vadd.f32 %v2817, %v2819
    %v2822 = vtanh.pop %v2820
    %v2823 = vtanh.pop %v2821
    %v2824 = vmul.f32 %v2807, %v2822
    %v2825 = vmul.f32 %v2809, %v2823
    %2826 = vst [vmem:[#allocation2] sm:$0xc0] %v2824
    %2827 = vst [vmem:[#allocation2 + $0x8] sm:$0xc0] %v2825
    %v2830 = vrot.slane %v2824, 6
    %v2831 = vrot.slane %v2825, 6
    %2834 = vmatprep.subr.mxu0 %v1223
    %2835 = vmatpush1.msra.mxu0 %v1222
    %2836 = vmatprep.subr.mxu0 %v1215
    %2837 = vmatpush1.msra.mxu0 %v1214
    %2838 = vmatprep.subr.mxu0 %v1207
    %2839 = vmatpush1.msra.mxu0 %v1206
    %2840 = vmatprep.subr.mxu0 %v1199
    %2841 = vmatpush1.msra.mxu0 %v1198
    %2842 = vmatprep.subr.mxu0 %v1191
    %2843 = vmatpush1.msra.mxu0 %v1190
    %2844 = vmatprep.subr.mxu0 %v1183
    %2845 = vmatpush1.msra.mxu0 %v1182
    %2846 = vmatprep.subr.mxu0 %v1175
    %2847 = vmatpush1.msra.mxu0 %v1174
    %2848 = vmatprep.subr.mxu0 %v1167
    %2849 = vmatpush1.msra.mxu0 %v1166
    %2850 = vmatprep.subr.mxu0 %v1159
    %2851 = vmatpush1.msra.mxu0 %v1158
    %2852 = vmatprep.subr.mxu0 %v1151
    %2853 = vmatpush1.msra.mxu0 %v1150
    %2854 = vmatprep.subr.mxu0 %v1143
    %2855 = vmatpush1.msra.mxu0 %v1142
    %2856 = vmatprep.subr.mxu0 %v1135
    %2857 = vmatpush1.msra.mxu0 %v1134
    %2858 = vmatprep.subr.mxu0 %v1127
    %2859 = vmatpush1.msra.mxu0 %v1126
    %2860 = vmatprep.subr.mxu0 %v1119
    %2861 = vmatpush1.msra.mxu0 %v1118
    %2862 = vmatprep.subr.mxu0 %v1111
    %2863 = vmatpush1.msra.mxu0 %v1110
    %2864 = vmatprep.subr.mxu0 %v1103
    %2865 = vmatpush1.msra.mxu0 %v1102
    %2866 = vmatprep.subr.mxu0 %v1351
    %2867 = vmatpush2.msra.mxu0 %v1350
    %2868 = vmatprep.subr.mxu0 %v1343
    %2869 = vmatpush2.msra.mxu0 %v1342
    %2870 = vmatprep.subr.mxu0 %v1335
    %2871 = vmatpush2.msra.mxu0 %v1334
    %2872 = vmatprep.subr.mxu0 %v1327
    %2873 = vmatpush2.msra.mxu0 %v1326
    %2874 = vmatprep.subr.mxu0 %v1319
    %2875 = vmatpush2.msra.mxu0 %v1318
    %2876 = vmatprep.subr.mxu0 %v1311
    %2877 = vmatpush2.msra.mxu0 %v1310
    %2878 = vmatprep.subr.mxu0 %v1303
    %2879 = vmatpush2.msra.mxu0 %v1302
    %2880 = vmatprep.subr.mxu0 %v1295
    %2881 = vmatpush2.msra.mxu0 %v1294
    %2882 = vmatprep.subr.mxu0 %v1287
    %2883 = vmatpush2.msra.mxu0 %v1286
    %2884 = vmatprep.subr.mxu0 %v1279
    %2885 = vmatpush2.msra.mxu0 %v1278
    %2886 = vmatprep.subr.mxu0 %v1271
    %2887 = vmatpush2.msra.mxu0 %v1270
    %2888 = vmatprep.subr.mxu0 %v1263
    %2889 = vmatpush2.msra.mxu0 %v1262
    %2890 = vmatprep.subr.mxu0 %v1255
    %2891 = vmatpush2.msra.mxu0 %v1254
    %2892 = vmatprep.subr.mxu0 %v1247
    %2893 = vmatpush2.msra.mxu0 %v1246
    %2894 = vmatprep.subr.mxu0 %v1239
    %2895 = vmatpush2.msra.mxu0 %v1238
    %2896 = vmatprep.subr.mxu0 %v1231
    %2897 = vmatpush2.msra.mxu0 %v1230
    %2898 = vmatprep.mubr.f32.mxu0 %v2831
    %2899 = vmatmul.mubr.f32.gmra.mxu0 %v2830
    %v2900 = vpop.f32.mrf.mxu0
    %v2901 = vadd.f32 0.0, %v2900
    %v2902 = vpop.f32.mrf.mxu0
    %v2903 = vadd.f32 0.0, %v2902
    %2904 = vdwg.mxu0
    %2905 = vmatprep.subr.mxu0 %v1225
    %2906 = vmatpush1.msra.mxu0 %v1224
    %2907 = vmatprep.subr.mxu0 %v1217
    %2908 = vmatpush1.msra.mxu0 %v1216
    %2909 = vmatprep.subr.mxu0 %v1209
    %2910 = vmatpush1.msra.mxu0 %v1208
    %2911 = vmatprep.subr.mxu0 %v1201
    %2912 = vmatpush1.msra.mxu0 %v1200
    %2913 = vmatprep.subr.mxu0 %v1193
    %2914 = vmatpush1.msra.mxu0 %v1192
    %2915 = vmatprep.subr.mxu0 %v1185
    %2916 = vmatpush1.msra.mxu0 %v1184
    %2917 = vmatprep.subr.mxu0 %v1177
    %2918 = vmatpush1.msra.mxu0 %v1176
    %2919 = vmatprep.subr.mxu0 %v1169
    %2920 = vmatpush1.msra.mxu0 %v1168
    %2921 = vmatprep.subr.mxu0 %v1161
    %2922 = vmatpush1.msra.mxu0 %v1160
    %2923 = vmatprep.subr.mxu0 %v1153
    %2924 = vmatpush1.msra.mxu0 %v1152
    %2925 = vmatprep.subr.mxu0 %v1145
    %2926 = vmatpush1.msra.mxu0 %v1144
    %2927 = vmatprep.subr.mxu0 %v1137
    %2928 = vmatpush1.msra.mxu0 %v1136
    %2929 = vmatprep.subr.mxu0 %v1129
    %2930 = vmatpush1.msra.mxu0 %v1128
    %2931 = vmatprep.subr.mxu0 %v1121
    %2932 = vmatpush1.msra.mxu0 %v1120
    %2933 = vmatprep.subr.mxu0 %v1113
    %2934 = vmatpush1.msra.mxu0 %v1112
    %2935 = vmatprep.subr.mxu0 %v1105
    %2936 = vmatpush1.msra.mxu0 %v1104
    %2937 = vmatprep.subr.mxu0 %v1353
    %2938 = vmatpush2.msra.mxu0 %v1352
    %2939 = vmatprep.subr.mxu0 %v1345
    %2940 = vmatpush2.msra.mxu0 %v1344
    %2941 = vmatprep.subr.mxu0 %v1337
    %2942 = vmatpush2.msra.mxu0 %v1336
    %2943 = vmatprep.subr.mxu0 %v1329
    %2944 = vmatpush2.msra.mxu0 %v1328
    %2945 = vmatprep.subr.mxu0 %v1321
    %2946 = vmatpush2.msra.mxu0 %v1320
    %2947 = vmatprep.subr.mxu0 %v1313
    %2948 = vmatpush2.msra.mxu0 %v1312
    %2949 = vmatprep.subr.mxu0 %v1305
    %2950 = vmatpush2.msra.mxu0 %v1304
    %2951 = vmatprep.subr.mxu0 %v1297
    %2952 = vmatpush2.msra.mxu0 %v1296
    %2953 = vmatprep.subr.mxu0 %v1289
    %2954 = vmatpush2.msra.mxu0 %v1288
    %2955 = vmatprep.subr.mxu0 %v1281
    %2956 = vmatpush2.msra.mxu0 %v1280
    %2957 = vmatprep.subr.mxu0 %v1273
    %2958 = vmatpush2.msra.mxu0 %v1272
    %2959 = vmatprep.subr.mxu0 %v1265
    %2960 = vmatpush2.msra.mxu0 %v1264
    %2961 = vmatprep.subr.mxu0 %v1257
    %2962 = vmatpush2.msra.mxu0 %v1256
    %2963 = vmatprep.subr.mxu0 %v1249
    %2964 = vmatpush2.msra.mxu0 %v1248
    %2965 = vmatprep.subr.mxu0 %v1241
    %2966 = vmatpush2.msra.mxu0 %v1240
    %2967 = vmatprep.subr.mxu0 %v1233
    %2968 = vmatpush2.msra.mxu0 %v1232
    %2969 = vmatprep.mubr.f32.mxu0 %v2831
    %2970 = vmatmul.mubr.f32.gmra.mxu0 %v2830
    %v2971 = vpop.f32.mrf.mxu0
    %v2972 = vadd.f32 0.0, %v2971
    %v2973 = vpop.f32.mrf.mxu0
    %v2974 = vadd.f32 0.0, %v2973
    %2975 = vdwg.mxu0
    %2976 = vmatprep.subr.mxu0 %v1227
    %2977 = vmatpush1.msra.mxu0 %v1226
    %2978 = vmatprep.subr.mxu0 %v1219
    %2979 = vmatpush1.msra.mxu0 %v1218
    %2980 = vmatprep.subr.mxu0 %v1211
    %2981 = vmatpush1.msra.mxu0 %v1210
    %2982 = vmatprep.subr.mxu0 %v1203
    %2983 = vmatpush1.msra.mxu0 %v1202
    %2984 = vmatprep.subr.mxu0 %v1195
    %2985 = vmatpush1.msra.mxu0 %v1194
    %2986 = vmatprep.subr.mxu0 %v1187
    %2987 = vmatpush1.msra.mxu0 %v1186
    %2988 = vmatprep.subr.mxu0 %v1179
    %2989 = vmatpush1.msra.mxu0 %v1178
    %2990 = vmatprep.subr.mxu0 %v1171
    %2991 = vmatpush1.msra.mxu0 %v1170
    %2992 = vmatprep.subr.mxu0 %v1163
    %2993 = vmatpush1.msra.mxu0 %v1162
    %2994 = vmatprep.subr.mxu0 %v1155
    %2995 = vmatpush1.msra.mxu0 %v1154
    %2996 = vmatprep.subr.mxu0 %v1147
    %2997 = vmatpush1.msra.mxu0 %v1146
    %2998 = vmatprep.subr.mxu0 %v1139
    %2999 = vmatpush1.msra.mxu0 %v1138
    %3000 = vmatprep.subr.mxu0 %v1131
    %3001 = vmatpush1.msra.mxu0 %v1130
    %3002 = vmatprep.subr.mxu0 %v1123
    %3003 = vmatpush1.msra.mxu0 %v1122
    %3004 = vmatprep.subr.mxu0 %v1115
    %3005 = vmatpush1.msra.mxu0 %v1114
    %3006 = vmatprep.subr.mxu0 %v1107
    %3007 = vmatpush1.msra.mxu0 %v1106
    %3008 = vmatprep.subr.mxu0 %v1355
    %3009 = vmatpush2.msra.mxu0 %v1354
    %3010 = vmatprep.subr.mxu0 %v1347
    %3011 = vmatpush2.msra.mxu0 %v1346
    %3012 = vmatprep.subr.mxu0 %v1339
    %3013 = vmatpush2.msra.mxu0 %v1338
    %3014 = vmatprep.subr.mxu0 %v1331
    %3015 = vmatpush2.msra.mxu0 %v1330
    %3016 = vmatprep.subr.mxu0 %v1323
    %3017 = vmatpush2.msra.mxu0 %v1322
    %3018 = vmatprep.subr.mxu0 %v1315
    %3019 = vmatpush2.msra.mxu0 %v1314
    %3020 = vmatprep.subr.mxu0 %v1307
    %3021 = vmatpush2.msra.mxu0 %v1306
    %3022 = vmatprep.subr.mxu0 %v1299
    %3023 = vmatpush2.msra.mxu0 %v1298
    %3024 = vmatprep.subr.mxu0 %v1291
    %3025 = vmatpush2.msra.mxu0 %v1290
    %3026 = vmatprep.subr.mxu0 %v1283
    %3027 = vmatpush2.msra.mxu0 %v1282
    %3028 = vmatprep.subr.mxu0 %v1275
    %3029 = vmatpush2.msra.mxu0 %v1274
    %3030 = vmatprep.subr.mxu0 %v1267
    %3031 = vmatpush2.msra.mxu0 %v1266
    %3032 = vmatprep.subr.mxu0 %v1259
    %3033 = vmatpush2.msra.mxu0 %v1258
    %3034 = vmatprep.subr.mxu0 %v1251
    %3035 = vmatpush2.msra.mxu0 %v1250
    %3036 = vmatprep.subr.mxu0 %v1243
    %3037 = vmatpush2.msra.mxu0 %v1242
    %3038 = vmatprep.subr.mxu0 %v1235
    %3039 = vmatpush2.msra.mxu0 %v1234
    %3040 = vmatprep.mubr.f32.mxu0 %v2831
    %3041 = vmatmul.mubr.f32.gmra.mxu0 %v2830
    %v3042 = vpop.f32.mrf.mxu0
    %v3043 = vadd.f32 0.0, %v3042
    %v3044 = vpop.f32.mrf.mxu0
    %v3045 = vadd.f32 0.0, %v3044
    %3046 = vdwg.mxu0
    %3047 = vmatprep.subr.mxu0 %v1229
    %3048 = vmatpush1.msra.mxu0 %v1228
    %3049 = vmatprep.subr.mxu0 %v1221
    %3050 = vmatpush1.msra.mxu0 %v1220
    %3051 = vmatprep.subr.mxu0 %v1213
    %3052 = vmatpush1.msra.mxu0 %v1212
    %3053 = vmatprep.subr.mxu0 %v1205
    %3054 = vmatpush1.msra.mxu0 %v1204
    %3055 = vmatprep.subr.mxu0 %v1197
    %3056 = vmatpush1.msra.mxu0 %v1196
    %3057 = vmatprep.subr.mxu0 %v1189
    %3058 = vmatpush1.msra.mxu0 %v1188
    %3059 = vmatprep.subr.mxu0 %v1181
    %3060 = vmatpush1.msra.mxu0 %v1180
    %3061 = vmatprep.subr.mxu0 %v1173
    %3062 = vmatpush1.msra.mxu0 %v1172
    %3063 = vmatprep.subr.mxu0 %v1165
    %3064 = vmatpush1.msra.mxu0 %v1164
    %3065 = vmatprep.subr.mxu0 %v1157
    %3066 = vmatpush1.msra.mxu0 %v1156
    %3067 = vmatprep.subr.mxu0 %v1149
    %3068 = vmatpush1.msra.mxu0 %v1148
    %3069 = vmatprep.subr.mxu0 %v1141
    %3070 = vmatpush1.msra.mxu0 %v1140
    %3071 = vmatprep.subr.mxu0 %v1133
    %3072 = vmatpush1.msra.mxu0 %v1132
    %3073 = vmatprep.subr.mxu0 %v1125
    %3074 = vmatpush1.msra.mxu0 %v1124
    %3075 = vmatprep.subr.mxu0 %v1117
    %3076 = vmatpush1.msra.mxu0 %v1116
    %3077 = vmatprep.subr.mxu0 %v1109
    %3078 = vmatpush1.msra.mxu0 %v1108
    %3079 = vmatprep.subr.mxu0 %v1357
    %3080 = vmatpush2.msra.mxu0 %v1356
    %3081 = vmatprep.subr.mxu0 %v1349
    %3082 = vmatpush2.msra.mxu0 %v1348
    %3083 = vmatprep.subr.mxu0 %v1341
    %3084 = vmatpush2.msra.mxu0 %v1340
    %3085 = vmatprep.subr.mxu0 %v1333
    %3086 = vmatpush2.msra.mxu0 %v1332
    %3087 = vmatprep.subr.mxu0 %v1325
    %3088 = vmatpush2.msra.mxu0 %v1324
    %3089 = vmatprep.subr.mxu0 %v1317
    %3090 = vmatpush2.msra.mxu0 %v1316
    %3091 = vmatprep.subr.mxu0 %v1309
    %3092 = vmatpush2.msra.mxu0 %v1308
    %3093 = vmatprep.subr.mxu0 %v1301
    %3094 = vmatpush2.msra.mxu0 %v1300
    %3095 = vmatprep.subr.mxu0 %v1293
    %3096 = vmatpush2.msra.mxu0 %v1292
    %3097 = vmatprep.subr.mxu0 %v1285
    %3098 = vmatpush2.msra.mxu0 %v1284
    %3099 = vmatprep.subr.mxu0 %v1277
    %3100 = vmatpush2.msra.mxu0 %v1276
    %3101 = vmatprep.subr.mxu0 %v1269
    %3102 = vmatpush2.msra.mxu0 %v1268
    %3103 = vmatprep.subr.mxu0 %v1261
    %3104 = vmatpush2.msra.mxu0 %v1260
    %3105 = vmatprep.subr.mxu0 %v1253
    %3106 = vmatpush2.msra.mxu0 %v1252
    %3107 = vmatprep.subr.mxu0 %v1245
    %3108 = vmatpush2.msra.mxu0 %v1244
    %3109 = vmatprep.subr.mxu0 %v1237
    %3110 = vmatpush2.msra.mxu0 %v1236
    %3111 = vmatprep.mubr.f32.mxu0 %v2831
    %3112 = vmatmul.mubr.f32.gmra.mxu0 %v2830
    %v3113 = vpop.f32.mrf.mxu0
    %v3114 = vadd.f32 0.0, %v3113
    %v3115 = vpop.f32.mrf.mxu0
    %v3116 = vadd.f32 0.0, %v3115
    %3117 = vdwg.mxu0
    %v3118 = vadd.f32 %v636, %v2901
    %v3119 = vadd.f32 %v638, %v2903
    %v3120 = vadd.f32 %v790, %v2972
    %v3121 = vadd.f32 %v792, %v2974
    %v3122 = vadd.f32 %v944, %v3043
    %v3123 = vadd.f32 %v946, %v3045
    %v3124 = vadd.f32 %v1098, %v3114
    %v3125 = vadd.f32 %v1100, %v3116
    %v3126 = vxor.u32 %v3118, 2147483648
    %v3127 = vxor.u32 %v3119, 2147483648
    %v3128 = vmul.f32 %v3126, 1.442695
    %v3129 = vpow.pop %v3128
    %v3130 = vmul.f32 %v3127, 1.442695
    %v3131 = vpow.pop %v3130
    %v3132 = vadd.f32 %v3129, 1.0
    %v3133 = vadd.f32 %v3131, 1.0
    %v3134 = vrcp.pop %v3132
    %v3135 = vmul.f32 1.0, %v3134
    %v3136 = vrcp.pop %v3133
    %v3137 = vmul.f32 1.0, %v3136
    %v3138 = vxor.u32 %v3120, 2147483648
    %v3139 = vxor.u32 %v3121, 2147483648
    %v3140 = vmul.f32 %v3138, 1.442695
    %v3141 = vpow.pop %v3140
    %v3142 = vmul.f32 %v3139, 1.442695
    %v3143 = vpow.pop %v3142
    %v3144 = vadd.f32 %v3141, 1.0
    %v3145 = vadd.f32 %v3143, 1.0
    %v3146 = vrcp.pop %v3144
    %v3147 = vmul.f32 1.0, %v3146
    %v3148 = vrcp.pop %v3145
    %v3149 = vmul.f32 1.0, %v3148
    %v3150 = vtanh.pop %v3122
    %v3151 = vtanh.pop %v3123
    %v3152 = vxor.u32 %v3124, 2147483648
    %v3153 = vxor.u32 %v3125, 2147483648
    %v3154 = vmul.f32 %v3152, 1.442695
    %v3155 = vpow.pop %v3154
    %v3156 = vmul.f32 %v3153, 1.442695
    %v3157 = vpow.pop %v3156
    %v3158 = vadd.f32 %v3155, 1.0
    %v3159 = vadd.f32 %v3157, 1.0
    %v3160 = vrcp.pop %v3158
    %v3161 = vmul.f32 1.0, %v3160
    %v3162 = vrcp.pop %v3159
    %v3163 = vmul.f32 1.0, %v3162
    %v3166 = vrot.slane %v2820, 6
    %v3167 = vrot.slane %v2821, 6
    %v3170 = vmul.f32 %v3147, %v3166
    %v3171 = vmul.f32 %v3149, %v3167
    %v3172 = vmul.f32 %v3135, %v3150
    %v3173 = vmul.f32 %v3137, %v3151
    %v3174 = vadd.f32 %v3170, %v3172
    %v3175 = vadd.f32 %v3171, %v3173
    %v3176 = vtanh.pop %v3174
    %v3177 = vtanh.pop %v3175
    %v3178 = vmul.f32 %v3161, %v3176
    %v3179 = vmul.f32 %v3163, %v3177
    %3180 = vst [vmem:[#allocation2 + $0x10] sm:$0x3] %v3178
    %3181 = vst [vmem:[#allocation2 + $0x18] sm:$0x3] %v3179
    %3182 = vmatprep.subr.mxu0 %v1223
    %3183 = vmatpush1.msra.mxu0 %v1222
    %3184 = vmatprep.subr.mxu0 %v1215
    %3185 = vmatpush1.msra.mxu0 %v1214
    %3186 = vmatprep.subr.mxu0 %v1207
    %3187 = vmatpush1.msra.mxu0 %v1206
    %3188 = vmatprep.subr.mxu0 %v1199
    %3189 = vmatpush1.msra.mxu0 %v1198
    %3190 = vmatprep.subr.mxu0 %v1191
    %3191 = vmatpush1.msra.mxu0 %v1190
    %3192 = vmatprep.subr.mxu0 %v1183
    %3193 = vmatpush1.msra.mxu0 %v1182
    %3194 = vmatprep.subr.mxu0 %v1175
    %3195 = vmatpush1.msra.mxu0 %v1174
    %3196 = vmatprep.subr.mxu0 %v1167
    %3197 = vmatpush1.msra.mxu0 %v1166
    %3198 = vmatprep.subr.mxu0 %v1159
    %3199 = vmatpush1.msra.mxu0 %v1158
    %3200 = vmatprep.subr.mxu0 %v1151
    %3201 = vmatpush1.msra.mxu0 %v1150
    %3202 = vmatprep.subr.mxu0 %v1143
    %3203 = vmatpush1.msra.mxu0 %v1142
    %3204 = vmatprep.subr.mxu0 %v1135
    %3205 = vmatpush1.msra.mxu0 %v1134
    %3206 = vmatprep.subr.mxu0 %v1127
    %3207 = vmatpush1.msra.mxu0 %v1126
    %3208 = vmatprep.subr.mxu0 %v1119
    %3209 = vmatpush1.msra.mxu0 %v1118
    %3210 = vmatprep.subr.mxu0 %v1111
    %3211 = vmatpush1.msra.mxu0 %v1110
    %3212 = vmatprep.subr.mxu0 %v1103
    %3213 = vmatpush1.msra.mxu0 %v1102
    %3214 = vmatprep.subr.mxu0 %v1351
    %3215 = vmatpush2.msra.mxu0 %v1350
    %3216 = vmatprep.subr.mxu0 %v1343
    %3217 = vmatpush2.msra.mxu0 %v1342
    %3218 = vmatprep.subr.mxu0 %v1335
    %3219 = vmatpush2.msra.mxu0 %v1334
    %3220 = vmatprep.subr.mxu0 %v1327
    %3221 = vmatpush2.msra.mxu0 %v1326
    %3222 = vmatprep.subr.mxu0 %v1319
    %3223 = vmatpush2.msra.mxu0 %v1318
    %3224 = vmatprep.subr.mxu0 %v1311
    %3225 = vmatpush2.msra.mxu0 %v1310
    %3226 = vmatprep.subr.mxu0 %v1303
    %3227 = vmatpush2.msra.mxu0 %v1302
    %3228 = vmatprep.subr.mxu0 %v1295
    %3229 = vmatpush2.msra.mxu0 %v1294
    %3230 = vmatprep.subr.mxu0 %v1287
    %3231 = vmatpush2.msra.mxu0 %v1286
    %3232 = vmatprep.subr.mxu0 %v1279
    %3233 = vmatpush2.msra.mxu0 %v1278
    %3234 = vmatprep.subr.mxu0 %v1271
    %3235 = vmatpush2.msra.mxu0 %v1270
    %3236 = vmatprep.subr.mxu0 %v1263
    %3237 = vmatpush2.msra.mxu0 %v1262
    %3238 = vmatprep.subr.mxu0 %v1255
    %3239 = vmatpush2.msra.mxu0 %v1254
    %3240 = vmatprep.subr.mxu0 %v1247
    %3241 = vmatpush2.msra.mxu0 %v1246
    %3242 = vmatprep.subr.mxu0 %v1239
    %3243 = vmatpush2.msra.mxu0 %v1238
    %3244 = vmatprep.subr.mxu0 %v1231
    %3245 = vmatpush2.msra.mxu0 %v1230
    %3246 = vmatprep.mubr.f32.mxu0 %v3179
    %3247 = vmatmul.mubr.f32.gmra.mxu0 %v3178
    %v3248 = vpop.f32.mrf.mxu0
    %v3249 = vadd.f32 0.0, %v3248
    %v3250 = vpop.f32.mrf.mxu0
    %v3251 = vadd.f32 0.0, %v3250
    %3252 = vdwg.mxu0
    %3253 = vmatprep.subr.mxu0 %v1225
    %3254 = vmatpush1.msra.mxu0 %v1224
    %3255 = vmatprep.subr.mxu0 %v1217
    %3256 = vmatpush1.msra.mxu0 %v1216
    %3257 = vmatprep.subr.mxu0 %v1209
    %3258 = vmatpush1.msra.mxu0 %v1208
    %3259 = vmatprep.subr.mxu0 %v1201
    %3260 = vmatpush1.msra.mxu0 %v1200
    %3261 = vmatprep.subr.mxu0 %v1193
    %3262 = vmatpush1.msra.mxu0 %v1192
    %3263 = vmatprep.subr.mxu0 %v1185
    %3264 = vmatpush1.msra.mxu0 %v1184
    %3265 = vmatprep.subr.mxu0 %v1177
    %3266 = vmatpush1.msra.mxu0 %v1176
    %3267 = vmatprep.subr.mxu0 %v1169
    %3268 = vmatpush1.msra.mxu0 %v1168
    %3269 = vmatprep.subr.mxu0 %v1161
    %3270 = vmatpush1.msra.mxu0 %v1160
    %3271 = vmatprep.subr.mxu0 %v1153
    %3272 = vmatpush1.msra.mxu0 %v1152
    %3273 = vmatprep.subr.mxu0 %v1145
    %3274 = vmatpush1.msra.mxu0 %v1144
    %3275 = vmatprep.subr.mxu0 %v1137
    %3276 = vmatpush1.msra.mxu0 %v1136
    %3277 = vmatprep.subr.mxu0 %v1129
    %3278 = vmatpush1.msra.mxu0 %v1128
    %3279 = vmatprep.subr.mxu0 %v1121
    %3280 = vmatpush1.msra.mxu0 %v1120
    %3281 = vmatprep.subr.mxu0 %v1113
    %3282 = vmatpush1.msra.mxu0 %v1112
    %3283 = vmatprep.subr.mxu0 %v1105
    %3284 = vmatpush1.msra.mxu0 %v1104
    %3285 = vmatprep.subr.mxu0 %v1353
    %3286 = vmatpush2.msra.mxu0 %v1352
    %3287 = vmatprep.subr.mxu0 %v1345
    %3288 = vmatpush2.msra.mxu0 %v1344
    %3289 = vmatprep.subr.mxu0 %v1337
    %3290 = vmatpush2.msra.mxu0 %v1336
    %3291 = vmatprep.subr.mxu0 %v1329
    %3292 = vmatpush2.msra.mxu0 %v1328
    %3293 = vmatprep.subr.mxu0 %v1321
    %3294 = vmatpush2.msra.mxu0 %v1320
    %3295 = vmatprep.subr.mxu0 %v1313
    %3296 = vmatpush2.msra.mxu0 %v1312
    %3297 = vmatprep.subr.mxu0 %v1305
    %3298 = vmatpush2.msra.mxu0 %v1304
    %3299 = vmatprep.subr.mxu0 %v1297
    %3300 = vmatpush2.msra.mxu0 %v1296
    %3301 = vmatprep.subr.mxu0 %v1289
    %3302 = vmatpush2.msra.mxu0 %v1288
    %3303 = vmatprep.subr.mxu0 %v1281
    %3304 = vmatpush2.msra.mxu0 %v1280
    %3305 = vmatprep.subr.mxu0 %v1273
    %3306 = vmatpush2.msra.mxu0 %v1272
    %3307 = vmatprep.subr.mxu0 %v1265
    %3308 = vmatpush2.msra.mxu0 %v1264
    %3309 = vmatprep.subr.mxu0 %v1257
    %3310 = vmatpush2.msra.mxu0 %v1256
    %3311 = vmatprep.subr.mxu0 %v1249
    %3312 = vmatpush2.msra.mxu0 %v1248
    %3313 = vmatprep.subr.mxu0 %v1241
    %3314 = vmatpush2.msra.mxu0 %v1240
    %3315 = vmatprep.subr.mxu0 %v1233
    %3316 = vmatpush2.msra.mxu0 %v1232
    %3317 = vmatprep.mubr.f32.mxu0 %v3179
    %3318 = vmatmul.mubr.f32.gmra.mxu0 %v3178
    %v3319 = vpop.f32.mrf.mxu0
    %v3320 = vadd.f32 0.0, %v3319
    %v3321 = vpop.f32.mrf.mxu0
    %v3322 = vadd.f32 0.0, %v3321
    %3323 = vdwg.mxu0
    %3324 = vmatprep.subr.mxu0 %v1227
    %3325 = vmatpush1.msra.mxu0 %v1226
    %3326 = vmatprep.subr.mxu0 %v1219
    %3327 = vmatpush1.msra.mxu0 %v1218
    %3328 = vmatprep.subr.mxu0 %v1211
    %3329 = vmatpush1.msra.mxu0 %v1210
    %3330 = vmatprep.subr.mxu0 %v1203
    %3331 = vmatpush1.msra.mxu0 %v1202
    %3332 = vmatprep.subr.mxu0 %v1195
    %3333 = vmatpush1.msra.mxu0 %v1194
    %3334 = vmatprep.subr.mxu0 %v1187
    %3335 = vmatpush1.msra.mxu0 %v1186
    %3336 = vmatprep.subr.mxu0 %v1179
    %3337 = vmatpush1.msra.mxu0 %v1178
    %3338 = vmatprep.subr.mxu0 %v1171
    %3339 = vmatpush1.msra.mxu0 %v1170
    %3340 = vmatprep.subr.mxu0 %v1163
    %3341 = vmatpush1.msra.mxu0 %v1162
    %3342 = vmatprep.subr.mxu0 %v1155
    %3343 = vmatpush1.msra.mxu0 %v1154
    %3344 = vmatprep.subr.mxu0 %v1147
    %3345 = vmatpush1.msra.mxu0 %v1146
    %3346 = vmatprep.subr.mxu0 %v1139
    %3347 = vmatpush1.msra.mxu0 %v1138
    %3348 = vmatprep.subr.mxu0 %v1131
    %3349 = vmatpush1.msra.mxu0 %v1130
    %3350 = vmatprep.subr.mxu0 %v1123
    %3351 = vmatpush1.msra.mxu0 %v1122
    %3352 = vmatprep.subr.mxu0 %v1115
    %3353 = vmatpush1.msra.mxu0 %v1114
    %3354 = vmatprep.subr.mxu0 %v1107
    %3355 = vmatpush1.msra.mxu0 %v1106
    %3356 = vmatprep.subr.mxu0 %v1355
    %3357 = vmatpush2.msra.mxu0 %v1354
    %3358 = vmatprep.subr.mxu0 %v1347
    %3359 = vmatpush2.msra.mxu0 %v1346
    %3360 = vmatprep.subr.mxu0 %v1339
    %3361 = vmatpush2.msra.mxu0 %v1338
    %3362 = vmatprep.subr.mxu0 %v1331
    %3363 = vmatpush2.msra.mxu0 %v1330
    %3364 = vmatprep.subr.mxu0 %v1323
    %3365 = vmatpush2.msra.mxu0 %v1322
    %3366 = vmatprep.subr.mxu0 %v1315
    %3367 = vmatpush2.msra.mxu0 %v1314
    %3368 = vmatprep.subr.mxu0 %v1307
    %3369 = vmatpush2.msra.mxu0 %v1306
    %3370 = vmatprep.subr.mxu0 %v1299
    %3371 = vmatpush2.msra.mxu0 %v1298
    %3372 = vmatprep.subr.mxu0 %v1291
    %3373 = vmatpush2.msra.mxu0 %v1290
    %3374 = vmatprep.subr.mxu0 %v1283
    %3375 = vmatpush2.msra.mxu0 %v1282
    %3376 = vmatprep.subr.mxu0 %v1275
    %3377 = vmatpush2.msra.mxu0 %v1274
    %3378 = vmatprep.subr.mxu0 %v1267
    %3379 = vmatpush2.msra.mxu0 %v1266
    %3380 = vmatprep.subr.mxu0 %v1259
    %3381 = vmatpush2.msra.mxu0 %v1258
    %3382 = vmatprep.subr.mxu0 %v1251
    %3383 = vmatpush2.msra.mxu0 %v1250
    %3384 = vmatprep.subr.mxu0 %v1243
    %3385 = vmatpush2.msra.mxu0 %v1242
    %3386 = vmatprep.subr.mxu0 %v1235
    %3387 = vmatpush2.msra.mxu0 %v1234
    %3388 = vmatprep.mubr.f32.mxu0 %v3179
    %3389 = vmatmul.mubr.f32.gmra.mxu0 %v3178
    %v3390 = vpop.f32.mrf.mxu0
    %v3391 = vadd.f32 0.0, %v3390
    %v3392 = vpop.f32.mrf.mxu0
    %v3393 = vadd.f32 0.0, %v3392
    %3394 = vdwg.mxu0
    %3395 = vmatprep.subr.mxu0 %v1229
    %3396 = vmatpush1.msra.mxu0 %v1228
    %3397 = vmatprep.subr.mxu0 %v1221
    %3398 = vmatpush1.msra.mxu0 %v1220
    %3399 = vmatprep.subr.mxu0 %v1213
    %3400 = vmatpush1.msra.mxu0 %v1212
    %3401 = vmatprep.subr.mxu0 %v1205
    %3402 = vmatpush1.msra.mxu0 %v1204
    %3403 = vmatprep.subr.mxu0 %v1197
    %3404 = vmatpush1.msra.mxu0 %v1196
    %3405 = vmatprep.subr.mxu0 %v1189
    %3406 = vmatpush1.msra.mxu0 %v1188
    %3407 = vmatprep.subr.mxu0 %v1181
    %3408 = vmatpush1.msra.mxu0 %v1180
    %3409 = vmatprep.subr.mxu0 %v1173
    %3410 = vmatpush1.msra.mxu0 %v1172
    %3411 = vmatprep.subr.mxu0 %v1165
    %3412 = vmatpush1.msra.mxu0 %v1164
    %3413 = vmatprep.subr.mxu0 %v1157
    %3414 = vmatpush1.msra.mxu0 %v1156
    %3415 = vmatprep.subr.mxu0 %v1149
    %3416 = vmatpush1.msra.mxu0 %v1148
    %3417 = vmatprep.subr.mxu0 %v1141
    %3418 = vmatpush1.msra.mxu0 %v1140
    %3419 = vmatprep.subr.mxu0 %v1133
    %3420 = vmatpush1.msra.mxu0 %v1132
    %3421 = vmatprep.subr.mxu0 %v1125
    %3422 = vmatpush1.msra.mxu0 %v1124
    %3423 = vmatprep.subr.mxu0 %v1117
    %3424 = vmatpush1.msra.mxu0 %v1116
    %3425 = vmatprep.subr.mxu0 %v1109
    %3426 = vmatpush1.msra.mxu0 %v1108
    %3427 = vmatprep.subr.mxu0 %v1357
    %3428 = vmatpush2.msra.mxu0 %v1356
    %3429 = vmatprep.subr.mxu0 %v1349
    %3430 = vmatpush2.msra.mxu0 %v1348
    %3431 = vmatprep.subr.mxu0 %v1341
    %3432 = vmatpush2.msra.mxu0 %v1340
    %3433 = vmatprep.subr.mxu0 %v1333
    %3434 = vmatpush2.msra.mxu0 %v1332
    %3435 = vmatprep.subr.mxu0 %v1325
    %3436 = vmatpush2.msra.mxu0 %v1324
    %3437 = vmatprep.subr.mxu0 %v1317
    %3438 = vmatpush2.msra.mxu0 %v1316
    %3439 = vmatprep.subr.mxu0 %v1309
    %3440 = vmatpush2.msra.mxu0 %v1308
    %3441 = vmatprep.subr.mxu0 %v1301
    %3442 = vmatpush2.msra.mxu0 %v1300
    %3443 = vmatprep.subr.mxu0 %v1293
    %3444 = vmatpush2.msra.mxu0 %v1292
    %3445 = vmatprep.subr.mxu0 %v1285
    %3446 = vmatpush2.msra.mxu0 %v1284
    %3447 = vmatprep.subr.mxu0 %v1277
    %3448 = vmatpush2.msra.mxu0 %v1276
    %3449 = vmatprep.subr.mxu0 %v1269
    %3450 = vmatpush2.msra.mxu0 %v1268
    %3451 = vmatprep.subr.mxu0 %v1261
    %3452 = vmatpush2.msra.mxu0 %v1260
    %3453 = vmatprep.subr.mxu0 %v1253
    %3454 = vmatpush2.msra.mxu0 %v1252
    %3455 = vmatprep.subr.mxu0 %v1245
    %3456 = vmatpush2.msra.mxu0 %v1244
    %3457 = vmatprep.subr.mxu0 %v1237
    %3458 = vmatpush2.msra.mxu0 %v1236
    %3459 = vmatprep.mubr.f32.mxu0 %v3179
    %3460 = vmatmul.mubr.f32.gmra.mxu0 %v3178
    %v3461 = vpop.f32.mrf.mxu0
    %v3462 = vadd.f32 0.0, %v3461
    %v3463 = vpop.f32.mrf.mxu0
    %v3464 = vadd.f32 0.0, %v3463
    %3465 = vdwg.mxu0
    %v3474 = vrot.slane %v3249, 6
    %v3475 = vrot.slane %v3251, 6
    %v3476 = vrot.slane %v3320, 6
    %v3477 = vrot.slane %v3322, 6
    %v3478 = vrot.slane %v3391, 6
    %v3479 = vrot.slane %v3393, 6
    %v3480 = vrot.slane %v3462, 6
    %v3481 = vrot.slane %v3464, 6
    %v3490 = vadd.f32 %v636, %v3474
    %v3491 = vadd.f32 %v638, %v3475
    %v3492 = vadd.f32 %v790, %v3476
    %v3493 = vadd.f32 %v792, %v3477
    %v3494 = vadd.f32 %v944, %v3478
    %v3495 = vadd.f32 %v946, %v3479
    %v3496 = vadd.f32 %v1098, %v3480
    %v3497 = vadd.f32 %v1100, %v3481
    %v3498 = vxor.u32 %v3490, 2147483648
    %v3499 = vxor.u32 %v3491, 2147483648
    %v3500 = vmul.f32 %v3498, 1.442695
    %v3501 = vpow.pop %v3500
    %v3502 = vmul.f32 %v3499, 1.442695
    %v3503 = vpow.pop %v3502
    %v3504 = vadd.f32 %v3501, 1.0
    %v3505 = vadd.f32 %v3503, 1.0
    %v3506 = vrcp.pop %v3504
    %v3507 = vmul.f32 1.0, %v3506
    %v3508 = vrcp.pop %v3505
    %v3509 = vmul.f32 1.0, %v3508
    %v3510 = vxor.u32 %v3492, 2147483648
    %v3511 = vxor.u32 %v3493, 2147483648
    %v3512 = vmul.f32 %v3510, 1.442695
    %v3513 = vpow.pop %v3512
    %v3514 = vmul.f32 %v3511, 1.442695
    %v3515 = vpow.pop %v3514
    %v3516 = vadd.f32 %v3513, 1.0
    %v3517 = vadd.f32 %v3515, 1.0
    %v3518 = vrcp.pop %v3516
    %v3519 = vmul.f32 1.0, %v3518
    %v3520 = vrcp.pop %v3517
    %v3521 = vmul.f32 1.0, %v3520
    %v3522 = vtanh.pop %v3494
    %v3523 = vtanh.pop %v3495
    %v3524 = vxor.u32 %v3496, 2147483648
    %v3525 = vxor.u32 %v3497, 2147483648
    %v3526 = vmul.f32 %v3524, 1.442695
    %v3527 = vpow.pop %v3526
    %v3528 = vmul.f32 %v3525, 1.442695
    %v3529 = vpow.pop %v3528
    %v3530 = vadd.f32 %v3527, 1.0
    %v3531 = vadd.f32 %v3529, 1.0
    %v3532 = vrcp.pop %v3530
    %v3533 = vmul.f32 1.0, %v3532
    %v3534 = vrcp.pop %v3531
    %v3535 = vmul.f32 1.0, %v3534
    %v3538 = vrot.slane %v3174, 6
    %v3539 = vrot.slane %v3175, 6
    %v3542 = vmul.f32 %v3519, %v3538
    %v3543 = vmul.f32 %v3521, %v3539
    %v3544 = vmul.f32 %v3507, %v3522
    %v3545 = vmul.f32 %v3509, %v3523
    %v3546 = vadd.f32 %v3542, %v3544
    %v3547 = vadd.f32 %v3543, %v3545
    %v3548 = vtanh.pop %v3546
    %v3549 = vtanh.pop %v3547
    %v3550 = vmul.f32 %v3533, %v3548
    %v3551 = vmul.f32 %v3535, %v3549
    %3552 = vst [vmem:[#allocation2 + $0x10] sm:$0xc] %v3550
    %3553 = vst [vmem:[#allocation2 + $0x18] sm:$0xc] %v3551
    %v3556 = vrot.slane %v3550, 2
    %v3557 = vrot.slane %v3551, 2
    %3560 = vmatprep.subr.mxu0 %v1223
    %3561 = vmatpush1.msra.mxu0 %v1222
    %3562 = vmatprep.subr.mxu0 %v1215
    %3563 = vmatpush1.msra.mxu0 %v1214
    %3564 = vmatprep.subr.mxu0 %v1207
    %3565 = vmatpush1.msra.mxu0 %v1206
    %3566 = vmatprep.subr.mxu0 %v1199
    %3567 = vmatpush1.msra.mxu0 %v1198
    %3568 = vmatprep.subr.mxu0 %v1191
    %3569 = vmatpush1.msra.mxu0 %v1190
    %3570 = vmatprep.subr.mxu0 %v1183
    %3571 = vmatpush1.msra.mxu0 %v1182
    %3572 = vmatprep.subr.mxu0 %v1175
    %3573 = vmatpush1.msra.mxu0 %v1174
    %3574 = vmatprep.subr.mxu0 %v1167
    %3575 = vmatpush1.msra.mxu0 %v1166
    %3576 = vmatprep.subr.mxu0 %v1159
    %3577 = vmatpush1.msra.mxu0 %v1158
    %3578 = vmatprep.subr.mxu0 %v1151
    %3579 = vmatpush1.msra.mxu0 %v1150
    %3580 = vmatprep.subr.mxu0 %v1143
    %3581 = vmatpush1.msra.mxu0 %v1142
    %3582 = vmatprep.subr.mxu0 %v1135
    %3583 = vmatpush1.msra.mxu0 %v1134
    %3584 = vmatprep.subr.mxu0 %v1127
    %3585 = vmatpush1.msra.mxu0 %v1126
    %3586 = vmatprep.subr.mxu0 %v1119
    %3587 = vmatpush1.msra.mxu0 %v1118
    %3588 = vmatprep.subr.mxu0 %v1111
    %3589 = vmatpush1.msra.mxu0 %v1110
    %3590 = vmatprep.subr.mxu0 %v1103
    %3591 = vmatpush1.msra.mxu0 %v1102
    %3592 = vmatprep.subr.mxu0 %v1351
    %3593 = vmatpush2.msra.mxu0 %v1350
    %3594 = vmatprep.subr.mxu0 %v1343
    %3595 = vmatpush2.msra.mxu0 %v1342
    %3596 = vmatprep.subr.mxu0 %v1335
    %3597 = vmatpush2.msra.mxu0 %v1334
    %3598 = vmatprep.subr.mxu0 %v1327
    %3599 = vmatpush2.msra.mxu0 %v1326
    %3600 = vmatprep.subr.mxu0 %v1319
    %3601 = vmatpush2.msra.mxu0 %v1318
    %3602 = vmatprep.subr.mxu0 %v1311
    %3603 = vmatpush2.msra.mxu0 %v1310
    %3604 = vmatprep.subr.mxu0 %v1303
    %3605 = vmatpush2.msra.mxu0 %v1302
    %3606 = vmatprep.subr.mxu0 %v1295
    %3607 = vmatpush2.msra.mxu0 %v1294
    %3608 = vmatprep.subr.mxu0 %v1287
    %3609 = vmatpush2.msra.mxu0 %v1286
    %3610 = vmatprep.subr.mxu0 %v1279
    %3611 = vmatpush2.msra.mxu0 %v1278
    %3612 = vmatprep.subr.mxu0 %v1271
    %3613 = vmatpush2.msra.mxu0 %v1270
    %3614 = vmatprep.subr.mxu0 %v1263
    %3615 = vmatpush2.msra.mxu0 %v1262
    %3616 = vmatprep.subr.mxu0 %v1255
    %3617 = vmatpush2.msra.mxu0 %v1254
    %3618 = vmatprep.subr.mxu0 %v1247
    %3619 = vmatpush2.msra.mxu0 %v1246
    %3620 = vmatprep.subr.mxu0 %v1239
    %3621 = vmatpush2.msra.mxu0 %v1238
    %3622 = vmatprep.subr.mxu0 %v1231
    %3623 = vmatpush2.msra.mxu0 %v1230
    %3624 = vmatprep.mubr.f32.mxu0 %v3557
    %3625 = vmatmul.mubr.f32.gmra.mxu0 %v3556
    %v3626 = vpop.f32.mrf.mxu0
    %v3627 = vadd.f32 0.0, %v3626
    %v3628 = vpop.f32.mrf.mxu0
    %v3629 = vadd.f32 0.0, %v3628
    %3630 = vdwg.mxu0
    %3631 = vmatprep.subr.mxu0 %v1225
    %3632 = vmatpush1.msra.mxu0 %v1224
    %3633 = vmatprep.subr.mxu0 %v1217
    %3634 = vmatpush1.msra.mxu0 %v1216
    %3635 = vmatprep.subr.mxu0 %v1209
    %3636 = vmatpush1.msra.mxu0 %v1208
    %3637 = vmatprep.subr.mxu0 %v1201
    %3638 = vmatpush1.msra.mxu0 %v1200
    %3639 = vmatprep.subr.mxu0 %v1193
    %3640 = vmatpush1.msra.mxu0 %v1192
    %3641 = vmatprep.subr.mxu0 %v1185
    %3642 = vmatpush1.msra.mxu0 %v1184
    %3643 = vmatprep.subr.mxu0 %v1177
    %3644 = vmatpush1.msra.mxu0 %v1176
    %3645 = vmatprep.subr.mxu0 %v1169
    %3646 = vmatpush1.msra.mxu0 %v1168
    %3647 = vmatprep.subr.mxu0 %v1161
    %3648 = vmatpush1.msra.mxu0 %v1160
    %3649 = vmatprep.subr.mxu0 %v1153
    %3650 = vmatpush1.msra.mxu0 %v1152
    %3651 = vmatprep.subr.mxu0 %v1145
    %3652 = vmatpush1.msra.mxu0 %v1144
    %3653 = vmatprep.subr.mxu0 %v1137
    %3654 = vmatpush1.msra.mxu0 %v1136
    %3655 = vmatprep.subr.mxu0 %v1129
    %3656 = vmatpush1.msra.mxu0 %v1128
    %3657 = vmatprep.subr.mxu0 %v1121
    %3658 = vmatpush1.msra.mxu0 %v1120
    %3659 = vmatprep.subr.mxu0 %v1113
    %3660 = vmatpush1.msra.mxu0 %v1112
    %3661 = vmatprep.subr.mxu0 %v1105
    %3662 = vmatpush1.msra.mxu0 %v1104
    %3663 = vmatprep.subr.mxu0 %v1353
    %3664 = vmatpush2.msra.mxu0 %v1352
    %3665 = vmatprep.subr.mxu0 %v1345
    %3666 = vmatpush2.msra.mxu0 %v1344
    %3667 = vmatprep.subr.mxu0 %v1337
    %3668 = vmatpush2.msra.mxu0 %v1336
    %3669 = vmatprep.subr.mxu0 %v1329
    %3670 = vmatpush2.msra.mxu0 %v1328
    %3671 = vmatprep.subr.mxu0 %v1321
    %3672 = vmatpush2.msra.mxu0 %v1320
    %3673 = vmatprep.subr.mxu0 %v1313
    %3674 = vmatpush2.msra.mxu0 %v1312
    %3675 = vmatprep.subr.mxu0 %v1305
    %3676 = vmatpush2.msra.mxu0 %v1304
    %3677 = vmatprep.subr.mxu0 %v1297
    %3678 = vmatpush2.msra.mxu0 %v1296
    %3679 = vmatprep.subr.mxu0 %v1289
    %3680 = vmatpush2.msra.mxu0 %v1288
    %3681 = vmatprep.subr.mxu0 %v1281
    %3682 = vmatpush2.msra.mxu0 %v1280
    %3683 = vmatprep.subr.mxu0 %v1273
    %3684 = vmatpush2.msra.mxu0 %v1272
    %3685 = vmatprep.subr.mxu0 %v1265
    %3686 = vmatpush2.msra.mxu0 %v1264
    %3687 = vmatprep.subr.mxu0 %v1257
    %3688 = vmatpush2.msra.mxu0 %v1256
    %3689 = vmatprep.subr.mxu0 %v1249
    %3690 = vmatpush2.msra.mxu0 %v1248
    %3691 = vmatprep.subr.mxu0 %v1241
    %3692 = vmatpush2.msra.mxu0 %v1240
    %3693 = vmatprep.subr.mxu0 %v1233
    %3694 = vmatpush2.msra.mxu0 %v1232
    %3695 = vmatprep.mubr.f32.mxu0 %v3557
    %3696 = vmatmul.mubr.f32.gmra.mxu0 %v3556
    %v3697 = vpop.f32.mrf.mxu0
    %v3698 = vadd.f32 0.0, %v3697
    %v3699 = vpop.f32.mrf.mxu0
    %v3700 = vadd.f32 0.0, %v3699
    %3701 = vdwg.mxu0
    %3702 = vmatprep.subr.mxu0 %v1227
    %3703 = vmatpush1.msra.mxu0 %v1226
    %3704 = vmatprep.subr.mxu0 %v1219
    %3705 = vmatpush1.msra.mxu0 %v1218
    %3706 = vmatprep.subr.mxu0 %v1211
    %3707 = vmatpush1.msra.mxu0 %v1210
    %3708 = vmatprep.subr.mxu0 %v1203
    %3709 = vmatpush1.msra.mxu0 %v1202
    %3710 = vmatprep.subr.mxu0 %v1195
    %3711 = vmatpush1.msra.mxu0 %v1194
    %3712 = vmatprep.subr.mxu0 %v1187
    %3713 = vmatpush1.msra.mxu0 %v1186
    %3714 = vmatprep.subr.mxu0 %v1179
    %3715 = vmatpush1.msra.mxu0 %v1178
    %3716 = vmatprep.subr.mxu0 %v1171
    %3717 = vmatpush1.msra.mxu0 %v1170
    %3718 = vmatprep.subr.mxu0 %v1163
    %3719 = vmatpush1.msra.mxu0 %v1162
    %3720 = vmatprep.subr.mxu0 %v1155
    %3721 = vmatpush1.msra.mxu0 %v1154
    %3722 = vmatprep.subr.mxu0 %v1147
    %3723 = vmatpush1.msra.mxu0 %v1146
    %3724 = vmatprep.subr.mxu0 %v1139
    %3725 = vmatpush1.msra.mxu0 %v1138
    %3726 = vmatprep.subr.mxu0 %v1131
    %3727 = vmatpush1.msra.mxu0 %v1130
    %3728 = vmatprep.subr.mxu0 %v1123
    %3729 = vmatpush1.msra.mxu0 %v1122
    %3730 = vmatprep.subr.mxu0 %v1115
    %3731 = vmatpush1.msra.mxu0 %v1114
    %3732 = vmatprep.subr.mxu0 %v1107
    %3733 = vmatpush1.msra.mxu0 %v1106
    %3734 = vmatprep.subr.mxu0 %v1355
    %3735 = vmatpush2.msra.mxu0 %v1354
    %3736 = vmatprep.subr.mxu0 %v1347
    %3737 = vmatpush2.msra.mxu0 %v1346
    %3738 = vmatprep.subr.mxu0 %v1339
    %3739 = vmatpush2.msra.mxu0 %v1338
    %3740 = vmatprep.subr.mxu0 %v1331
    %3741 = vmatpush2.msra.mxu0 %v1330
    %3742 = vmatprep.subr.mxu0 %v1323
    %3743 = vmatpush2.msra.mxu0 %v1322
    %3744 = vmatprep.subr.mxu0 %v1315
    %3745 = vmatpush2.msra.mxu0 %v1314
    %3746 = vmatprep.subr.mxu0 %v1307
    %3747 = vmatpush2.msra.mxu0 %v1306
    %3748 = vmatprep.subr.mxu0 %v1299
    %3749 = vmatpush2.msra.mxu0 %v1298
    %3750 = vmatprep.subr.mxu0 %v1291
    %3751 = vmatpush2.msra.mxu0 %v1290
    %3752 = vmatprep.subr.mxu0 %v1283
    %3753 = vmatpush2.msra.mxu0 %v1282
    %3754 = vmatprep.subr.mxu0 %v1275
    %3755 = vmatpush2.msra.mxu0 %v1274
    %3756 = vmatprep.subr.mxu0 %v1267
    %3757 = vmatpush2.msra.mxu0 %v1266
    %3758 = vmatprep.subr.mxu0 %v1259
    %3759 = vmatpush2.msra.mxu0 %v1258
    %3760 = vmatprep.subr.mxu0 %v1251
    %3761 = vmatpush2.msra.mxu0 %v1250
    %3762 = vmatprep.subr.mxu0 %v1243
    %3763 = vmatpush2.msra.mxu0 %v1242
    %3764 = vmatprep.subr.mxu0 %v1235
    %3765 = vmatpush2.msra.mxu0 %v1234
    %3766 = vmatprep.mubr.f32.mxu0 %v3557
    %3767 = vmatmul.mubr.f32.gmra.mxu0 %v3556
    %v3768 = vpop.f32.mrf.mxu0
    %v3769 = vadd.f32 0.0, %v3768
    %v3770 = vpop.f32.mrf.mxu0
    %v3771 = vadd.f32 0.0, %v3770
    %3772 = vdwg.mxu0
    %3773 = vmatprep.subr.mxu0 %v1229
    %3774 = vmatpush1.msra.mxu0 %v1228
    %3775 = vmatprep.subr.mxu0 %v1221
    %3776 = vmatpush1.msra.mxu0 %v1220
    %3777 = vmatprep.subr.mxu0 %v1213
    %3778 = vmatpush1.msra.mxu0 %v1212
    %3779 = vmatprep.subr.mxu0 %v1205
    %3780 = vmatpush1.msra.mxu0 %v1204
    %3781 = vmatprep.subr.mxu0 %v1197
    %3782 = vmatpush1.msra.mxu0 %v1196
    %3783 = vmatprep.subr.mxu0 %v1189
    %3784 = vmatpush1.msra.mxu0 %v1188
    %3785 = vmatprep.subr.mxu0 %v1181
    %3786 = vmatpush1.msra.mxu0 %v1180
    %3787 = vmatprep.subr.mxu0 %v1173
    %3788 = vmatpush1.msra.mxu0 %v1172
    %3789 = vmatprep.subr.mxu0 %v1165
    %3790 = vmatpush1.msra.mxu0 %v1164
    %3791 = vmatprep.subr.mxu0 %v1157
    %3792 = vmatpush1.msra.mxu0 %v1156
    %3793 = vmatprep.subr.mxu0 %v1149
    %3794 = vmatpush1.msra.mxu0 %v1148
    %3795 = vmatprep.subr.mxu0 %v1141
    %3796 = vmatpush1.msra.mxu0 %v1140
    %3797 = vmatprep.subr.mxu0 %v1133
    %3798 = vmatpush1.msra.mxu0 %v1132
    %3799 = vmatprep.subr.mxu0 %v1125
    %3800 = vmatpush1.msra.mxu0 %v1124
    %3801 = vmatprep.subr.mxu0 %v1117
    %3802 = vmatpush1.msra.mxu0 %v1116
    %3803 = vmatprep.subr.mxu0 %v1109
    %3804 = vmatpush1.msra.mxu0 %v1108
    %3805 = vmatprep.subr.mxu0 %v1357
    %3806 = vmatpush2.msra.mxu0 %v1356
    %3807 = vmatprep.subr.mxu0 %v1349
    %3808 = vmatpush2.msra.mxu0 %v1348
    %3809 = vmatprep.subr.mxu0 %v1341
    %3810 = vmatpush2.msra.mxu0 %v1340
    %3811 = vmatprep.subr.mxu0 %v1333
    %3812 = vmatpush2.msra.mxu0 %v1332
    %3813 = vmatprep.subr.mxu0 %v1325
    %3814 = vmatpush2.msra.mxu0 %v1324
    %3815 = vmatprep.subr.mxu0 %v1317
    %3816 = vmatpush2.msra.mxu0 %v1316
    %3817 = vmatprep.subr.mxu0 %v1309
    %3818 = vmatpush2.msra.mxu0 %v1308
    %3819 = vmatprep.subr.mxu0 %v1301
    %3820 = vmatpush2.msra.mxu0 %v1300
    %3821 = vmatprep.subr.mxu0 %v1293
    %3822 = vmatpush2.msra.mxu0 %v1292
    %3823 = vmatprep.subr.mxu0 %v1285
    %3824 = vmatpush2.msra.mxu0 %v1284
    %3825 = vmatprep.subr.mxu0 %v1277
    %3826 = vmatpush2.msra.mxu0 %v1276
    %3827 = vmatprep.subr.mxu0 %v1269
    %3828 = vmatpush2.msra.mxu0 %v1268
    %3829 = vmatprep.subr.mxu0 %v1261
    %3830 = vmatpush2.msra.mxu0 %v1260
    %3831 = vmatprep.subr.mxu0 %v1253
    %3832 = vmatpush2.msra.mxu0 %v1252
    %3833 = vmatprep.subr.mxu0 %v1245
    %3834 = vmatpush2.msra.mxu0 %v1244
    %3835 = vmatprep.subr.mxu0 %v1237
    %3836 = vmatpush2.msra.mxu0 %v1236
    %3837 = vmatprep.mubr.f32.mxu0 %v3557
    %3838 = vmatmul.mubr.f32.gmra.mxu0 %v3556
    %v3839 = vpop.f32.mrf.mxu0
    %v3840 = vadd.f32 0.0, %v3839
    %v3841 = vpop.f32.mrf.mxu0
    %v3842 = vadd.f32 0.0, %v3841
    %3843 = vdwg.mxu0
    %v3852 = vrot.slane %v3627, 4
    %v3853 = vrot.slane %v3629, 4
    %v3854 = vrot.slane %v3698, 4
    %v3855 = vrot.slane %v3700, 4
    %v3856 = vrot.slane %v3769, 4
    %v3857 = vrot.slane %v3771, 4
    %v3858 = vrot.slane %v3840, 4
    %v3859 = vrot.slane %v3842, 4
    %v3868 = vadd.f32 %v636, %v3852
    %v3869 = vadd.f32 %v638, %v3853
    %v3870 = vadd.f32 %v790, %v3854
    %v3871 = vadd.f32 %v792, %v3855
    %v3872 = vadd.f32 %v944, %v3856
    %v3873 = vadd.f32 %v946, %v3857
    %v3874 = vadd.f32 %v1098, %v3858
    %v3875 = vadd.f32 %v1100, %v3859
    %v3876 = vxor.u32 %v3868, 2147483648
    %v3877 = vxor.u32 %v3869, 2147483648
    %v3878 = vmul.f32 %v3876, 1.442695
    %v3879 = vpow.pop %v3878
    %v3880 = vmul.f32 %v3877, 1.442695
    %v3881 = vpow.pop %v3880
    %v3882 = vadd.f32 %v3879, 1.0
    %v3883 = vadd.f32 %v3881, 1.0
    %v3884 = vrcp.pop %v3882
    %v3885 = vmul.f32 1.0, %v3884
    %v3886 = vrcp.pop %v3883
    %v3887 = vmul.f32 1.0, %v3886
    %v3888 = vxor.u32 %v3870, 2147483648
    %v3889 = vxor.u32 %v3871, 2147483648
    %v3890 = vmul.f32 %v3888, 1.442695
    %v3891 = vpow.pop %v3890
    %v3892 = vmul.f32 %v3889, 1.442695
    %v3893 = vpow.pop %v3892
    %v3894 = vadd.f32 %v3891, 1.0
    %v3895 = vadd.f32 %v3893, 1.0
    %v3896 = vrcp.pop %v3894
    %v3897 = vmul.f32 1.0, %v3896
    %v3898 = vrcp.pop %v3895
    %v3899 = vmul.f32 1.0, %v3898
    %v3900 = vtanh.pop %v3872
    %v3901 = vtanh.pop %v3873
    %v3902 = vxor.u32 %v3874, 2147483648
    %v3903 = vxor.u32 %v3875, 2147483648
    %v3904 = vmul.f32 %v3902, 1.442695
    %v3905 = vpow.pop %v3904
    %v3906 = vmul.f32 %v3903, 1.442695
    %v3907 = vpow.pop %v3906
    %v3908 = vadd.f32 %v3905, 1.0
    %v3909 = vadd.f32 %v3907, 1.0
    %v3910 = vrcp.pop %v3908
    %v3911 = vmul.f32 1.0, %v3910
    %v3912 = vrcp.pop %v3909
    %v3913 = vmul.f32 1.0, %v3912
    %v3916 = vrot.slane %v3546, 6
    %v3917 = vrot.slane %v3547, 6
    %v3920 = vmul.f32 %v3897, %v3916
    %v3921 = vmul.f32 %v3899, %v3917
    %v3922 = vmul.f32 %v3885, %v3900
    %v3923 = vmul.f32 %v3887, %v3901
    %v3924 = vadd.f32 %v3920, %v3922
    %v3925 = vadd.f32 %v3921, %v3923
    %v3926 = vtanh.pop %v3924
    %v3927 = vtanh.pop %v3925
    %v3928 = vmul.f32 %v3911, %v3926
    %v3929 = vmul.f32 %v3913, %v3927
    %3930 = vst [vmem:[#allocation2 + $0x10] sm:$0x30] %v3928
    %3931 = vst [vmem:[#allocation2 + $0x18] sm:$0x30] %v3929
    %v3934 = vrot.slane %v3928, 4
    %v3935 = vrot.slane %v3929, 4
    %3938 = vmatprep.subr.mxu0 %v1223
    %3939 = vmatpush1.msra.mxu0 %v1222
    %3940 = vmatprep.subr.mxu0 %v1215
    %3941 = vmatpush1.msra.mxu0 %v1214
    %3942 = vmatprep.subr.mxu0 %v1207
    %3943 = vmatpush1.msra.mxu0 %v1206
    %3944 = vmatprep.subr.mxu0 %v1199
    %3945 = vmatpush1.msra.mxu0 %v1198
    %3946 = vmatprep.subr.mxu0 %v1191
    %3947 = vmatpush1.msra.mxu0 %v1190
    %3948 = vmatprep.subr.mxu0 %v1183
    %3949 = vmatpush1.msra.mxu0 %v1182
    %3950 = vmatprep.subr.mxu0 %v1175
    %3951 = vmatpush1.msra.mxu0 %v1174
    %3952 = vmatprep.subr.mxu0 %v1167
    %3953 = vmatpush1.msra.mxu0 %v1166
    %3954 = vmatprep.subr.mxu0 %v1159
    %3955 = vmatpush1.msra.mxu0 %v1158
    %3956 = vmatprep.subr.mxu0 %v1151
    %3957 = vmatpush1.msra.mxu0 %v1150
    %3958 = vmatprep.subr.mxu0 %v1143
    %3959 = vmatpush1.msra.mxu0 %v1142
    %3960 = vmatprep.subr.mxu0 %v1135
    %3961 = vmatpush1.msra.mxu0 %v1134
    %3962 = vmatprep.subr.mxu0 %v1127
    %3963 = vmatpush1.msra.mxu0 %v1126
    %3964 = vmatprep.subr.mxu0 %v1119
    %3965 = vmatpush1.msra.mxu0 %v1118
    %3966 = vmatprep.subr.mxu0 %v1111
    %3967 = vmatpush1.msra.mxu0 %v1110
    %3968 = vmatprep.subr.mxu0 %v1103
    %3969 = vmatpush1.msra.mxu0 %v1102
    %3970 = vmatprep.subr.mxu0 %v1351
    %3971 = vmatpush2.msra.mxu0 %v1350
    %3972 = vmatprep.subr.mxu0 %v1343
    %3973 = vmatpush2.msra.mxu0 %v1342
    %3974 = vmatprep.subr.mxu0 %v1335
    %3975 = vmatpush2.msra.mxu0 %v1334
    %3976 = vmatprep.subr.mxu0 %v1327
    %3977 = vmatpush2.msra.mxu0 %v1326
    %3978 = vmatprep.subr.mxu0 %v1319
    %3979 = vmatpush2.msra.mxu0 %v1318
    %3980 = vmatprep.subr.mxu0 %v1311
    %3981 = vmatpush2.msra.mxu0 %v1310
    %3982 = vmatprep.subr.mxu0 %v1303
    %3983 = vmatpush2.msra.mxu0 %v1302
    %3984 = vmatprep.subr.mxu0 %v1295
    %3985 = vmatpush2.msra.mxu0 %v1294
    %3986 = vmatprep.subr.mxu0 %v1287
    %3987 = vmatpush2.msra.mxu0 %v1286
    %3988 = vmatprep.subr.mxu0 %v1279
    %3989 = vmatpush2.msra.mxu0 %v1278
    %3990 = vmatprep.subr.mxu0 %v1271
    %3991 = vmatpush2.msra.mxu0 %v1270
    %3992 = vmatprep.subr.mxu0 %v1263
    %3993 = vmatpush2.msra.mxu0 %v1262
    %3994 = vmatprep.subr.mxu0 %v1255
    %3995 = vmatpush2.msra.mxu0 %v1254
    %3996 = vmatprep.subr.mxu0 %v1247
    %3997 = vmatpush2.msra.mxu0 %v1246
    %3998 = vmatprep.subr.mxu0 %v1239
    %3999 = vmatpush2.msra.mxu0 %v1238
    %4000 = vmatprep.subr.mxu0 %v1231
    %4001 = vmatpush2.msra.mxu0 %v1230
    %4002 = vmatprep.mubr.f32.mxu0 %v3935
    %4003 = vmatmul.mubr.f32.gmra.mxu0 %v3934
    %v4004 = vpop.f32.mrf.mxu0
    %v4005 = vadd.f32 0.0, %v4004
    %v4006 = vpop.f32.mrf.mxu0
    %v4007 = vadd.f32 0.0, %v4006
    %4008 = vdwg.mxu0
    %4009 = vmatprep.subr.mxu0 %v1225
    %4010 = vmatpush1.msra.mxu0 %v1224
    %4011 = vmatprep.subr.mxu0 %v1217
    %4012 = vmatpush1.msra.mxu0 %v1216
    %4013 = vmatprep.subr.mxu0 %v1209
    %4014 = vmatpush1.msra.mxu0 %v1208
    %4015 = vmatprep.subr.mxu0 %v1201
    %4016 = vmatpush1.msra.mxu0 %v1200
    %4017 = vmatprep.subr.mxu0 %v1193
    %4018 = vmatpush1.msra.mxu0 %v1192
    %4019 = vmatprep.subr.mxu0 %v1185
    %4020 = vmatpush1.msra.mxu0 %v1184
    %4021 = vmatprep.subr.mxu0 %v1177
    %4022 = vmatpush1.msra.mxu0 %v1176
    %4023 = vmatprep.subr.mxu0 %v1169
    %4024 = vmatpush1.msra.mxu0 %v1168
    %4025 = vmatprep.subr.mxu0 %v1161
    %4026 = vmatpush1.msra.mxu0 %v1160
    %4027 = vmatprep.subr.mxu0 %v1153
    %4028 = vmatpush1.msra.mxu0 %v1152
    %4029 = vmatprep.subr.mxu0 %v1145
    %4030 = vmatpush1.msra.mxu0 %v1144
    %4031 = vmatprep.subr.mxu0 %v1137
    %4032 = vmatpush1.msra.mxu0 %v1136
    %4033 = vmatprep.subr.mxu0 %v1129
    %4034 = vmatpush1.msra.mxu0 %v1128
    %4035 = vmatprep.subr.mxu0 %v1121
    %4036 = vmatpush1.msra.mxu0 %v1120
    %4037 = vmatprep.subr.mxu0 %v1113
    %4038 = vmatpush1.msra.mxu0 %v1112
    %4039 = vmatprep.subr.mxu0 %v1105
    %4040 = vmatpush1.msra.mxu0 %v1104
    %4041 = vmatprep.subr.mxu0 %v1353
    %4042 = vmatpush2.msra.mxu0 %v1352
    %4043 = vmatprep.subr.mxu0 %v1345
    %4044 = vmatpush2.msra.mxu0 %v1344
    %4045 = vmatprep.subr.mxu0 %v1337
    %4046 = vmatpush2.msra.mxu0 %v1336
    %4047 = vmatprep.subr.mxu0 %v1329
    %4048 = vmatpush2.msra.mxu0 %v1328
    %4049 = vmatprep.subr.mxu0 %v1321
    %4050 = vmatpush2.msra.mxu0 %v1320
    %4051 = vmatprep.subr.mxu0 %v1313
    %4052 = vmatpush2.msra.mxu0 %v1312
    %4053 = vmatprep.subr.mxu0 %v1305
    %4054 = vmatpush2.msra.mxu0 %v1304
    %4055 = vmatprep.subr.mxu0 %v1297
    %4056 = vmatpush2.msra.mxu0 %v1296
    %4057 = vmatprep.subr.mxu0 %v1289
    %4058 = vmatpush2.msra.mxu0 %v1288
    %4059 = vmatprep.subr.mxu0 %v1281
    %4060 = vmatpush2.msra.mxu0 %v1280
    %4061 = vmatprep.subr.mxu0 %v1273
    %4062 = vmatpush2.msra.mxu0 %v1272
    %4063 = vmatprep.subr.mxu0 %v1265
    %4064 = vmatpush2.msra.mxu0 %v1264
    %4065 = vmatprep.subr.mxu0 %v1257
    %4066 = vmatpush2.msra.mxu0 %v1256
    %4067 = vmatprep.subr.mxu0 %v1249
    %4068 = vmatpush2.msra.mxu0 %v1248
    %4069 = vmatprep.subr.mxu0 %v1241
    %4070 = vmatpush2.msra.mxu0 %v1240
    %4071 = vmatprep.subr.mxu0 %v1233
    %4072 = vmatpush2.msra.mxu0 %v1232
    %4073 = vmatprep.mubr.f32.mxu0 %v3935
    %4074 = vmatmul.mubr.f32.gmra.mxu0 %v3934
    %v4075 = vpop.f32.mrf.mxu0
    %v4076 = vadd.f32 0.0, %v4075
    %v4077 = vpop.f32.mrf.mxu0
    %v4078 = vadd.f32 0.0, %v4077
    %4079 = vdwg.mxu0
    %4080 = vmatprep.subr.mxu0 %v1227
    %4081 = vmatpush1.msra.mxu0 %v1226
    %4082 = vmatprep.subr.mxu0 %v1219
    %4083 = vmatpush1.msra.mxu0 %v1218
    %4084 = vmatprep.subr.mxu0 %v1211
    %4085 = vmatpush1.msra.mxu0 %v1210
    %4086 = vmatprep.subr.mxu0 %v1203
    %4087 = vmatpush1.msra.mxu0 %v1202
    %4088 = vmatprep.subr.mxu0 %v1195
    %4089 = vmatpush1.msra.mxu0 %v1194
    %4090 = vmatprep.subr.mxu0 %v1187
    %4091 = vmatpush1.msra.mxu0 %v1186
    %4092 = vmatprep.subr.mxu0 %v1179
    %4093 = vmatpush1.msra.mxu0 %v1178
    %4094 = vmatprep.subr.mxu0 %v1171
    %4095 = vmatpush1.msra.mxu0 %v1170
    %4096 = vmatprep.subr.mxu0 %v1163
    %4097 = vmatpush1.msra.mxu0 %v1162
    %4098 = vmatprep.subr.mxu0 %v1155
    %4099 = vmatpush1.msra.mxu0 %v1154
    %4100 = vmatprep.subr.mxu0 %v1147
    %4101 = vmatpush1.msra.mxu0 %v1146
    %4102 = vmatprep.subr.mxu0 %v1139
    %4103 = vmatpush1.msra.mxu0 %v1138
    %4104 = vmatprep.subr.mxu0 %v1131
    %4105 = vmatpush1.msra.mxu0 %v1130
    %4106 = vmatprep.subr.mxu0 %v1123
    %4107 = vmatpush1.msra.mxu0 %v1122
    %4108 = vmatprep.subr.mxu0 %v1115
    %4109 = vmatpush1.msra.mxu0 %v1114
    %4110 = vmatprep.subr.mxu0 %v1107
    %4111 = vmatpush1.msra.mxu0 %v1106
    %4112 = vmatprep.subr.mxu0 %v1355
    %4113 = vmatpush2.msra.mxu0 %v1354
    %4114 = vmatprep.subr.mxu0 %v1347
    %4115 = vmatpush2.msra.mxu0 %v1346
    %4116 = vmatprep.subr.mxu0 %v1339
    %4117 = vmatpush2.msra.mxu0 %v1338
    %4118 = vmatprep.subr.mxu0 %v1331
    %4119 = vmatpush2.msra.mxu0 %v1330
    %4120 = vmatprep.subr.mxu0 %v1323
    %4121 = vmatpush2.msra.mxu0 %v1322
    %4122 = vmatprep.subr.mxu0 %v1315
    %4123 = vmatpush2.msra.mxu0 %v1314
    %4124 = vmatprep.subr.mxu0 %v1307
    %4125 = vmatpush2.msra.mxu0 %v1306
    %4126 = vmatprep.subr.mxu0 %v1299
    %4127 = vmatpush2.msra.mxu0 %v1298
    %4128 = vmatprep.subr.mxu0 %v1291
    %4129 = vmatpush2.msra.mxu0 %v1290
    %4130 = vmatprep.subr.mxu0 %v1283
    %4131 = vmatpush2.msra.mxu0 %v1282
    %4132 = vmatprep.subr.mxu0 %v1275
    %4133 = vmatpush2.msra.mxu0 %v1274
    %4134 = vmatprep.subr.mxu0 %v1267
    %4135 = vmatpush2.msra.mxu0 %v1266
    %4136 = vmatprep.subr.mxu0 %v1259
    %4137 = vmatpush2.msra.mxu0 %v1258
    %4138 = vmatprep.subr.mxu0 %v1251
    %4139 = vmatpush2.msra.mxu0 %v1250
    %4140 = vmatprep.subr.mxu0 %v1243
    %4141 = vmatpush2.msra.mxu0 %v1242
    %4142 = vmatprep.subr.mxu0 %v1235
    %4143 = vmatpush2.msra.mxu0 %v1234
    %4144 = vmatprep.mubr.f32.mxu0 %v3935
    %4145 = vmatmul.mubr.f32.gmra.mxu0 %v3934
    %v4146 = vpop.f32.mrf.mxu0
    %v4147 = vadd.f32 0.0, %v4146
    %v4148 = vpop.f32.mrf.mxu0
    %v4149 = vadd.f32 0.0, %v4148
    %4150 = vdwg.mxu0
    %4151 = vmatprep.subr.mxu0 %v1229
    %4152 = vmatpush1.msra.mxu0 %v1228
    %4153 = vmatprep.subr.mxu0 %v1221
    %4154 = vmatpush1.msra.mxu0 %v1220
    %4155 = vmatprep.subr.mxu0 %v1213
    %4156 = vmatpush1.msra.mxu0 %v1212
    %4157 = vmatprep.subr.mxu0 %v1205
    %4158 = vmatpush1.msra.mxu0 %v1204
    %4159 = vmatprep.subr.mxu0 %v1197
    %4160 = vmatpush1.msra.mxu0 %v1196
    %4161 = vmatprep.subr.mxu0 %v1189
    %4162 = vmatpush1.msra.mxu0 %v1188
    %4163 = vmatprep.subr.mxu0 %v1181
    %4164 = vmatpush1.msra.mxu0 %v1180
    %4165 = vmatprep.subr.mxu0 %v1173
    %4166 = vmatpush1.msra.mxu0 %v1172
    %4167 = vmatprep.subr.mxu0 %v1165
    %4168 = vmatpush1.msra.mxu0 %v1164
    %4169 = vmatprep.subr.mxu0 %v1157
    %4170 = vmatpush1.msra.mxu0 %v1156
    %4171 = vmatprep.subr.mxu0 %v1149
    %4172 = vmatpush1.msra.mxu0 %v1148
    %4173 = vmatprep.subr.mxu0 %v1141
    %4174 = vmatpush1.msra.mxu0 %v1140
    %4175 = vmatprep.subr.mxu0 %v1133
    %4176 = vmatpush1.msra.mxu0 %v1132
    %4177 = vmatprep.subr.mxu0 %v1125
    %4178 = vmatpush1.msra.mxu0 %v1124
    %4179 = vmatprep.subr.mxu0 %v1117
    %4180 = vmatpush1.msra.mxu0 %v1116
    %4181 = vmatprep.subr.mxu0 %v1109
    %4182 = vmatpush1.msra.mxu0 %v1108
    %4183 = vmatprep.subr.mxu0 %v1357
    %4184 = vmatpush2.msra.mxu0 %v1356
    %4185 = vmatprep.subr.mxu0 %v1349
    %4186 = vmatpush2.msra.mxu0 %v1348
    %4187 = vmatprep.subr.mxu0 %v1341
    %4188 = vmatpush2.msra.mxu0 %v1340
    %4189 = vmatprep.subr.mxu0 %v1333
    %4190 = vmatpush2.msra.mxu0 %v1332
    %4191 = vmatprep.subr.mxu0 %v1325
    %4192 = vmatpush2.msra.mxu0 %v1324
    %4193 = vmatprep.subr.mxu0 %v1317
    %4194 = vmatpush2.msra.mxu0 %v1316
    %4195 = vmatprep.subr.mxu0 %v1309
    %4196 = vmatpush2.msra.mxu0 %v1308
    %4197 = vmatprep.subr.mxu0 %v1301
    %4198 = vmatpush2.msra.mxu0 %v1300
    %4199 = vmatprep.subr.mxu0 %v1293
    %4200 = vmatpush2.msra.mxu0 %v1292
    %4201 = vmatprep.subr.mxu0 %v1285
    %4202 = vmatpush2.msra.mxu0 %v1284
    %4203 = vmatprep.subr.mxu0 %v1277
    %4204 = vmatpush2.msra.mxu0 %v1276
    %4205 = vmatprep.subr.mxu0 %v1269
    %4206 = vmatpush2.msra.mxu0 %v1268
    %4207 = vmatprep.subr.mxu0 %v1261
    %4208 = vmatpush2.msra.mxu0 %v1260
    %4209 = vmatprep.subr.mxu0 %v1253
    %4210 = vmatpush2.msra.mxu0 %v1252
    %4211 = vmatprep.subr.mxu0 %v1245
    %4212 = vmatpush2.msra.mxu0 %v1244
    %4213 = vmatprep.subr.mxu0 %v1237
    %4214 = vmatpush2.msra.mxu0 %v1236
    %4215 = vmatprep.mubr.f32.mxu0 %v3935
    %4216 = vmatmul.mubr.f32.gmra.mxu0 %v3934
    %v4217 = vpop.f32.mrf.mxu0
    %v4218 = vadd.f32 0.0, %v4217
    %v4219 = vpop.f32.mrf.mxu0
    %v4220 = vadd.f32 0.0, %v4219
    %4221 = vdwg.mxu0
    %v4230 = vrot.slane %v4005, 2
    %v4231 = vrot.slane %v4007, 2
    %v4232 = vrot.slane %v4076, 2
    %v4233 = vrot.slane %v4078, 2
    %v4234 = vrot.slane %v4147, 2
    %v4235 = vrot.slane %v4149, 2
    %v4236 = vrot.slane %v4218, 2
    %v4237 = vrot.slane %v4220, 2
    %v4246 = vadd.f32 %v636, %v4230
    %v4247 = vadd.f32 %v638, %v4231
    %v4248 = vadd.f32 %v790, %v4232
    %v4249 = vadd.f32 %v792, %v4233
    %v4250 = vadd.f32 %v944, %v4234
    %v4251 = vadd.f32 %v946, %v4235
    %v4252 = vadd.f32 %v1098, %v4236
    %v4253 = vadd.f32 %v1100, %v4237
    %v4254 = vxor.u32 %v4246, 2147483648
    %v4255 = vxor.u32 %v4247, 2147483648
    %v4256 = vmul.f32 %v4254, 1.442695
    %v4257 = vpow.pop %v4256
    %v4258 = vmul.f32 %v4255, 1.442695
    %v4259 = vpow.pop %v4258
    %v4260 = vadd.f32 %v4257, 1.0
    %v4261 = vadd.f32 %v4259, 1.0
    %v4262 = vrcp.pop %v4260
    %v4263 = vmul.f32 1.0, %v4262
    %v4264 = vrcp.pop %v4261
    %v4265 = vmul.f32 1.0, %v4264
    %v4266 = vxor.u32 %v4248, 2147483648
    %v4267 = vxor.u32 %v4249, 2147483648
    %v4268 = vmul.f32 %v4266, 1.442695
    %v4269 = vpow.pop %v4268
    %v4270 = vmul.f32 %v4267, 1.442695
    %v4271 = vpow.pop %v4270
    %v4272 = vadd.f32 %v4269, 1.0
    %v4273 = vadd.f32 %v4271, 1.0
    %v4274 = vrcp.pop %v4272
    %v4275 = vmul.f32 1.0, %v4274
    %v4276 = vrcp.pop %v4273
    %v4277 = vmul.f32 1.0, %v4276
    %v4278 = vtanh.pop %v4250
    %v4279 = vtanh.pop %v4251
    %v4280 = vxor.u32 %v4252, 2147483648
    %v4281 = vxor.u32 %v4253, 2147483648
    %v4282 = vmul.f32 %v4280, 1.442695
    %v4283 = vpow.pop %v4282
    %v4284 = vmul.f32 %v4281, 1.442695
    %v4285 = vpow.pop %v4284
    %v4286 = vadd.f32 %v4283, 1.0
    %v4287 = vadd.f32 %v4285, 1.0
    %v4288 = vrcp.pop %v4286
    %v4289 = vmul.f32 1.0, %v4288
    %v4290 = vrcp.pop %v4287
    %v4291 = vmul.f32 1.0, %v4290
    %v4294 = vrot.slane %v3924, 6
    %v4295 = vrot.slane %v3925, 6
    %v4298 = vmul.f32 %v4275, %v4294
    %v4299 = vmul.f32 %v4277, %v4295
    %v4300 = vmul.f32 %v4263, %v4278
    %v4301 = vmul.f32 %v4265, %v4279
    %v4302 = vadd.f32 %v4298, %v4300
    %v4303 = vadd.f32 %v4299, %v4301
    %v4304 = vtanh.pop %v4302
    %v4305 = vtanh.pop %v4303
    %v4306 = vmul.f32 %v4289, %v4304
    %v4307 = vmul.f32 %v4291, %v4305
    %4308 = vst [vmem:[#allocation2 + $0x10] sm:$0xc0] %v4306
    %4309 = vst [vmem:[#allocation2 + $0x18] sm:$0xc0] %v4307
    %v4310 = vld [vmem:[#allocation2] sm:$0xff]
    %v4311 = vld [vmem:[#allocation2 + $0x8] sm:$0xff]
    %v4312 = vld [vmem:[#allocation2 + $0x10] sm:$0xff]
    %v4313 = vld [vmem:[#allocation2 + $0x18] sm:$0xff]
    %v4314 = vld [vmem:[#allocation11] sm:$0xff]
    %v4315 = vld [vmem:[#allocation11 + $0x8] sm:$0xff]
    %v4316 = vld [vmem:[#allocation11 + $0x10] sm:$0xff]
    %v4317 = vld [vmem:[#allocation11 + $0x18] sm:$0xff]
    %v4318 = vld [vmem:[#allocation11 + $0x20] sm:$0xff]
    %v4319 = vld [vmem:[#allocation11 + $0x28] sm:$0xff]
    %v4320 = vld [vmem:[#allocation11 + $0x30] sm:$0xff]
    %v4321 = vld [vmem:[#allocation11 + $0x38] sm:$0xff]
    %v4322 = vld [vmem:[#allocation11 + $0x40] sm:$0xff]
    %v4323 = vld [vmem:[#allocation11 + $0x48] sm:$0xff]
    %v4324 = vld [vmem:[#allocation11 + $0x50] sm:$0xff]
    %v4325 = vld [vmem:[#allocation11 + $0x58] sm:$0xff]
    %v4326 = vld [vmem:[#allocation11 + $0x60] sm:$0xff]
    %v4327 = vld [vmem:[#allocation11 + $0x68] sm:$0xff]
    %v4328 = vld [vmem:[#allocation11 + $0x70] sm:$0xff]
    %v4329 = vld [vmem:[#allocation11 + $0x78] sm:$0xff]
    %v4330 = vld [vmem:[#allocation11 + $0x80] sm:$0xff]
    %v4331 = vld [vmem:[#allocation11 + $0x88] sm:$0xff]
    %v4332 = vld [vmem:[#allocation11 + $0x90] sm:$0xff]
    %v4333 = vld [vmem:[#allocation11 + $0x98] sm:$0xff]
    %v4334 = vld [vmem:[#allocation11 + $0xa0] sm:$0xff]
    %v4335 = vld [vmem:[#allocation11 + $0xa8] sm:$0xff]
    %v4336 = vld [vmem:[#allocation11 + $0xb0] sm:$0xff]
    %v4337 = vld [vmem:[#allocation11 + $0xb8] sm:$0xff]
    %v4338 = vld [vmem:[#allocation11 + $0xc0] sm:$0xff]
    %v4339 = vld [vmem:[#allocation11 + $0xc8] sm:$0xff]
    %v4340 = vld [vmem:[#allocation11 + $0xd0] sm:$0xff]
    %v4341 = vld [vmem:[#allocation11 + $0xd8] sm:$0xff]
    %v4342 = vld [vmem:[#allocation11 + $0xe0] sm:$0xff]
    %v4343 = vld [vmem:[#allocation11 + $0xe8] sm:$0xff]
    %v4344 = vld [vmem:[#allocation11 + $0xf0] sm:$0xff]
    %v4345 = vld [vmem:[#allocation11 + $0xf8] sm:$0xff]
    %v4346 = vld [vmem:[#allocation12] sm:$0x1]
    %v4348 = vlaneseq
    %v4349 = vshrl.u32 %v4348, 7
    %v4350 = vsub.s32 0, %v4349
    %v4351 = vrot.slane %v4346, %v4350
    %4353 = vmatprep.subr.mxu0 0.0
    %4354 = vmatpush1.msra.mxu0 %v4329
    %4355 = vmatprep.subr.mxu0 0.0
    %4356 = vmatpush1.msra.mxu0 %v4328
    %4357 = vmatprep.subr.mxu0 0.0
    %4358 = vmatpush1.msra.mxu0 %v4327
    %4359 = vmatprep.subr.mxu0 0.0
    %4360 = vmatpush1.msra.mxu0 %v4326
    %4361 = vmatprep.subr.mxu0 0.0
    %4362 = vmatpush1.msra.mxu0 %v4325
    %4363 = vmatprep.subr.mxu0 0.0
    %4364 = vmatpush1.msra.mxu0 %v4324
    %4365 = vmatprep.subr.mxu0 0.0
    %4366 = vmatpush1.msra.mxu0 %v4323
    %4367 = vmatprep.subr.mxu0 0.0
    %4368 = vmatpush1.msra.mxu0 %v4322
    %4369 = vmatprep.subr.mxu0 0.0
    %4370 = vmatpush1.msra.mxu0 %v4321
    %4371 = vmatprep.subr.mxu0 0.0
    %4372 = vmatpush1.msra.mxu0 %v4320
    %4373 = vmatprep.subr.mxu0 0.0
    %4374 = vmatpush1.msra.mxu0 %v4319
    %4375 = vmatprep.subr.mxu0 0.0
    %4376 = vmatpush1.msra.mxu0 %v4318
    %4377 = vmatprep.subr.mxu0 0.0
    %4378 = vmatpush1.msra.mxu0 %v4317
    %4379 = vmatprep.subr.mxu0 0.0
    %4380 = vmatpush1.msra.mxu0 %v4316
    %4381 = vmatprep.subr.mxu0 0.0
    %4382 = vmatpush1.msra.mxu0 %v4315
    %4383 = vmatprep.subr.mxu0 0.0
    %4384 = vmatpush1.msra.mxu0 %v4314
    %4385 = vmatprep.subr.mxu0 0.0
    %4386 = vmatpush2.msra.mxu0 %v4345
    %4387 = vmatprep.subr.mxu0 0.0
    %4388 = vmatpush2.msra.mxu0 %v4344
    %4389 = vmatprep.subr.mxu0 0.0
    %4390 = vmatpush2.msra.mxu0 %v4343
    %4391 = vmatprep.subr.mxu0 0.0
    %4392 = vmatpush2.msra.mxu0 %v4342
    %4393 = vmatprep.subr.mxu0 0.0
    %4394 = vmatpush2.msra.mxu0 %v4341
    %4395 = vmatprep.subr.mxu0 0.0
    %4396 = vmatpush2.msra.mxu0 %v4340
    %4397 = vmatprep.subr.mxu0 0.0
    %4398 = vmatpush2.msra.mxu0 %v4339
    %4399 = vmatprep.subr.mxu0 0.0
    %4400 = vmatpush2.msra.mxu0 %v4338
    %4401 = vmatprep.subr.mxu0 0.0
    %4402 = vmatpush2.msra.mxu0 %v4337
    %4403 = vmatprep.subr.mxu0 0.0
    %4404 = vmatpush2.msra.mxu0 %v4336
    %4405 = vmatprep.subr.mxu0 0.0
    %4406 = vmatpush2.msra.mxu0 %v4335
    %4407 = vmatprep.subr.mxu0 0.0
    %4408 = vmatpush2.msra.mxu0 %v4334
    %4409 = vmatprep.subr.mxu0 0.0
    %4410 = vmatpush2.msra.mxu0 %v4333
    %4411 = vmatprep.subr.mxu0 0.0
    %4412 = vmatpush2.msra.mxu0 %v4332
    %4413 = vmatprep.subr.mxu0 0.0
    %4414 = vmatpush2.msra.mxu0 %v4331
    %4415 = vmatprep.subr.mxu0 0.0
    %4416 = vmatpush2.msra.mxu0 %v4330
    %4417 = vmatprep.mubr.f32.mxu0 %v4311
    %4418 = vmatmul.mubr.f32.gmra.mxu0 %v4310
    %v4419 = vpop.f32.mrf.mxu0
    %v4420 = vadd.f32 %v4351, %v4419
    %v4421 = vpop.f32.mrf.mxu0
    %4422 = vmatprep.mubr.f32.mxu0 %v4313
    %4423 = vmatmul.mubr.f32.gmra.mxu0 %v4312
    %v4424 = vpop.f32.mrf.mxu0
    %v4425 = vadd.f32 %v4351, %v4424
    %v4426 = vpop.f32.mrf.mxu0
    %4427 = vdwg.mxu0
    %4428 = vst [vmem:[#allocation14] sm:$0xff] %v4420
    %4429 = vst [vmem:[#allocation14 + $0x8] sm:$0xff] %v4425
    // Predicated region
    $region50: #{tpu_custom_call.1} parent=1 // pred_check
      _
    $region51: #{tpu_custom_call.1} parent=1 // pred_check_branch
      %4431 = sbr.rel (0) target = $region53
    $region52: #{tpu_custom_call.1} parent=1 // pred_region
      %s4433 = ssub.s32 256, 256
      %4434 = vsyncadd [#allocation5], %s4433
      %s4435 = sshll.u32 [#allocation14], 4
      %s4436 = int_to_ptr.vmem [resolvable:$true] %s4435
      %4441 = dma.vmem_to_hbm [thread:$0]  %s4436, 256, %s6, [#allocation5], 128, 128, 8
    $region53: #{tpu_custom_call.1} parent=1 // pred_fallthru
      _
    // Predicated region
    $region54: #{tpu_custom_call.1} parent=1 // pred_check
      _
    $region55: #{tpu_custom_call.1} parent=1 // pred_check_branch
      %4443 = sbr.rel (0) target = $region57
    $region56: #{tpu_custom_call.1} parent=1 // pred_region
      %4444 = dma.done [#allocation5], 256
    $region57: #{tpu_custom_call.1} parent=1 // pred_fallthru
      _
    %4445 = vsyncpa [#allocation4], 1
    %4446 = vsyncpa [#allocation7], 1
    %4447 = vsyncpa [#allocation10], 1
    %4448 = vsyncpa [#allocation13], 1
    %4449 = vsyncpa [#allocation5], 1

</llo_original>
